<compile_context>
chip_gen: v6e
topology: v6e:2x2x1
jax: 0.10.0
libtpu: 0.0.40
codegen_flags: <defaults>
</compile_context>

<pallas_src>
import jax
import jax.numpy as jnp
from jax import lax
from jax.experimental import pallas as pl
from jax.experimental.pallas import tpu as pltpu


_NEG_INF = -1e30  # finite "-inf" for padded vocab columns (avoids inf/nan edge cases)


def _round_up(x, m):
    return (x + m - 1) // m * m


def _cdiv(a, b):
    return -(-a // b)


def _make_kernel(with_scores: bool, use_mxu_reduce: bool):
    """Build the kernel body; `with_scores`/`use_mxu_reduce` are static."""

    def kernel(x_ref, w_ref, b_ref, y_ref, *refs):
        if with_scores:
            scores_ref, nll_ref = refs[0], refs[1]
            m_sc, l_sc, t_sc = refs[2], refs[3], refs[4]
        else:
            nll_ref = refs[0]
            m_sc, l_sc, t_sc = refs[1], refs[2], refs[3]

        j = pl.program_id(1)                 # vocab-tile index (reduction axis)
        tv = w_ref.shape[1]

        @pl.when(j == 0)
        def _():
            m_sc[...] = jnp.full_like(m_sc, -jnp.inf)
            l_sc[...] = jnp.zeros_like(l_sc)
            t_sc[...] = jnp.zeros_like(t_sc)

        # (TM, dim) @ (dim, TV) -> (TM, TV): bf16 operands, f32 accumulation.
        s = lax.dot_general(
            x_ref[...], w_ref[...],
            dimension_numbers=(((1,), (0,)), ((), ())),
            preferred_element_type=jnp.float32) + b_ref[...]

        if with_scores:
            scores_ref[...] = s.astype(scores_ref.dtype)

        # Online logsumexp accumulation over vocab tiles.
        m_prev = m_sc[...]
        m_new = jnp.maximum(m_prev, jnp.max(s, axis=-1, keepdims=True))
        alpha = jnp.exp(m_prev - m_new)
        p = jnp.exp(s - m_new)

        # Target gather: scores[i, y[i]] for targets falling inside this tile.
        ids = lax.broadcasted_iota(jnp.int32, s.shape, 1) + j * tv
        tgt = jnp.where(ids == y_ref[...], s, 0.0)

        if use_mxu_reduce:
            # Small dim => MXU is mostly idle: do the cross-lane sums there
            # instead of the XLU (only the max stays on the XLU).
            ones_v = jnp.ones((tv, 1), jnp.float32)
            sum_p = lax.dot_general(
                p, ones_v, dimension_numbers=(((1,), (0,)), ((), ())),
                preferred_element_type=jnp.float32)
            sum_t = lax.dot_general(
                tgt, ones_v, dimension_numbers=(((1,), (0,)), ((), ())),
                preferred_element_type=jnp.float32)
        else:
            sum_p = jnp.sum(p, axis=-1, keepdims=True)
            sum_t = jnp.sum(tgt, axis=-1, keepdims=True)

        l_sc[...] = alpha * l_sc[...] + sum_p
        t_sc[...] = t_sc[...] + sum_t
        m_sc[...] = m_new

        @pl.when(j == pl.num_programs(1) - 1)
        def _():
            nll = m_sc[...] + jnp.log(l_sc[...]) - t_sc[...]          # (TM, 1)
            nll_ref[...] = jnp.broadcast_to(nll, nll_ref.shape)

    return kernel


def prepare_pred_layer_params(weight, bias, *, tile_v=1024,
                              param_dtype=jnp.bfloat16):
    """One-time parameter preparation (do this at init, not per call).

    weight: (n_words, dim) -- PyTorch nn.Linear convention
    bias:   (n_words,)
    Returns dict with W transposed/padded to (dim, v_pad) in `param_dtype`,
    bias padded with -1e30 to (1, v_pad) f32, and the chosen tile_v.
    """
    n_words, dim = weight.shape
    v_pad = _round_up(n_words, 128)
    # Largest multiple of 128 <= tile_v that divides v_pad (keeps padding minimal
    # and the scores lane dim an exact multiple of the tile).
    tv_cap = max(128, _round_up(min(tile_v, v_pad), 128))
    tv = 128
    for cand in range(tv_cap, 127, -128):
        if v_pad % cand == 0:
            tv = cand
            break
    w_t = jnp.pad(weight, ((0, v_pad - n_words), (0, 0))).T.astype(param_dtype)
    b_p = jnp.pad(bias.astype(jnp.float32), (0, v_pad - n_words),
                  constant_values=_NEG_INF).reshape(1, v_pad)
    return {"w_t": w_t, "b": b_p, "n_words": n_words, "tile_v": tv}


def pred_layer_forward(x, y, params, *, tile_m=256,
                       scores_dtype=jnp.bfloat16, compute_scores=True):
    """
    x:      (N, dim) float32 (cast to the param dtype for the MXU)
    y:      (N,)     int32 targets (none equal pad_index, per the module assert)
    params: output of prepare_pred_layer_params
    returns (scores (N, n_words) in `scores_dtype` or None, loss scalar f32)
    """
    w_t, b_p = params["w_t"], params["b"]
    n_words, tile_v = params["n_words"], params["tile_v"]
    dim, v_pad = w_t.shape
    n = x.shape[0]

    # Row tiling: minimize padding; keep >=2 row tiles when possible so the
    # "parallel" row axis shards across both v7x TensorCores.
    n8 = _round_up(n, 8)
    num_row_tiles = max(1, _cdiv(n8, tile_m))
    if num_row_tiles == 1 and n8 >= 16:
        num_row_tiles = 2
    tile_m = _round_up(_cdiv(n8, num_row_tiles), 8)
    n_pad = tile_m * num_row_tiles

    x_p = jnp.pad(x, ((0, n_pad - n), (0, 0))).astype(w_t.dtype)
    y_p = jnp.pad(y.astype(jnp.int32), (0, n_pad - n)).reshape(n_pad, 1)

    grid = (n_pad // tile_m, v_pad // tile_v)
    use_mxu_reduce = dim <= 256
    kernel = _make_kernel(compute_scores, use_mxu_reduce)

    in_specs = [
        pl.BlockSpec((tile_m, dim), lambda i, j: (i, 0)),     # x rows (bf16)
        pl.BlockSpec((dim, tile_v), lambda i, j: (0, j)),     # W^T cols (bf16)
        pl.BlockSpec((1, tile_v), lambda i, j: (0, j)),       # bias slice (f32)
        pl.BlockSpec((tile_m, 1), lambda i, j: (i, 0)),       # targets
    ]
    out_shapes, out_specs = [], []
    if compute_scores:
        out_shapes.append(jax.ShapeDtypeStruct((n_pad, v_pad), scores_dtype))
        out_specs.append(pl.BlockSpec((tile_m, tile_v), lambda i, j: (i, j)))
    out_shapes.append(jax.ShapeDtypeStruct((n_pad, 128), jnp.float32))
    out_specs.append(pl.BlockSpec((tile_m, 128), lambda i, j: (i, 0)))

    scratch_shapes = [
        pltpu.VMEM((tile_m, 1), jnp.float32),   # running max
        pltpu.VMEM((tile_m, 1), jnp.float32),   # running sum(exp)
        pltpu.VMEM((tile_m, 1), jnp.float32),   # target score
    ]

    # Rough per-step VMEM budget (double-buffered blocks + scratch, padded lanes).
    bpe_in = jnp.dtype(w_t.dtype).itemsize
    est = 2 * (tile_m * dim * bpe_in + dim * tile_v * bpe_in
               + 8 * tile_v * 4 + tile_m * 128 * 4)          # inputs
    if compute_scores:
        est += 2 * tile_m * tile_v * jnp.dtype(scores_dtype).itemsize
    est += 2 * tile_m * 128 * 4                               # nll output
    est += 3 * tile_m * 128 * 4                               # scratch (lane-padded)

    compiler_kwargs = dict(dimension_semantics=("parallel", "arbitrary"))
    if 2 * est > (32 << 20):   # only raise above the scoped default when needed
        try:
            cap = pltpu.get_tpu_info().vmem_capacity_bytes
        except Exception:
            cap = 64 << 20     # conservative (v7x physical VMEM per TC)
        compiler_kwargs["vmem_limit_bytes"] = int(min(2 * est, int(cap * 0.9)))

    scores_bytes = (n_pad * v_pad * jnp.dtype(scores_dtype).itemsize
                    if compute_scores else 0)
    cost = pl.CostEstimate(
        flops=2 * n_pad * v_pad * dim,
        transcendentals=n_pad * v_pad,
        bytes_accessed=int(n_pad * dim * bpe_in
                           + (n_pad // tile_m) * dim * v_pad * bpe_in
                           + scores_bytes + n_pad * 128 * 4))

    outs = pl.pallas_call(
        kernel,
        out_shape=tuple(out_shapes),
        grid_spec=pltpu.PrefetchScalarGridSpec(
            num_scalar_prefetch=0,
            grid=grid,
            in_specs=in_specs,
            out_specs=out_specs,
            scratch_shapes=scratch_shapes,
        ),
        compiler_params=pltpu.CompilerParams(**compiler_kwargs),
        cost_estimate=cost,
    )(x_p, w_t, b_p, y_p)

    if compute_scores:
        scores_p, nll_p = outs
        if n_pad == n and v_pad == n_words:
            scores = scores_p                      # no-op slice when tiles fit exactly
        else:
            scores = scores_p[:n, :n_words]
    else:
        (nll_p,) = outs
        scores = None

    loss = jnp.mean(nll_p[:n, 0])
    return scores, loss


if __name__ == "__main__":
    # Small shapes consistent with the module: N tokens (batch*seq flattened),
    # emb_dim features, n_words vocab — sized to exercise a multi-tile grid.
    N = 300         # tokens
    DIM = 64        # params.emb_dim
    N_WORDS = 1200  # params.n_words
    PAD_INDEX = 1   # params.pad_index (targets must avoid it, per the assert)

    key = jax.random.PRNGKey(0)
    kx, kw, kb, ky = jax.random.split(key, 4)

    # Deterministic init mimicking nn.Linear default (uniform +-1/sqrt(dim)).
    bound = 1.0 / (DIM ** 0.5)
    weight = jax.random.uniform(kw, (N_WORDS, DIM), jnp.float32, -bound, bound)
    bias = jax.random.uniform(kb, (N_WORDS,), jnp.float32, -bound, bound)

    x = jax.random.normal(kx, (N, DIM), jnp.float32)
    # Targets in [2, N_WORDS) so none equal pad_index (assert in forward holds).
    y = jax.random.randint(ky, (N,), 2, N_WORDS, dtype=jnp.int32)

    params = prepare_pred_layer_params(weight, bias)       # one-time: pad+T+bf16
    scores, loss = pred_layer_forward(x, y, params)
    jax.block_until_ready((scores, loss))

    # Loss-only variant (drops the scores writeback entirely).
    scores_none, loss_only = pred_layer_forward(x, y, params, compute_scores=False)
    jax.block_until_ready(loss_only)

    # --- Reference checks -------------------------------------------------
    # bf16-operand reference (matches the kernel's MXU math; f32 accumulation).
    xb = x.astype(jnp.bfloat16).astype(jnp.float32)
    wb = weight.astype(jnp.bfloat16).astype(jnp.float32)
    ref_scores = xb @ wb.T + bias
    ref_lse = jax.scipy.special.logsumexp(ref_scores, axis=-1)
    ref_loss = jnp.mean(ref_lse - ref_scores[jnp.arange(N), y])

    # Pure-f32 reference (original module math) for a looser sanity check.
    f32_scores = x @ weight.T + bias
    f32_loss = jnp.mean(jax.scipy.special.logsumexp(f32_scores, axis=-1)
                        - f32_scores[jnp.arange(N), y])

    assert scores.shape == (N, N_WORDS)
    assert scores_none is None
    # scores are bf16: compare after upcast, tolerance covers the bf16 output cast.
    assert jnp.allclose(scores.astype(jnp.float32), ref_scores, atol=2e-2, rtol=2e-2)
    # loss path stays f32 inside the kernel -> tight vs bf16-operand reference.
    assert jnp.allclose(loss, ref_loss, atol=2e-3, rtol=2e-3)
    assert jnp.allclose(loss_only, loss, atol=1e-5, rtol=1e-5)
    # and close to the full-f32 module math.
    assert jnp.allclose(loss, f32_loss, atol=5e-2, rtol=5e-2)

    print("KERNEL_OK")
</pallas_src>

<mosaic_0001>
module attributes {stable_mosaic.version = 11 : i64} {
  func.func @kernel(%arg0: i32, %arg1: i32, %arg2: memref<152x64xbf16, #tpu.memory_space<vmem>>, %arg3: memref<64x640xbf16, #tpu.memory_space<vmem>>, %arg4: memref<1x640xf32, #tpu.memory_space<vmem>>, %arg5: memref<152x1xi32, #tpu.memory_space<vmem>>, %arg6: memref<152x640xbf16, #tpu.memory_space<vmem>>, %arg7: memref<152x128xf32, #tpu.memory_space<vmem>>, %arg8: memref<152x1xf32, #tpu.memory_space<vmem>>, %arg9: memref<152x1xf32, #tpu.memory_space<vmem>>, %arg10: memref<152x1xf32, #tpu.memory_space<vmem>>) attributes {dimension_semantics = [#tpu.dimension_semantics<parallel>, #tpu.dimension_semantics<arbitrary>], iteration_bounds = array<i64: 2, 2>, scalar_prefetch = 0 : i64, scratch_operands = 3 : i64, tpu.core_type = #tpu.core_type<tc>, window_params = [{transform_indices = @transform_0, window_bounds = array<i64: 152, 64>}, {transform_indices = @transform_1, window_bounds = array<i64: 64, 640>}, {transform_indices = @transform_2, window_bounds = array<i64: 1, 640>}, {transform_indices = @transform_3, window_bounds = array<i64: 152, 1>}, {transform_indices = @transform_4, window_bounds = array<i64: 152, 640>}, {transform_indices = @transform_5, window_bounds = array<i64: 152, 128>}]} {
    %c0_i32 = arith.constant 0 : i32
    %0 = arith.cmpi eq, %arg1, %c0_i32 : i32
    %1 = arith.extui %0 : i1 to i32
    %c0_i32_0 = arith.constant 0 : i32
    %2 = arith.cmpi ne, %1, %c0_i32_0 : i32
    scf.if %2 {
      %cst_28 = arith.constant 0xFF800000 : f32
      %43 = vector.broadcast %cst_28 : f32 to vector<152x1xf32>
      %c0_29 = arith.constant 0 : index
      %c0_30 = arith.constant 0 : index
      %44 = vector.load %arg8[%c0_29, %c0_30] : memref<152x1xf32, #tpu.memory_space<vmem>>, vector<152x1xf32>
      tpu.vector_store %arg8[%c0_29, %c0_30], %43 {strides = array<i32>} : memref<152x1xf32, #tpu.memory_space<vmem>>, vector<152x1xf32>,
      %cst_31 = arith.constant 0.000000e+00 : f32
      %45 = vector.broadcast %cst_31 : f32 to vector<152x1xf32>
      %c0_32 = arith.constant 0 : index
      %c0_33 = arith.constant 0 : index
      %46 = vector.load %arg9[%c0_32, %c0_33] : memref<152x1xf32, #tpu.memory_space<vmem>>, vector<152x1xf32>
      tpu.vector_store %arg9[%c0_32, %c0_33], %45 {strides = array<i32>} : memref<152x1xf32, #tpu.memory_space<vmem>>, vector<152x1xf32>,
      %cst_34 = arith.constant 0.000000e+00 : f32
      %47 = vector.broadcast %cst_34 : f32 to vector<152x1xf32>
      %c0_35 = arith.constant 0 : index
      %c0_36 = arith.constant 0 : index
      %48 = vector.load %arg10[%c0_35, %c0_36] : memref<152x1xf32, #tpu.memory_space<vmem>>, vector<152x1xf32>
      tpu.vector_store %arg10[%c0_35, %c0_36], %47 {strides = array<i32>} : memref<152x1xf32, #tpu.memory_space<vmem>>, vector<152x1xf32>,
    } else {
    }
    %c0 = arith.constant 0 : index
    %c0_1 = arith.constant 0 : index
    %3 = vector.load %arg2[%c0, %c0_1] : memref<152x64xbf16, #tpu.memory_space<vmem>>, vector<152x64xbf16>
    %c0_2 = arith.constant 0 : index
    %c0_3 = arith.constant 0 : index
    %4 = vector.load %arg3[%c0_2, %c0_3] : memref<64x640xbf16, #tpu.memory_space<vmem>>, vector<64x640xbf16>
    %cst = arith.constant dense<0.000000e+00> : vector<152x640xf32>
    %5 = tpu.matmul %3, %4, %cst {dimension_numbers = #tpu.dot_dimension_numbers<[1], [0], [0], [1], [0, 0, 1, 1], [], []>} : vector<152x64xbf16>, vector<64x640xbf16>, vector<152x640xf32> -> vector<152x640xf32>
    %c0_4 = arith.constant 0 : index
    %c0_5 = arith.constant 0 : index
    %6 = vector.load %arg4[%c0_4, %c0_5] : memref<1x640xf32, #tpu.memory_space<vmem>>, vector<1x640xf32>
    %7 = vector.broadcast %6 : vector<1x640xf32> to vector<152x640xf32>
    %8 = arith.addf %5, %7 : vector<152x640xf32>
    %9 = arith.truncf %8 : vector<152x640xf32> to vector<152x640xbf16>
    %c0_6 = arith.constant 0 : index
    %c0_7 = arith.constant 0 : index
    %10 = vector.load %arg6[%c0_6, %c0_7] : memref<152x640xbf16, #tpu.memory_space<vmem>>, vector<152x640xbf16>
    tpu.vector_store %arg6[%c0_6, %c0_7], %9 {strides = array<i32>} : memref<152x640xbf16, #tpu.memory_space<vmem>>, vector<152x640xbf16>,
    %c0_8 = arith.constant 0 : index
    %c0_9 = arith.constant 0 : index
    %11 = vector.load %arg8[%c0_8, %c0_9] : memref<152x1xf32, #tpu.memory_space<vmem>>, vector<152x1xf32>
    %cst_10 = arith.constant dense<0xFF800000> : vector<152xf32>
    %12 = vector.multi_reduction <maximumf>, %8, %cst_10 [1] : vector<152x640xf32> to vector<152xf32>
    %13 = vector.shape_cast %12 : vector<152xf32> to vector<152x1xf32>
    %14 = arith.maximumf %11, %13 : vector<152x1xf32>
    %15 = arith.subf %11, %14 : vector<152x1xf32>
    %16 = math.exp %15 : vector<152x1xf32>
    %17 = vector.broadcast %14 : vector<152x1xf32> to vector<152x640xf32>
    %18 = arith.subf %8, %17 : vector<152x640xf32>
    %19 = math.exp %18 : vector<152x640xf32>
    %20 = tpu.iota {dimensions = array<i32: 1>} : vector<152x640xi32>
    %c640_i32 = arith.constant 640 : i32
    %21 = arith.muli %arg1, %c640_i32 : i32
    %22 = vector.broadcast %21 : i32 to vector<152x640xi32>
    %23 = arith.addi %20, %22 : vector<152x640xi32>
    %c0_11 = arith.constant 0 : index
    %c0_12 = arith.constant 0 : index
    %24 = vector.load %arg5[%c0_11, %c0_12] : memref<152x1xi32, #tpu.memory_space<vmem>>, vector<152x1xi32>
    %25 = vector.broadcast %24 : vector<152x1xi32> to vector<152x640xi32>
    %26 = arith.cmpi eq, %23, %25 : vector<152x640xi32>
    %cst_13 = arith.constant 0.000000e+00 : f32
    %27 = vector.broadcast %cst_13 : f32 to vector<152x640xf32>
    %28 = arith.select %26, %8, %27 : vector<152x640xi1>, vector<152x640xf32>
    %cst_14 = arith.constant 1.000000e+00 : f32
    %29 = vector.broadcast %cst_14 : f32 to vector<640x1xf32>
    %cst_15 = arith.constant dense<0.000000e+00> : vector<152x1xf32>
    %30 = tpu.matmul %19, %29, %cst_15 {dimension_numbers = #tpu.dot_dimension_numbers<[1], [0], [0], [1], [0, 0, 1, 1], [], []>} : vector<152x640xf32>, vector<640x1xf32>, vector<152x1xf32> -> vector<152x1xf32>
    %cst_16 = arith.constant dense<0.000000e+00> : vector<152x1xf32>
    %31 = tpu.matmul %28, %29, %cst_16 {dimension_numbers = #tpu.dot_dimension_numbers<[1], [0], [0], [1], [0, 0, 1, 1], [], []>} : vector<152x640xf32>, vector<640x1xf32>, vector<152x1xf32> -> vector<152x1xf32>
    %c0_17 = arith.constant 0 : index
    %c0_18 = arith.constant 0 : index
    %32 = vector.load %arg9[%c0_17, %c0_18] : memref<152x1xf32, #tpu.memory_space<vmem>>, vector<152x1xf32>
    %33 = arith.mulf %16, %32 : vector<152x1xf32>
    %34 = arith.addf %33, %30 : vector<152x1xf32>
    %c0_19 = arith.constant 0 : index
    %c0_20 = arith.constant 0 : index
    %35 = vector.load %arg9[%c0_19, %c0_20] : memref<152x1xf32, #tpu.memory_space<vmem>>, vector<152x1xf32>
    tpu.vector_store %arg9[%c0_19, %c0_20], %34 {strides = array<i32>} : memref<152x1xf32, #tpu.memory_space<vmem>>, vector<152x1xf32>,
    %c0_21 = arith.constant 0 : index
    %c0_22 = arith.constant 0 : index
    %36 = vector.load %arg10[%c0_21, %c0_22] : memref<152x1xf32, #tpu.memory_space<vmem>>, vector<152x1xf32>
    %37 = arith.addf %36, %31 : vector<152x1xf32>
    %c0_23 = arith.constant 0 : index
    %c0_24 = arith.constant 0 : index
    %38 = vector.load %arg10[%c0_23, %c0_24] : memref<152x1xf32, #tpu.memory_space<vmem>>, vector<152x1xf32>
    tpu.vector_store %arg10[%c0_23, %c0_24], %37 {strides = array<i32>} : memref<152x1xf32, #tpu.memory_space<vmem>>, vector<152x1xf32>,
    %c0_25 = arith.constant 0 : index
    %c0_26 = arith.constant 0 : index
    %39 = vector.load %arg8[%c0_25, %c0_26] : memref<152x1xf32, #tpu.memory_space<vmem>>, vector<152x1xf32>
    tpu.vector_store %arg8[%c0_25, %c0_26], %14 {strides = array<i32>} : memref<152x1xf32, #tpu.memory_space<vmem>>, vector<152x1xf32>,
    %c1_i32 = arith.constant 1 : i32
    %40 = arith.cmpi eq, %arg1, %c1_i32 : i32
    %41 = arith.extui %40 : i1 to i32
    %c0_i32_27 = arith.constant 0 : i32
    %42 = arith.cmpi ne, %41, %c0_i32_27 : i32
    scf.if %42 {
      %c0_28 = arith.constant 0 : index
      %c0_29 = arith.constant 0 : index
      %43 = vector.load %arg8[%c0_28, %c0_29] : memref<152x1xf32, #tpu.memory_space<vmem>>, vector<152x1xf32>
      %c0_30 = arith.constant 0 : index
      %c0_31 = arith.constant 0 : index
      %44 = vector.load %arg9[%c0_30, %c0_31] : memref<152x1xf32, #tpu.memory_space<vmem>>, vector<152x1xf32>
      %45 = math.log %44 : vector<152x1xf32>
      %46 = arith.addf %43, %45 : vector<152x1xf32>
      %c0_32 = arith.constant 0 : index
      %c0_33 = arith.constant 0 : index
      %47 = vector.load %arg10[%c0_32, %c0_33] : memref<152x1xf32, #tpu.memory_space<vmem>>, vector<152x1xf32>
      %48 = arith.subf %46, %47 : vector<152x1xf32>
      %49 = vector.shape_cast %48 : vector<152x1xf32> to vector<152x1xf32>
      %50 = vector.broadcast %49 : vector<152x1xf32> to vector<152x128xf32>
      %c0_34 = arith.constant 0 : index
      %c0_35 = arith.constant 0 : index
      %51 = vector.load %arg7[%c0_34, %c0_35] : memref<152x128xf32, #tpu.memory_space<vmem>>, vector<152x128xf32>
      tpu.vector_store %arg7[%c0_34, %c0_35], %50 {strides = array<i32>} : memref<152x128xf32, #tpu.memory_space<vmem>>, vector<152x128xf32>,
    } else {
    }
    return
  }
  func.func @transform_0(%arg0: i32, %arg1: i32) -> (i32, i32) {
    %c0_i32 = arith.constant 0 : i32
    %c0_i32_0 = arith.constant 0 : i32
    return %arg0, %c0_i32 : i32, i32
  }
  func.func @transform_1(%arg0: i32, %arg1: i32) -> (i32, i32) {
    %c0_i32 = arith.constant 0 : i32
    %c0_i32_0 = arith.constant 0 : i32
    return %c0_i32, %arg1 : i32, i32
  }
  func.func @transform_2(%arg0: i32, %arg1: i32) -> (i32, i32) {
    %c0_i32 = arith.constant 0 : i32
    %c0_i32_0 = arith.constant 0 : i32
    return %c0_i32, %arg1 : i32, i32
  }
  func.func @transform_3(%arg0: i32, %arg1: i32) -> (i32, i32) {
    %c0_i32 = arith.constant 0 : i32
    %c0_i32_0 = arith.constant 0 : i32
    return %arg0, %c0_i32 : i32, i32
  }
  func.func @transform_4(%arg0: i32, %arg1: i32) -> (i32, i32) {
    %c0_i32 = arith.constant 0 : i32
    return %arg0, %arg1 : i32, i32
  }
  func.func @transform_5(%arg0: i32, %arg1: i32) -> (i32, i32) {
    %c0_i32 = arith.constant 0 : i32
    %c0_i32_0 = arith.constant 0 : i32
    return %arg0, %c0_i32 : i32, i32
  }
}

</mosaic_0001>

<llo_original>
// kernel: tpu_custom_call.1
$region0: #{tpu_custom_call.1}
  #allocation0 [shape = 'u32[]', space=smem, size = 0x4, offset = 0x4, fixed_abs, tag = 'smem constant byte address 0x4 - core index']
  #allocation1 [shape = 'u32[144,128]{1,0:T(1,128)}', space=vmem, size = 0x12000, scoped, tag = 'internal scratch']
  #allocation2 [shape = 'f32[152,1]{1,0:T(8,128)}', space=vmem, size = 0x13000, scoped, tag = 'scratch operand']
  #allocation3 [shape = 'f32[152,1]{1,0:T(8,128)}', space=vmem, size = 0x13000, scoped, tag = 'scratch operand']
  #allocation4 [shape = 'f32[152,1]{1,0:T(8,128)}', space=vmem, size = 0x13000, scoped, tag = 'scratch operand']
  %s0 = inlined_call_operand.vmem [shape: bf16[304,64], index: 0, kind: input, shape index: {}]
  %s1 = inlined_call_operand.vmem [shape: bf16[64,1280], index: 1, kind: input, shape index: {}]
  %s2 = inlined_call_operand.vmem [shape: f32[1,1280], index: 2, kind: input, shape index: {}]
  %s3 = inlined_call_operand.vmem [shape: s32[304,1], index: 3, kind: input, shape index: {}]
  %s4 = inlined_call_operand.hbm [shape: bf16[304,1280], index: 4, kind: output, shape index: {0}]
  %s5 = inlined_call_operand.hbm [shape: f32[304,128], index: 5, kind: output, shape index: {1}]
  %6 = xla_tuple %s4, %s5
  %s7 = sld [smem:[#allocation0]]
  $region91: #{tpu_custom_call.1} parent=0
    _
  %s9 = ssub.s32 1, %s7
  %s10 = scalar_select 0, %s9, %s7
  $region1: #{tpu_custom_call.1} parent=0
    #allocation5 [shape = 'u8[163840]{0}', space=vmem, size = 0x28000, scoped, tag = 'input window, operand 1']
    #allocation6 [shape = 'u8[389120]{0}', space=vmem, size = 0x5f000, scoped, tag = 'output window, operand 0']
    #allocation7 [shape = 's32[2]{0}', space=sflag, size = 0x8, scoped, tag = 'scoped memory for tpu_custom_call.1']
    #allocation8 [shape = 'u8[155648]{0}', space=vmem, size = 0x26000, scoped, tag = 'output window, operand 1']
    #allocation9 [shape = 's32[2]{0}', space=sflag, size = 0x8, scoped, tag = 'scoped memory for tpu_custom_call.1']
    %11 = vsyncpa [#allocation7], 0
    %s12 = scalar_lea.sflag [#allocation7], 1
    %13 = vsyncpa %s12, 0
    %14 = vsyncpa [#allocation9], 0
    %s15 = scalar_lea.sflag [#allocation9], 1
    %16 = vsyncpa %s15, 0
    loop: start=0, step=1, limit=6
    $region2: #{tpu_custom_call.1} parent=1 // loop_pre_header
      _
    $region3: #{tpu_custom_call.1} parent=1 // loop_header
      %s18 = sphi 0, %s22
      %p19 = scmp.ge.s32.totalorder %s18, 6
      %s25 = sphi 0, %s37
      %s26 = sphi 0, %s33
      %s27 = sphi 0, %s25
      %s28 = sphi 0, %s26
      %s29 = sphi 0, %s27
      %s30 = sphi 0, %s28
      %s40 = sphi 0, %s42
      %s43 = sphi 0, %s40
      %s44 = sphi 0, %s43
      %s60 = sphi 0, %s44
      %s66 = sphi 0, %s68
      %s69 = sphi 0, %s66
      %s70 = sphi 0, %s69
      %s86 = sphi 0, %s70
      %s92 = sphi 0, %s94
      %s95 = sphi 0, %s92
      %s96 = sphi 0, %s95
      %s112 = sphi 0, %s96
      %s118 = sphi 0, %s120
      %s121 = sphi 0, %s118
      %s122 = sphi 0, %s121
      %s138 = sphi 0, %s122
      %s146 = sphi 0, %s148
      %s149 = sphi 0, %s146
      %s150 = sphi 0, %s149
      %s166 = sphi 0, %s150
      %s172 = sphi 0, %s174
      %s175 = sphi 0, %s172
      %s176 = sphi 0, %s175
      %s192 = sphi 0, %s176
    $region4: #{tpu_custom_call.1} parent=1 // loop_header_branch
      %21 = sbr.rel (%p19) target = $region8
    $region5: #{tpu_custom_call.1} parent=1 // loop_body
      %s23 = ssub.s32 %s18, 1
      %s24 = ssub.s32 %s18, 2
      %s31 = sadd.s32 1, %s26
      %p32 = scmp.ge.s32.totalorder %s31, 2
      %s33 = scalar_select %p32, 0, %s31
      %s34 = sadd.s32 1, %s25
      %s35 = scalar_select %p32, %s34, %s25
      %p36 = scmp.ge.s32.totalorder %s35, 2
      %s37 = scalar_select %p36, 0, %s35
      %s38 = ssub.s32 %s25, %s37
      %p39 = scmp.eq.s32.totalorder %s38, 0
      %s41 = sadd.s32 %s40, 1
      %s42 = scalar_select %p39, %s40, %s41
      %p45 = pneg %p39
      %p46 = scmp.eq.s32.totalorder %s18, 3
      %p47 = por %p45, %p46
      %p48 = scmp.ne.s32.totalorder %s40, %s43
      %p49 = scmp.eq.s32.totalorder %s18, 0
      %p50 = por %p48, %p49
      %p51 = scmp.ne.s32.totalorder %s40, %s43
      %p52 = scmp.eq.s32.totalorder %s23, 3
      %p53 = por %p51, %p52
      %p54 = scmp.ne.s32.totalorder %s43, %s44
      %p55 = scmp.eq.s32.totalorder %s23, 0
      %p56 = por %p54, %p55
      %p57 = scmp.ne.s32.totalorder %s43, %s44
      %p58 = scmp.eq.s32.totalorder %s24, 3
      %p59 = por %p57, %p58
      %p61 = scmp.ne.s32.totalorder %s44, %s60
      %p62 = scmp.eq.s32.totalorder %s24, 0
      %p63 = por %p61, %p62
      %s64 = ssub.s32 %s26, %s33
      %p65 = scmp.eq.s32.totalorder %s64, 0
      %s67 = sadd.s32 %s66, 1
      %s68 = scalar_select %p65, %s66, %s67
      %p71 = pneg %p65
      %p72 = scmp.eq.s32.totalorder %s18, 3
      %p73 = por %p71, %p72
      %p74 = scmp.ne.s32.totalorder %s66, %s69
      %p75 = scmp.eq.s32.totalorder %s18, 0
      %p76 = por %p74, %p75
      %p77 = scmp.ne.s32.totalorder %s66, %s69
      %p78 = scmp.eq.s32.totalorder %s23, 3
      %p79 = por %p77, %p78
      %p80 = scmp.ne.s32.totalorder %s69, %s70
      %p81 = scmp.eq.s32.totalorder %s23, 0
      %p82 = por %p80, %p81
      %p83 = scmp.ne.s32.totalorder %s69, %s70
      %p84 = scmp.eq.s32.totalorder %s24, 3
      %p85 = por %p83, %p84
      %p87 = scmp.ne.s32.totalorder %s70, %s86
      %p88 = scmp.eq.s32.totalorder %s24, 0
      %p89 = por %p87, %p88
      %s90 = ssub.s32 %s26, %s33
      %p91 = scmp.eq.s32.totalorder %s90, 0
      %s93 = sadd.s32 %s92, 1
      %s94 = scalar_select %p91, %s92, %s93
      %p97 = pneg %p91
      %p98 = scmp.eq.s32.totalorder %s18, 3
      %p99 = por %p97, %p98
      %p100 = scmp.ne.s32.totalorder %s92, %s95
      %p101 = scmp.eq.s32.totalorder %s18, 0
      %p102 = por %p100, %p101
      %p103 = scmp.ne.s32.totalorder %s92, %s95
      %p104 = scmp.eq.s32.totalorder %s23, 3
      %p105 = por %p103, %p104
      %p106 = scmp.ne.s32.totalorder %s95, %s96
      %p107 = scmp.eq.s32.totalorder %s23, 0
      %p108 = por %p106, %p107
      %p109 = scmp.ne.s32.totalorder %s95, %s96
      %p110 = scmp.eq.s32.totalorder %s24, 3
      %p111 = por %p109, %p110
      %p113 = scmp.ne.s32.totalorder %s96, %s112
      %p114 = scmp.eq.s32.totalorder %s24, 0
      %p115 = por %p113, %p114
      %s116 = ssub.s32 %s25, %s37
      %p117 = scmp.eq.s32.totalorder %s116, 0
      %s119 = sadd.s32 %s118, 1
      %s120 = scalar_select %p117, %s118, %s119
      %p123 = pneg %p117
      %p124 = scmp.eq.s32.totalorder %s18, 3
      %p125 = por %p123, %p124
      %p126 = scmp.ne.s32.totalorder %s118, %s121
      %p127 = scmp.eq.s32.totalorder %s18, 0
      %p128 = por %p126, %p127
      %p129 = scmp.ne.s32.totalorder %s118, %s121
      %p130 = scmp.eq.s32.totalorder %s23, 3
      %p131 = por %p129, %p130
      %p132 = scmp.ne.s32.totalorder %s121, %s122
      %p133 = scmp.eq.s32.totalorder %s23, 0
      %p134 = por %p132, %p133
      %p135 = scmp.ne.s32.totalorder %s121, %s122
      %p136 = scmp.eq.s32.totalorder %s24, 3
      %p137 = por %p135, %p136
      %p139 = scmp.ne.s32.totalorder %s122, %s138
      %p140 = scmp.eq.s32.totalorder %s24, 0
      %p141 = por %p139, %p140
      %s142 = ssub.s32 %s25, %s37
      %s143 = ssub.s32 %s26, %s33
      %s144 = sor.u32 %s142, %s143
      %p145 = scmp.eq.s32.totalorder %s144, 0
      %s147 = sadd.s32 %s146, 1
      %s148 = scalar_select %p145, %s146, %s147
      %p151 = pneg %p145
      %p152 = scmp.eq.s32.totalorder %s18, 3
      %p153 = por %p151, %p152
      %p154 = scmp.ne.s32.totalorder %s146, %s149
      %p155 = scmp.eq.s32.totalorder %s18, 0
      %p156 = por %p154, %p155
      %p157 = scmp.ne.s32.totalorder %s146, %s149
      %p158 = scmp.eq.s32.totalorder %s23, 3
      %p159 = por %p157, %p158
      %p160 = scmp.ne.s32.totalorder %s149, %s150
      %p161 = scmp.eq.s32.totalorder %s23, 0
      %p162 = por %p160, %p161
      %p163 = scmp.ne.s32.totalorder %s149, %s150
      %p164 = scmp.eq.s32.totalorder %s24, 3
      %p165 = por %p163, %p164
      %p167 = scmp.ne.s32.totalorder %s150, %s166
      %p168 = scmp.eq.s32.totalorder %s24, 0
      %p169 = por %p167, %p168
      %s170 = ssub.s32 %s25, %s37
      %p171 = scmp.eq.s32.totalorder %s170, 0
      %s173 = sadd.s32 %s172, 1
      %s174 = scalar_select %p171, %s172, %s173
      %p177 = pneg %p171
      %p178 = scmp.eq.s32.totalorder %s18, 3
      %p179 = por %p177, %p178
      %p180 = scmp.ne.s32.totalorder %s172, %s175
      %p181 = scmp.eq.s32.totalorder %s18, 0
      %p182 = por %p180, %p181
      %p183 = scmp.ne.s32.totalorder %s172, %s175
      %p184 = scmp.eq.s32.totalorder %s23, 3
      %p185 = por %p183, %p184
      %p186 = scmp.ne.s32.totalorder %s175, %s176
      %p187 = scmp.eq.s32.totalorder %s23, 0
      %p188 = por %p186, %p187
      %p189 = scmp.ne.s32.totalorder %s175, %s176
      %p190 = scmp.eq.s32.totalorder %s24, 3
      %p191 = por %p189, %p190
      %p193 = scmp.ne.s32.totalorder %s176, %s192
      %p194 = scmp.eq.s32.totalorder %s24, 0
      %p195 = por %p193, %p194
      %p196 = scmp.le.s32.totalorder 1, %s18
      %p197 = scmp.lt.s32.totalorder %s18, 5
      %p198 = pnand %p196, %p197
      %p199 = pneg %p198
      // Predicated region
      $region9: #{tpu_custom_call.1} parent=5 // pred_check
        _
      $region10: #{tpu_custom_call.1} parent=5 // pred_check_branch
        %201 = sbr.rel (%p198) target = $region12
      $region11: #{tpu_custom_call.1} parent=5 // pred_region
        %s202 = ssub.s32 %s18, 1
      $region12: #{tpu_custom_call.1} parent=5 // pred_fallthru
        _
      %p203 = scmp.lt.s32.totalorder %s18, 4
      // Predicated region
      $region13: #{tpu_custom_call.1} parent=5 // pred_check
        %p204 = pneg %p203
      $region14: #{tpu_custom_call.1} parent=5 // pred_check_branch
        %206 = sbr.rel (%p204) target = $region16
      $region15: #{tpu_custom_call.1} parent=5 // pred_region
        // Predicated region
        $region17: #{tpu_custom_call.1} parent=15 // pred_check
          %p207 = pneg %p50
        $region18: #{tpu_custom_call.1} parent=15 // pred_check_branch
          %209 = sbr.rel (%p207) target = $region20
        $region19: #{tpu_custom_call.1} parent=15 // pred_region
          %s210 = smul.u32 19, %s25
          %p211 = scmp.lt.s32.totalorder %s210, 37
          %s212 = scalar_select %p211, %s210, 37
          %s213 = smul.addr %s212, 4
          %s214 = scalar_lea.vmem %s0, %s213
          %s215 = smul.u32 19, %s25
        $region20: #{tpu_custom_call.1} parent=15 // pred_fallthru
          _
        // Predicated region
        $region21: #{tpu_custom_call.1} parent=15 // pred_check
          %p216 = pneg %p76
        $region22: #{tpu_custom_call.1} parent=15 // pred_check_branch
          %218 = sbr.rel (%p216) target = $region24
        $region23: #{tpu_custom_call.1} parent=15 // pred_region
          %s219 = sand.u32 %s66, 1
          %s220 = sand.u32 %s66, 1
          %s221 = smul.addr %s220, 160
          %s222 = scalar_lea.vmem [#allocation5], %s221
          %s223 = smul.u32 5, %s26
          %s224 = smul.addr %s223, 4
          %s225 = scalar_lea.vmem %s1, %s224
          // Predicated region
          $region25: #{tpu_custom_call.1} parent=23 // pred_check
            _
          $region26: #{tpu_custom_call.1} parent=23 // pred_check_branch
            %227 = sbr.rel (0) target = $region28
          $region27: #{tpu_custom_call.1} parent=23 // pred_region
            // Predicated region
            $region29: #{tpu_custom_call.1} parent=27 // pred_check
              _
            $region30: #{tpu_custom_call.1} parent=27 // pred_check_branch
              %229 = sbr.rel (0) target = $region32
            $region31: #{tpu_custom_call.1} parent=27 // pred_region
              %s230 = scalar_lea.vmem %s225, 16
              %s231 = scalar_lea.vmem %s222, 16 [#allocation5]
              loop: start=0, step=1, limit=1
              $region33: #{tpu_custom_call.1} parent=31 // loop_pre_header
                _
              $region34: #{tpu_custom_call.1} parent=31 // loop_header
                %s233 = sphi 0, %s237
                %p234 = scmp.ge.s32.totalorder %s233, 1
                %s238 = sphi %s225, %s225
                %s239 = sphi %s222, %s222
              $region35: #{tpu_custom_call.1} parent=31 // loop_header_branch
                %236 = sbr.rel (%p234) target = $region39
              $region36: #{tpu_custom_call.1} parent=31 // loop_body
                %v240 = vld [vmem:[%s238] sm:$0xff]
                %241 = vst [vmem:[%s239] sm:$0xff] %v240
                %v242 = vld [vmem:[%s238 + $0x8] sm:$0xff]
                %243 = vst [vmem:[%s239 + $0x8] sm:$0xff] %v242
                %v244 = vld [vmem:[%s238 + $0x28] sm:$0xff]
                %245 = vst [vmem:[%s239 + $0x14] sm:$0xff] %v244
                %v246 = vld [vmem:[%s238 + $0x30] sm:$0xff]
                %247 = vst [vmem:[%s239 + $0x1c] sm:$0xff] %v246
                %v248 = vld [vmem:[%s238 + $0x50] sm:$0xff]
                %249 = vst [vmem:[%s239 + $0x28] sm:$0xff] %v248
                %v250 = vld [vmem:[%s238 + $0x58] sm:$0xff]
                %251 = vst [vmem:[%s239 + $0x30] sm:$0xff] %v250
                %v252 = vld [vmem:[%s238 + $0x78] sm:$0xff]
                %253 = vst [vmem:[%s239 + $0x3c] sm:$0xff] %v252
                %v254 = vld [vmem:[%s238 + $0x80] sm:$0xff]
                %255 = vst [vmem:[%s239 + $0x44] sm:$0xff] %v254
                %v256 = vld [vmem:[%s238 + $0xa0] sm:$0xff]
                %257 = vst [vmem:[%s239 + $0x50] sm:$0xff] %v256
                %v258 = vld [vmem:[%s238 + $0xa8] sm:$0xff]
                %259 = vst [vmem:[%s239 + $0x58] sm:$0xff] %v258
                %v260 = vld [vmem:[%s238 + $0xc8] sm:$0xff]
                %261 = vst [vmem:[%s239 + $0x64] sm:$0xff] %v260
                %v262 = vld [vmem:[%s238 + $0xd0] sm:$0xff]
                %263 = vst [vmem:[%s239 + $0x6c] sm:$0xff] %v262
                %v264 = vld [vmem:[%s238 + $0xf0] sm:$0xff]
                %265 = vst [vmem:[%s239 + $0x78] sm:$0xff] %v264
                %v266 = vld [vmem:[%s238 + $0xf8] sm:$0xff]
                %267 = vst [vmem:[%s239 + $0x80] sm:$0xff] %v266
                %v268 = vld [vmem:[%s238 + $0x118] sm:$0xff]
                %269 = vst [vmem:[%s239 + $0x8c] sm:$0xff] %v268
                %v270 = vld [vmem:[%s238 + $0x120] sm:$0xff]
                %271 = vst [vmem:[%s239 + $0x94] sm:$0xff] %v270
              $region37: #{tpu_custom_call.1} parent=31 // loop_footer
                %s237 = sadd.s32 1, %s233
              $region38: #{tpu_custom_call.1} parent=31 // loop_footer_branch
                %232 = sbr.rel target = $region34
              $region39: #{tpu_custom_call.1} parent=31 // loop_exit
                _
              %s273 = ssub.s32 16, 1
              loop: start=0, step=1, limit=1
              $region40: #{tpu_custom_call.1} parent=31 // loop_pre_header
                _
              $region41: #{tpu_custom_call.1} parent=31 // loop_header
                %s275 = sphi 0, %s279
                %p276 = scmp.ge.s32.totalorder %s275, 1
                %s280 = sphi %s230, %s230
                %s281 = sphi %s231, %s231
              $region42: #{tpu_custom_call.1} parent=31 // loop_header_branch
                %278 = sbr.rel (%p276) target = $region46
              $region43: #{tpu_custom_call.1} parent=31 // loop_body
                %v282 = vld [vmem:[%s280] sm:%s273]
                %283 = vst [vmem:[%s281] sm:%s273] %v282
                %v284 = vld [vmem:[%s280 + $0x28] sm:%s273]
                %285 = vst [vmem:[%s281 + $0x14] sm:%s273] %v284
                %v286 = vld [vmem:[%s280 + $0x50] sm:%s273]
                %287 = vst [vmem:[%s281 + $0x28] sm:%s273] %v286
                %v288 = vld [vmem:[%s280 + $0x78] sm:%s273]
                %289 = vst [vmem:[%s281 + $0x3c] sm:%s273] %v288
                %v290 = vld [vmem:[%s280 + $0xa0] sm:%s273]
                %291 = vst [vmem:[%s281 + $0x50] sm:%s273] %v290
                %v292 = vld [vmem:[%s280 + $0xc8] sm:%s273]
                %293 = vst [vmem:[%s281 + $0x64] sm:%s273] %v292
                %v294 = vld [vmem:[%s280 + $0xf0] sm:%s273]
                %295 = vst [vmem:[%s281 + $0x78] sm:%s273] %v294
                %v296 = vld [vmem:[%s280 + $0x118] sm:%s273]
                %297 = vst [vmem:[%s281 + $0x8c] sm:%s273] %v296
              $region44: #{tpu_custom_call.1} parent=31 // loop_footer
                %s279 = sadd.s32 1, %s275
              $region45: #{tpu_custom_call.1} parent=31 // loop_footer_branch
                %274 = sbr.rel target = $region41
              $region46: #{tpu_custom_call.1} parent=31 // loop_exit
                _
            $region32: #{tpu_custom_call.1} parent=27 // pred_fallthru
              _
          $region28: #{tpu_custom_call.1} parent=23 // pred_fallthru
            _
          %298 = vnop
        $region24: #{tpu_custom_call.1} parent=15 // pred_fallthru
          _
        // Predicated region
        $region47: #{tpu_custom_call.1} parent=15 // pred_check
          %p299 = pneg %p102
        $region48: #{tpu_custom_call.1} parent=15 // pred_check_branch
          %301 = sbr.rel (%p299) target = $region50
        $region49: #{tpu_custom_call.1} parent=15 // pred_region
          %s302 = smul.u32 5, %s26
          %p303 = scmp.lt.s32.totalorder %s302, 9
          %s304 = scalar_select %p303, %s302, 9
          %s305 = scalar_lea.vmem %s2, %s304
          %s306 = smul.u32 5, %s26
        $region50: #{tpu_custom_call.1} parent=15 // pred_fallthru
          _
        // Predicated region
        $region51: #{tpu_custom_call.1} parent=15 // pred_check
          %p307 = pneg %p128
        $region52: #{tpu_custom_call.1} parent=15 // pred_check_branch
          %309 = sbr.rel (%p307) target = $region54
        $region53: #{tpu_custom_call.1} parent=15 // pred_region
          %s310 = smul.u32 19, %s25
          %p311 = scmp.lt.s32.totalorder %s310, 37
          %s312 = scalar_select %p311, %s310, 37
          %s313 = smul.addr %s312, 8
          %s314 = scalar_lea.vmem %s3, %s313
          %s315 = smul.u32 19, %s25
        $region54: #{tpu_custom_call.1} parent=15 // pred_fallthru
          _
      $region16: #{tpu_custom_call.1} parent=5 // pred_fallthru
        _
      %p316 = scmp.le.s32.totalorder 1, %s18
      %p317 = scmp.lt.s32.totalorder %s18, 5
      %p318 = pnand %p316, %p317
      %p319 = pneg %p318
      // Predicated region
      $region55: #{tpu_custom_call.1} parent=5 // pred_check
        _
      $region56: #{tpu_custom_call.1} parent=5 // pred_check_branch
        %321 = sbr.rel (%p318) target = $region58
      $region57: #{tpu_custom_call.1} parent=5 // pred_region
        %s322 = ssub.s32 %s18, 1
        %s323 = sand.u32 %s69, 1
        %s324 = sand.u32 %s69, 1
        %s325 = smul.addr %s324, 160
        %s326 = scalar_lea.vmem [#allocation5], %s325
        // Predicated region
        $region59: #{tpu_custom_call.1} parent=57 // pred_check
          %p327 = pneg %p82
        $region60: #{tpu_custom_call.1} parent=57 // pred_check_branch
          %329 = sbr.rel (%p327) target = $region62
        $region61: #{tpu_custom_call.1} parent=57 // pred_region
          _
        $region62: #{tpu_custom_call.1} parent=57 // pred_fallthru
          _
        %s330 = smul.u32 19, %s27
        %p331 = scmp.lt.s32.totalorder %s330, 37
        %s332 = scalar_select %p331, %s330, 37
        %s333 = smul.addr %s332, 4
        %s334 = scalar_lea.vmem %s0, %s333
        %p335 = pneg %p56
        %p336 = pneg %p53
        %s337 = sand.u32 %s69, 1
        %s338 = sand.u32 %s69, 1
        %s339 = smul.addr %s338, 160
        %s340 = scalar_lea.vmem [#allocation5], %s339
        %p341 = pneg %p82
        %p342 = pneg %p79
        %s343 = smul.u32 5, %s28
        %p344 = scmp.lt.s32.totalorder %s343, 9
        %s345 = scalar_select %p344, %s343, 9
        %s346 = scalar_lea.vmem %s2, %s345
        %p347 = pneg %p108
        %p348 = pneg %p105
        %s349 = smul.u32 19, %s27
        %p350 = scmp.lt.s32.totalorder %s349, 37
        %s351 = scalar_select %p350, %s349, 37
        %s352 = smul.addr %s351, 8
        %s353 = scalar_lea.vmem %s3, %s352
        %p354 = pneg %p134
        %p355 = pneg %p131
        %p356 = pneg %p162
        %p357 = pneg %p159
        %s358 = sand.u32 %s149, 1
        %s359 = scalar_lea.sflag [#allocation7], %s358
        %s360 = sand.u32 %s149, 1
        %s361 = smul.addr %s360, 380
        %s362 = scalar_lea.vmem [#allocation6], %s361
        %p363 = pneg %p188
        %p364 = pneg %p185
        %s365 = sand.u32 %s175, 1
        %s366 = scalar_lea.sflag [#allocation9], %s365
        %s367 = sand.u32 %s175, 1
        %s368 = smul.addr %s367, 152
        %s369 = scalar_lea.vmem [#allocation8], %s368
        %s370 = smul.u32 19, %s27
        %p371 = scmp.lt.s32.totalorder %s370, 37
        %s372 = scalar_select %p371, %s370, 37
        %s373 = smul.addr %s372, 4
        %s374 = scalar_lea.vmem %s0, %s373
        %s375 = smul.u32 19, %s27
        %s376 = smul.u32 5, %s28
        %s377 = smul.u32 5, %s28
        %p378 = scmp.lt.s32.totalorder %s377, 9
        %s379 = scalar_select %p378, %s377, 9
        %s380 = scalar_lea.vmem %s2, %s379
        %s381 = smul.u32 5, %s28
        %s382 = smul.u32 19, %s27
        %p383 = scmp.lt.s32.totalorder %s382, 37
        %s384 = scalar_select %p383, %s382, 37
        %s385 = smul.addr %s384, 8
        %s386 = scalar_lea.vmem %s3, %s385
        %s387 = smul.u32 19, %s27
        %s388 = smul.u32 19, %s27
        %s389 = smul.u32 5, %s28
        %s390 = smul.u32 19, %s27
        %p392 = scmp.eq.s32.totalorder %s28, 0
        // Predicated region
        $region63: #{tpu_custom_call.1} parent=57 // pred_check
          %p393 = pneg %p392
        $region64: #{tpu_custom_call.1} parent=57 // pred_check_branch
          %395 = sbr.rel (%p393) target = $region66
        $region65: #{tpu_custom_call.1} parent=57 // pred_region
          %vm396 = vcmask 7168
          %397 = vst.msk [vmem:[#allocation2] sm:$0xff] %vm396, -inf
          %398 = vst.msk [vmem:[#allocation2 + $0x8] sm:$0xff] %vm396, -inf
          %399 = vst.msk [vmem:[#allocation2 + $0x10] sm:$0xff] %vm396, -inf
          %400 = vst.msk [vmem:[#allocation2 + $0x18] sm:$0xff] %vm396, -inf
          %401 = vst.msk [vmem:[#allocation2 + $0x20] sm:$0xff] %vm396, -inf
          %402 = vst.msk [vmem:[#allocation2 + $0x28] sm:$0xff] %vm396, -inf
          %403 = vst.msk [vmem:[#allocation2 + $0x30] sm:$0xff] %vm396, -inf
          %404 = vst.msk [vmem:[#allocation2 + $0x38] sm:$0xff] %vm396, -inf
          %405 = vst.msk [vmem:[#allocation2 + $0x40] sm:$0xff] %vm396, -inf
          %406 = vst.msk [vmem:[#allocation2 + $0x48] sm:$0xff] %vm396, -inf
          %407 = vst.msk [vmem:[#allocation2 + $0x50] sm:$0xff] %vm396, -inf
          %408 = vst.msk [vmem:[#allocation2 + $0x58] sm:$0xff] %vm396, -inf
          %409 = vst.msk [vmem:[#allocation2 + $0x60] sm:$0xff] %vm396, -inf
          %410 = vst.msk [vmem:[#allocation2 + $0x68] sm:$0xff] %vm396, -inf
          %411 = vst.msk [vmem:[#allocation2 + $0x70] sm:$0xff] %vm396, -inf
          %412 = vst.msk [vmem:[#allocation2 + $0x78] sm:$0xff] %vm396, -inf
          %413 = vst.msk [vmem:[#allocation2 + $0x80] sm:$0xff] %vm396, -inf
          %414 = vst.msk [vmem:[#allocation2 + $0x88] sm:$0xff] %vm396, -inf
          %415 = vst.msk [vmem:[#allocation2 + $0x90] sm:$0xff] %vm396, -inf
          %416 = vst.msk [vmem:[#allocation3] sm:$0xff] %vm396, 0.0
          %417 = vst.msk [vmem:[#allocation3 + $0x8] sm:$0xff] %vm396, 0.0
          %418 = vst.msk [vmem:[#allocation3 + $0x10] sm:$0xff] %vm396, 0.0
          %419 = vst.msk [vmem:[#allocation3 + $0x18] sm:$0xff] %vm396, 0.0
          %420 = vst.msk [vmem:[#allocation3 + $0x20] sm:$0xff] %vm396, 0.0
          %421 = vst.msk [vmem:[#allocation3 + $0x28] sm:$0xff] %vm396, 0.0
          %422 = vst.msk [vmem:[#allocation3 + $0x30] sm:$0xff] %vm396, 0.0
          %423 = vst.msk [vmem:[#allocation3 + $0x38] sm:$0xff] %vm396, 0.0
          %424 = vst.msk [vmem:[#allocation3 + $0x40] sm:$0xff] %vm396, 0.0
          %425 = vst.msk [vmem:[#allocation3 + $0x48] sm:$0xff] %vm396, 0.0
          %426 = vst.msk [vmem:[#allocation3 + $0x50] sm:$0xff] %vm396, 0.0
          %427 = vst.msk [vmem:[#allocation3 + $0x58] sm:$0xff] %vm396, 0.0
          %428 = vst.msk [vmem:[#allocation3 + $0x60] sm:$0xff] %vm396, 0.0
          %429 = vst.msk [vmem:[#allocation3 + $0x68] sm:$0xff] %vm396, 0.0
          %430 = vst.msk [vmem:[#allocation3 + $0x70] sm:$0xff] %vm396, 0.0
          %431 = vst.msk [vmem:[#allocation3 + $0x78] sm:$0xff] %vm396, 0.0
          %432 = vst.msk [vmem:[#allocation3 + $0x80] sm:$0xff] %vm396, 0.0
          %433 = vst.msk [vmem:[#allocation3 + $0x88] sm:$0xff] %vm396, 0.0
          %434 = vst.msk [vmem:[#allocation3 + $0x90] sm:$0xff] %vm396, 0.0
          %435 = vst.msk [vmem:[#allocation4] sm:$0xff] %vm396, 0.0
          %436 = vst.msk [vmem:[#allocation4 + $0x8] sm:$0xff] %vm396, 0.0
          %437 = vst.msk [vmem:[#allocation4 + $0x10] sm:$0xff] %vm396, 0.0
          %438 = vst.msk [vmem:[#allocation4 + $0x18] sm:$0xff] %vm396, 0.0
          %439 = vst.msk [vmem:[#allocation4 + $0x20] sm:$0xff] %vm396, 0.0
          %440 = vst.msk [vmem:[#allocation4 + $0x28] sm:$0xff] %vm396, 0.0
          %441 = vst.msk [vmem:[#allocation4 + $0x30] sm:$0xff] %vm396, 0.0
          %442 = vst.msk [vmem:[#allocation4 + $0x38] sm:$0xff] %vm396, 0.0
          %443 = vst.msk [vmem:[#allocation4 + $0x40] sm:$0xff] %vm396, 0.0
          %444 = vst.msk [vmem:[#allocation4 + $0x48] sm:$0xff] %vm396, 0.0
          %445 = vst.msk [vmem:[#allocation4 + $0x50] sm:$0xff] %vm396, 0.0
          %446 = vst.msk [vmem:[#allocation4 + $0x58] sm:$0xff] %vm396, 0.0
          %447 = vst.msk [vmem:[#allocation4 + $0x60] sm:$0xff] %vm396, 0.0
          %448 = vst.msk [vmem:[#allocation4 + $0x68] sm:$0xff] %vm396, 0.0
          %449 = vst.msk [vmem:[#allocation4 + $0x70] sm:$0xff] %vm396, 0.0
          %450 = vst.msk [vmem:[#allocation4 + $0x78] sm:$0xff] %vm396, 0.0
          %451 = vst.msk [vmem:[#allocation4 + $0x80] sm:$0xff] %vm396, 0.0
          %452 = vst.msk [vmem:[#allocation4 + $0x88] sm:$0xff] %vm396, 0.0
          %453 = vst.msk [vmem:[#allocation4 + $0x90] sm:$0xff] %vm396, 0.0
        $region66: #{tpu_custom_call.1} parent=57 // pred_fallthru
          _
        %v454 = vld [vmem:[%s374] sm:$0xf]
        %v455 = vld [vmem:[%s374 + $0x4] sm:$0xf]
        %v456 = vld [vmem:[%s374 + $0x8] sm:$0xf]
        %v457 = vld [vmem:[%s374 + $0xc] sm:$0xf]
        %v458 = vld [vmem:[%s374 + $0x10] sm:$0xf]
        %v459 = vld [vmem:[%s374 + $0x14] sm:$0xf]
        %v460 = vld [vmem:[%s374 + $0x18] sm:$0xf]
        %v461 = vld [vmem:[%s374 + $0x1c] sm:$0xf]
        %v462 = vld [vmem:[%s374 + $0x20] sm:$0xf]
        %v463 = vld [vmem:[%s374 + $0x24] sm:$0xf]
        %v464 = vld [vmem:[%s374 + $0x28] sm:$0xf]
        %v465 = vld [vmem:[%s374 + $0x2c] sm:$0xf]
        %v466 = vld [vmem:[%s374 + $0x30] sm:$0xf]
        %v467 = vld [vmem:[%s374 + $0x34] sm:$0xf]
        %v468 = vld [vmem:[%s374 + $0x38] sm:$0xf]
        %v469 = vld [vmem:[%s374 + $0x3c] sm:$0xf]
        %v470 = vld [vmem:[%s374 + $0x40] sm:$0xf]
        %v471 = vld [vmem:[%s374 + $0x44] sm:$0xf]
        %v472 = vld [vmem:[%s374 + $0x48] sm:$0xf]
        %v473 = vld [vmem:[%s326] sm:$0xff]
        %v474 = vld [vmem:[%s326 + $0x8] sm:$0xff]
        %v475 = vld [vmem:[%s326 + $0x10] sm:$0xf]
        %v476 = vld [vmem:[%s326 + $0x14] sm:$0xff]
        %v477 = vld [vmem:[%s326 + $0x1c] sm:$0xff]
        %v478 = vld [vmem:[%s326 + $0x24] sm:$0xf]
        %v479 = vld [vmem:[%s326 + $0x28] sm:$0xff]
        %v480 = vld [vmem:[%s326 + $0x30] sm:$0xff]
        %v481 = vld [vmem:[%s326 + $0x38] sm:$0xf]
        %v482 = vld [vmem:[%s326 + $0x3c] sm:$0xff]
        %v483 = vld [vmem:[%s326 + $0x44] sm:$0xff]
        %v484 = vld [vmem:[%s326 + $0x4c] sm:$0xf]
        %v485 = vld [vmem:[%s326 + $0x50] sm:$0xff]
        %v486 = vld [vmem:[%s326 + $0x58] sm:$0xff]
        %v487 = vld [vmem:[%s326 + $0x60] sm:$0xf]
        %v488 = vld [vmem:[%s326 + $0x64] sm:$0xff]
        %v489 = vld [vmem:[%s326 + $0x6c] sm:$0xff]
        %v490 = vld [vmem:[%s326 + $0x74] sm:$0xf]
        %v491 = vld [vmem:[%s326 + $0x78] sm:$0xff]
        %v492 = vld [vmem:[%s326 + $0x80] sm:$0xff]
        %v493 = vld [vmem:[%s326 + $0x88] sm:$0xf]
        %v494 = vld [vmem:[%s326 + $0x8c] sm:$0xff]
        %v495 = vld [vmem:[%s326 + $0x94] sm:$0xff]
        %v496 = vld [vmem:[%s326 + $0x9c] sm:$0xf]
        %v497 = vld [vmem:[%s380] sm:$0x1f]
        %v499 = vlaneseq
        %v500 = vshrl.u32 %v499, 7
        %v501 = vsub.s32 0, %v500
        %v502 = vrot.slane %v497, %v501
        %v503 = vlaneseq
        %v504 = vshrl.u32 %v503, 7
        %v505 = vsub.s32 1, %v504
        %v506 = vrot.slane %v497, %v505
        %v507 = vlaneseq
        %v508 = vshrl.u32 %v507, 7
        %v509 = vsub.s32 2, %v508
        %v510 = vrot.slane %v497, %v509
        %v511 = vlaneseq
        %v512 = vshrl.u32 %v511, 7
        %v513 = vsub.s32 3, %v512
        %v514 = vrot.slane %v497, %v513
        %v515 = vlaneseq
        %v516 = vshrl.u32 %v515, 7
        %v517 = vsub.s32 4, %v516
        %v518 = vrot.slane %v497, %v517
        %v543 = vunpack.c.l.b16 %v454
        %v544 = vunpack.c.l.b16 %v455
        %v545 = vunpack.c.l.b16 %v456
        %v546 = vunpack.c.l.b16 %v457
        %v547 = vunpack.c.l.b16 %v458
        %v548 = vunpack.c.l.b16 %v459
        %v549 = vunpack.c.l.b16 %v460
        %v550 = vunpack.c.l.b16 %v461
        %v551 = vunpack.c.l.b16 %v462
        %v552 = vunpack.c.l.b16 %v463
        %v553 = vunpack.c.l.b16 %v464
        %v554 = vunpack.c.l.b16 %v465
        %v555 = vunpack.c.l.b16 %v466
        %v556 = vunpack.c.l.b16 %v467
        %v557 = vunpack.c.l.b16 %v468
        %v558 = vunpack.c.l.b16 %v469
        %v559 = vunpack.c.l.b16 %v470
        %v560 = vunpack.c.l.b16 %v471
        %v561 = vunpack.c.l.b16 %v472
        %v562 = vpack.c.b16 %v544, %v543
        %v563 = vpack.c.b16 %v546, %v545
        %v564 = vpack.c.b16 %v548, %v547
        %v565 = vpack.c.b16 %v550, %v549
        %v566 = vpack.c.b16 %v552, %v551
        %v567 = vpack.c.b16 %v554, %v553
        %v568 = vpack.c.b16 %v556, %v555
        %v569 = vpack.c.b16 %v558, %v557
        %v570 = vpack.c.b16 %v560, %v559
        %v571 = vpack.c.b16 %v561, %v561
        %v596 = vunpack.c.l.b16 %v473
        %v597 = vunpack.c.h.b16 %v473
        %v598 = vunpack.c.l.b16 %v474
        %v599 = vunpack.c.h.b16 %v474
        %v600 = vunpack.c.l.b16 %v475
        %v601 = vunpack.c.l.b16 %v476
        %v602 = vunpack.c.h.b16 %v476
        %v603 = vunpack.c.l.b16 %v477
        %v604 = vunpack.c.h.b16 %v477
        %v605 = vunpack.c.l.b16 %v478
        %v606 = vunpack.c.l.b16 %v479
        %v607 = vunpack.c.h.b16 %v479
        %v608 = vunpack.c.l.b16 %v480
        %v609 = vunpack.c.h.b16 %v480
        %v610 = vunpack.c.l.b16 %v481
        %v611 = vunpack.c.l.b16 %v482
        %v612 = vunpack.c.h.b16 %v482
        %v613 = vunpack.c.l.b16 %v483
        %v614 = vunpack.c.h.b16 %v483
        %v615 = vunpack.c.l.b16 %v484
        %v616 = vunpack.c.l.b16 %v485
        %v617 = vunpack.c.h.b16 %v485
        %v618 = vunpack.c.l.b16 %v486
        %v619 = vunpack.c.h.b16 %v486
        %v620 = vunpack.c.l.b16 %v487
        %v621 = vunpack.c.l.b16 %v488
        %v622 = vunpack.c.h.b16 %v488
        %v623 = vunpack.c.l.b16 %v489
        %v624 = vunpack.c.h.b16 %v489
        %v625 = vunpack.c.l.b16 %v490
        %v626 = vunpack.c.l.b16 %v491
        %v627 = vunpack.c.h.b16 %v491
        %v628 = vunpack.c.l.b16 %v492
        %v629 = vunpack.c.h.b16 %v492
        %v630 = vunpack.c.l.b16 %v493
        %v631 = vunpack.c.l.b16 %v494
        %v632 = vunpack.c.h.b16 %v494
        %v633 = vunpack.c.l.b16 %v495
        %v634 = vunpack.c.h.b16 %v495
        %v635 = vunpack.c.l.b16 %v496
        %v636 = vpack.c.b16 %v601, %v596
        %v637 = vpack.c.b16 %v602, %v597
        %v638 = vpack.c.b16 %v603, %v598
        %v639 = vpack.c.b16 %v604, %v599
        %v640 = vpack.c.b16 %v605, %v600
        %v641 = vpack.c.b16 %v611, %v606
        %v642 = vpack.c.b16 %v612, %v607
        %v643 = vpack.c.b16 %v613, %v608
        %v644 = vpack.c.b16 %v614, %v609
        %v645 = vpack.c.b16 %v615, %v610
        %v646 = vpack.c.b16 %v621, %v616
        %v647 = vpack.c.b16 %v622, %v617
        %v648 = vpack.c.b16 %v623, %v618
        %v649 = vpack.c.b16 %v624, %v619
        %v650 = vpack.c.b16 %v625, %v620
        %v651 = vpack.c.b16 %v631, %v626
        %v652 = vpack.c.b16 %v632, %v627
        %v653 = vpack.c.b16 %v633, %v628
        %v654 = vpack.c.b16 %v634, %v629
        %v655 = vpack.c.b16 %v635, %v630
        %vm676 = vcmask 523264
        %v678 = vsel %vm676, %v562, 0
        %v681 = vsel %vm676, %v563, 0
        %v684 = vsel %vm676, %v564, 0
        %v687 = vsel %vm676, %v565, 0
        %v690 = vsel %vm676, %v566, 0
        %v693 = vsel %vm676, %v567, 0
        %v696 = vsel %vm676, %v568, 0
        %v699 = vsel %vm676, %v569, 0
        %v702 = vsel %vm676, %v570, 0
        %v705 = vsel %vm676, %v571, 0
        %707 = vmatprep.subr.bf16.mxu0 0
        %708 = vmatpush1.bf16.msra.mxu0 0
        %709 = vmatprep.subr.bf16.mxu0 0
        %710 = vmatpush1.bf16.msra.mxu0 0
        %711 = vmatprep.subr.bf16.mxu0 0
        %712 = vmatpush1.bf16.msra.mxu0 0
        %713 = vmatprep.subr.bf16.mxu0 0
        %714 = vmatpush1.bf16.msra.mxu0 0
        %715 = vmatprep.subr.bf16.mxu0 %v652
        %716 = vmatpush1.bf16.msra.mxu0 %v651
        %717 = vmatprep.subr.bf16.mxu0 %v647
        %718 = vmatpush1.bf16.msra.mxu0 %v646
        %719 = vmatprep.subr.bf16.mxu0 %v642
        %720 = vmatpush1.bf16.msra.mxu0 %v641
        %721 = vmatprep.subr.bf16.mxu0 %v637
        %722 = vmatpush1.bf16.msra.mxu0 %v636
        %723 = vmatprep.subr.bf16.mxu0 0
        %724 = vmatpush2.bf16.msra.mxu0 0
        %725 = vmatprep.subr.bf16.mxu0 0
        %726 = vmatpush2.bf16.msra.mxu0 0
        %727 = vmatprep.subr.bf16.mxu0 0
        %728 = vmatpush2.bf16.msra.mxu0 0
        %729 = vmatprep.subr.bf16.mxu0 0
        %730 = vmatpush2.bf16.msra.mxu0 0
        %731 = vmatprep.subr.bf16.mxu0 0
        %732 = vmatpush2.bf16.msra.mxu0 0
        %733 = vmatprep.subr.bf16.mxu0 0
        %734 = vmatpush2.bf16.msra.mxu0 0
        %735 = vmatprep.subr.bf16.mxu0 0
        %736 = vmatpush2.bf16.msra.mxu0 0
        %737 = vmatprep.subr.bf16.mxu0 0
        %738 = vmatpush2.bf16.msra.mxu0 0
        %739 = vmatprep.mubr.bf16.mxu0 0
        %740 = vmatmul.mubr.bf16.gmra.mxu0 %v678
        %v741 = vpop.f32.mrf.mxu0
        %v742 = vadd.f32 %v502, %v741
        %v743 = vpop.f32.mrf.mxu0
        %v744 = vadd.f32 %v506, %v743
        %v745 = vpop.f32.mrf.mxu0
        %v746 = vadd.f32 %v502, %v745
        %v747 = vpop.f32.mrf.mxu0
        %v748 = vadd.f32 %v506, %v747
        %749 = vmatprep.mubr.bf16.mxu0 0
        %750 = vmatmul.mubr.bf16.gmra.mxu0 %v681
        %v751 = vpop.f32.mrf.mxu0
        %v752 = vadd.f32 %v502, %v751
        %v753 = vpop.f32.mrf.mxu0
        %v754 = vadd.f32 %v506, %v753
        %v755 = vpop.f32.mrf.mxu0
        %v756 = vadd.f32 %v502, %v755
        %v757 = vpop.f32.mrf.mxu0
        %v758 = vadd.f32 %v506, %v757
        %759 = vmatprep.mubr.bf16.mxu0 0
        %760 = vmatmul.mubr.bf16.gmra.mxu0 %v684
        %v761 = vpop.f32.mrf.mxu0
        %v762 = vadd.f32 %v502, %v761
        %v763 = vpop.f32.mrf.mxu0
        %v764 = vadd.f32 %v506, %v763
        %v765 = vpop.f32.mrf.mxu0
        %v766 = vadd.f32 %v502, %v765
        %v767 = vpop.f32.mrf.mxu0
        %v768 = vadd.f32 %v506, %v767
        %769 = vmatprep.mubr.bf16.mxu0 0
        %770 = vmatmul.mubr.bf16.gmra.mxu0 %v687
        %v771 = vpop.f32.mrf.mxu0
        %v772 = vadd.f32 %v502, %v771
        %v773 = vpop.f32.mrf.mxu0
        %v774 = vadd.f32 %v506, %v773
        %v775 = vpop.f32.mrf.mxu0
        %v776 = vadd.f32 %v502, %v775
        %v777 = vpop.f32.mrf.mxu0
        %v778 = vadd.f32 %v506, %v777
        %779 = vmatprep.mubr.bf16.mxu0 0
        %780 = vmatmul.mubr.bf16.gmra.mxu0 %v690
        %v781 = vpop.f32.mrf.mxu0
        %v782 = vadd.f32 %v502, %v781
        %v783 = vpop.f32.mrf.mxu0
        %v784 = vadd.f32 %v506, %v783
        %v785 = vpop.f32.mrf.mxu0
        %v786 = vadd.f32 %v502, %v785
        %v787 = vpop.f32.mrf.mxu0
        %v788 = vadd.f32 %v506, %v787
        %789 = vmatprep.mubr.bf16.mxu0 0
        %790 = vmatmul.mubr.bf16.gmra.mxu0 %v693
        %v791 = vpop.f32.mrf.mxu0
        %v792 = vadd.f32 %v502, %v791
        %v793 = vpop.f32.mrf.mxu0
        %v794 = vadd.f32 %v506, %v793
        %v795 = vpop.f32.mrf.mxu0
        %v796 = vadd.f32 %v502, %v795
        %v797 = vpop.f32.mrf.mxu0
        %v798 = vadd.f32 %v506, %v797
        %799 = vmatprep.mubr.bf16.mxu0 0
        %800 = vmatmul.mubr.bf16.gmra.mxu0 %v696
        %v801 = vpop.f32.mrf.mxu0
        %v802 = vadd.f32 %v502, %v801
        %v803 = vpop.f32.mrf.mxu0
        %v804 = vadd.f32 %v506, %v803
        %v805 = vpop.f32.mrf.mxu0
        %v806 = vadd.f32 %v502, %v805
        %v807 = vpop.f32.mrf.mxu0
        %v808 = vadd.f32 %v506, %v807
        %809 = vmatprep.mubr.bf16.mxu0 0
        %810 = vmatmul.mubr.bf16.gmra.mxu0 %v699
        %v811 = vpop.f32.mrf.mxu0
        %v812 = vadd.f32 %v502, %v811
        %v813 = vpop.f32.mrf.mxu0
        %v814 = vadd.f32 %v506, %v813
        %v815 = vpop.f32.mrf.mxu0
        %v816 = vadd.f32 %v502, %v815
        %v817 = vpop.f32.mrf.mxu0
        %v818 = vadd.f32 %v506, %v817
        %819 = vmatprep.mubr.bf16.mxu0 0
        %820 = vmatmul.mubr.bf16.gmra.mxu0 %v702
        %v821 = vpop.f32.mrf.mxu0
        %v822 = vadd.f32 %v502, %v821
        %v823 = vpop.f32.mrf.mxu0
        %v824 = vadd.f32 %v506, %v823
        %v825 = vpop.f32.mrf.mxu0
        %v826 = vadd.f32 %v502, %v825
        %v827 = vpop.f32.mrf.mxu0
        %v828 = vadd.f32 %v506, %v827
        %829 = vmatprep.mubr.bf16.mxu0 0
        %830 = vmatmul.mubr.bf16.gmra.mxu0 %v705
        %v831 = vpop.f32.mrf.mxu0
        %v832 = vadd.f32 %v502, %v831
        %v833 = vpop.f32.mrf.mxu0
        %v834 = vadd.f32 %v506, %v833
        %v835 = vpop.f32.mrf.mxu0
        %v836 = vpop.f32.mrf.mxu0
        %837 = vdwg.mxu0
        %838 = vmatprep.subr.bf16.mxu0 0
        %839 = vmatpush1.bf16.msra.mxu0 0
        %840 = vmatprep.subr.bf16.mxu0 0
        %841 = vmatpush1.bf16.msra.mxu0 0
        %842 = vmatprep.subr.bf16.mxu0 0
        %843 = vmatpush1.bf16.msra.mxu0 0
        %844 = vmatprep.subr.bf16.mxu0 0
        %845 = vmatpush1.bf16.msra.mxu0 0
        %846 = vmatprep.subr.bf16.mxu0 %v654
        %847 = vmatpush1.bf16.msra.mxu0 %v653
        %848 = vmatprep.subr.bf16.mxu0 %v649
        %849 = vmatpush1.bf16.msra.mxu0 %v648
        %850 = vmatprep.subr.bf16.mxu0 %v644
        %851 = vmatpush1.bf16.msra.mxu0 %v643
        %852 = vmatprep.subr.bf16.mxu0 %v639
        %853 = vmatpush1.bf16.msra.mxu0 %v638
        %854 = vmatprep.subr.bf16.mxu0 0
        %855 = vmatpush2.bf16.msra.mxu0 0
        %856 = vmatprep.subr.bf16.mxu0 0
        %857 = vmatpush2.bf16.msra.mxu0 0
        %858 = vmatprep.subr.bf16.mxu0 0
        %859 = vmatpush2.bf16.msra.mxu0 0
        %860 = vmatprep.subr.bf16.mxu0 0
        %861 = vmatpush2.bf16.msra.mxu0 0
        %862 = vmatprep.subr.bf16.mxu0 0
        %863 = vmatpush2.bf16.msra.mxu0 0
        %864 = vmatprep.subr.bf16.mxu0 0
        %865 = vmatpush2.bf16.msra.mxu0 0
        %866 = vmatprep.subr.bf16.mxu0 0
        %867 = vmatpush2.bf16.msra.mxu0 0
        %868 = vmatprep.subr.bf16.mxu0 0
        %869 = vmatpush2.bf16.msra.mxu0 0
        %870 = vmatprep.mubr.bf16.mxu0 0
        %871 = vmatmul.mubr.bf16.gmra.mxu0 %v678
        %v872 = vpop.f32.mrf.mxu0
        %v873 = vadd.f32 %v510, %v872
        %v874 = vpop.f32.mrf.mxu0
        %v875 = vadd.f32 %v514, %v874
        %v876 = vpop.f32.mrf.mxu0
        %v877 = vadd.f32 %v510, %v876
        %v878 = vpop.f32.mrf.mxu0
        %v879 = vadd.f32 %v514, %v878
        %880 = vmatprep.mubr.bf16.mxu0 0
        %881 = vmatmul.mubr.bf16.gmra.mxu0 %v681
        %v882 = vpop.f32.mrf.mxu0
        %v883 = vadd.f32 %v510, %v882
        %v884 = vpop.f32.mrf.mxu0
        %v885 = vadd.f32 %v514, %v884
        %v886 = vpop.f32.mrf.mxu0
        %v887 = vadd.f32 %v510, %v886
        %v888 = vpop.f32.mrf.mxu0
        %v889 = vadd.f32 %v514, %v888
        %890 = vmatprep.mubr.bf16.mxu0 0
        %891 = vmatmul.mubr.bf16.gmra.mxu0 %v684
        %v892 = vpop.f32.mrf.mxu0
        %v893 = vadd.f32 %v510, %v892
        %v894 = vpop.f32.mrf.mxu0
        %v895 = vadd.f32 %v514, %v894
        %v896 = vpop.f32.mrf.mxu0
        %v897 = vadd.f32 %v510, %v896
        %v898 = vpop.f32.mrf.mxu0
        %v899 = vadd.f32 %v514, %v898
        %900 = vmatprep.mubr.bf16.mxu0 0
        %901 = vmatmul.mubr.bf16.gmra.mxu0 %v687
        %v902 = vpop.f32.mrf.mxu0
        %v903 = vadd.f32 %v510, %v902
        %v904 = vpop.f32.mrf.mxu0
        %v905 = vadd.f32 %v514, %v904
        %v906 = vpop.f32.mrf.mxu0
        %v907 = vadd.f32 %v510, %v906
        %v908 = vpop.f32.mrf.mxu0
        %v909 = vadd.f32 %v514, %v908
        %910 = vmatprep.mubr.bf16.mxu0 0
        %911 = vmatmul.mubr.bf16.gmra.mxu0 %v690
        %v912 = vpop.f32.mrf.mxu0
        %v913 = vadd.f32 %v510, %v912
        %v914 = vpop.f32.mrf.mxu0
        %v915 = vadd.f32 %v514, %v914
        %v916 = vpop.f32.mrf.mxu0
        %v917 = vadd.f32 %v510, %v916
        %v918 = vpop.f32.mrf.mxu0
        %v919 = vadd.f32 %v514, %v918
        %920 = vmatprep.mubr.bf16.mxu0 0
        %921 = vmatmul.mubr.bf16.gmra.mxu0 %v693
        %v922 = vpop.f32.mrf.mxu0
        %v923 = vadd.f32 %v510, %v922
        %v924 = vpop.f32.mrf.mxu0
        %v925 = vadd.f32 %v514, %v924
        %v926 = vpop.f32.mrf.mxu0
        %v927 = vadd.f32 %v510, %v926
        %v928 = vpop.f32.mrf.mxu0
        %v929 = vadd.f32 %v514, %v928
        %930 = vmatprep.mubr.bf16.mxu0 0
        %931 = vmatmul.mubr.bf16.gmra.mxu0 %v696
        %v932 = vpop.f32.mrf.mxu0
        %v933 = vadd.f32 %v510, %v932
        %v934 = vpop.f32.mrf.mxu0
        %v935 = vadd.f32 %v514, %v934
        %v936 = vpop.f32.mrf.mxu0
        %v937 = vadd.f32 %v510, %v936
        %v938 = vpop.f32.mrf.mxu0
        %v939 = vadd.f32 %v514, %v938
        %940 = vmatprep.mubr.bf16.mxu0 0
        %941 = vmatmul.mubr.bf16.gmra.mxu0 %v699
        %v942 = vpop.f32.mrf.mxu0
        %v943 = vadd.f32 %v510, %v942
        %v944 = vpop.f32.mrf.mxu0
        %v945 = vadd.f32 %v514, %v944
        %v946 = vpop.f32.mrf.mxu0
        %v947 = vadd.f32 %v510, %v946
        %v948 = vpop.f32.mrf.mxu0
        %v949 = vadd.f32 %v514, %v948
        %950 = vmatprep.mubr.bf16.mxu0 0
        %951 = vmatmul.mubr.bf16.gmra.mxu0 %v702
        %v952 = vpop.f32.mrf.mxu0
        %v953 = vadd.f32 %v510, %v952
        %v954 = vpop.f32.mrf.mxu0
        %v955 = vadd.f32 %v514, %v954
        %v956 = vpop.f32.mrf.mxu0
        %v957 = vadd.f32 %v510, %v956
        %v958 = vpop.f32.mrf.mxu0
        %v959 = vadd.f32 %v514, %v958
        %960 = vmatprep.mubr.bf16.mxu0 0
        %961 = vmatmul.mubr.bf16.gmra.mxu0 %v705
        %v962 = vpop.f32.mrf.mxu0
        %v963 = vadd.f32 %v510, %v962
        %v964 = vpop.f32.mrf.mxu0
        %v965 = vadd.f32 %v514, %v964
        %v966 = vpop.f32.mrf.mxu0
        %v967 = vpop.f32.mrf.mxu0
        %968 = vdwg.mxu0
        %969 = vmatprep.subr.bf16.mxu0 0
        %970 = vmatpush1.bf16.msra.mxu0 0
        %971 = vmatprep.subr.bf16.mxu0 0
        %972 = vmatpush1.bf16.msra.mxu0 0
        %973 = vmatprep.subr.bf16.mxu0 0
        %974 = vmatpush1.bf16.msra.mxu0 0
        %975 = vmatprep.subr.bf16.mxu0 0
        %976 = vmatpush1.bf16.msra.mxu0 0
        %977 = vmatprep.subr.bf16.mxu0 0
        %978 = vmatpush1.bf16.msra.mxu0 %v655
        %979 = vmatprep.subr.bf16.mxu0 0
        %980 = vmatpush1.bf16.msra.mxu0 %v650
        %981 = vmatprep.subr.bf16.mxu0 0
        %982 = vmatpush1.bf16.msra.mxu0 %v645
        %983 = vmatprep.subr.bf16.mxu0 0
        %984 = vmatpush1.bf16.msra.mxu0 %v640
        %985 = vmatprep.subr.bf16.mxu0 0
        %986 = vmatpush2.bf16.msra.mxu0 0
        %987 = vmatprep.subr.bf16.mxu0 0
        %988 = vmatpush2.bf16.msra.mxu0 0
        %989 = vmatprep.subr.bf16.mxu0 0
        %990 = vmatpush2.bf16.msra.mxu0 0
        %991 = vmatprep.subr.bf16.mxu0 0
        %992 = vmatpush2.bf16.msra.mxu0 0
        %993 = vmatprep.subr.bf16.mxu0 0
        %994 = vmatpush2.bf16.msra.mxu0 0
        %995 = vmatprep.subr.bf16.mxu0 0
        %996 = vmatpush2.bf16.msra.mxu0 0
        %997 = vmatprep.subr.bf16.mxu0 0
        %998 = vmatpush2.bf16.msra.mxu0 0
        %999 = vmatprep.subr.bf16.mxu0 0
        %1000 = vmatpush2.bf16.msra.mxu0 0
        %1001 = vmatprep.mubr.bf16.mxu0 0
        %1002 = vmatmul.mubr.bf16.gmra.mxu0 %v678
        %v1003 = vpop.f32.mrf.mxu0
        %v1004 = vadd.f32 %v518, %v1003
        %v1005 = vpop.f32.mrf.mxu0
        %v1006 = vpop.f32.mrf.mxu0
        %v1007 = vadd.f32 %v518, %v1006
        %v1008 = vpop.f32.mrf.mxu0
        %1009 = vmatprep.mubr.bf16.mxu0 0
        %1010 = vmatmul.mubr.bf16.gmra.mxu0 %v681
        %v1011 = vpop.f32.mrf.mxu0
        %v1012 = vadd.f32 %v518, %v1011
        %v1013 = vpop.f32.mrf.mxu0
        %v1014 = vpop.f32.mrf.mxu0
        %v1015 = vadd.f32 %v518, %v1014
        %v1016 = vpop.f32.mrf.mxu0
        %1017 = vmatprep.mubr.bf16.mxu0 0
        %1018 = vmatmul.mubr.bf16.gmra.mxu0 %v684
        %v1019 = vpop.f32.mrf.mxu0
        %v1020 = vadd.f32 %v518, %v1019
        %v1021 = vpop.f32.mrf.mxu0
        %v1022 = vpop.f32.mrf.mxu0
        %v1023 = vadd.f32 %v518, %v1022
        %v1024 = vpop.f32.mrf.mxu0
        %1025 = vmatprep.mubr.bf16.mxu0 0
        %1026 = vmatmul.mubr.bf16.gmra.mxu0 %v687
        %v1027 = vpop.f32.mrf.mxu0
        %v1028 = vadd.f32 %v518, %v1027
        %v1029 = vpop.f32.mrf.mxu0
        %v1030 = vpop.f32.mrf.mxu0
        %v1031 = vadd.f32 %v518, %v1030
        %v1032 = vpop.f32.mrf.mxu0
        %1033 = vmatprep.mubr.bf16.mxu0 0
        %1034 = vmatmul.mubr.bf16.gmra.mxu0 %v690
        %v1035 = vpop.f32.mrf.mxu0
        %v1036 = vadd.f32 %v518, %v1035
        %v1037 = vpop.f32.mrf.mxu0
        %v1038 = vpop.f32.mrf.mxu0
        %v1039 = vadd.f32 %v518, %v1038
        %v1040 = vpop.f32.mrf.mxu0
        %1041 = vmatprep.mubr.bf16.mxu0 0
        %1042 = vmatmul.mubr.bf16.gmra.mxu0 %v693
        %v1043 = vpop.f32.mrf.mxu0
        %v1044 = vadd.f32 %v518, %v1043
        %v1045 = vpop.f32.mrf.mxu0
        %v1046 = vpop.f32.mrf.mxu0
        %v1047 = vadd.f32 %v518, %v1046
        %v1048 = vpop.f32.mrf.mxu0
        %1049 = vmatprep.mubr.bf16.mxu0 0
        %1050 = vmatmul.mubr.bf16.gmra.mxu0 %v696
        %v1051 = vpop.f32.mrf.mxu0
        %v1052 = vadd.f32 %v518, %v1051
        %v1053 = vpop.f32.mrf.mxu0
        %v1054 = vpop.f32.mrf.mxu0
        %v1055 = vadd.f32 %v518, %v1054
        %v1056 = vpop.f32.mrf.mxu0
        %1057 = vmatprep.mubr.bf16.mxu0 0
        %1058 = vmatmul.mubr.bf16.gmra.mxu0 %v699
        %v1059 = vpop.f32.mrf.mxu0
        %v1060 = vadd.f32 %v518, %v1059
        %v1061 = vpop.f32.mrf.mxu0
        %v1062 = vpop.f32.mrf.mxu0
        %v1063 = vadd.f32 %v518, %v1062
        %v1064 = vpop.f32.mrf.mxu0
        %1065 = vmatprep.mubr.bf16.mxu0 0
        %1066 = vmatmul.mubr.bf16.gmra.mxu0 %v702
        %v1067 = vpop.f32.mrf.mxu0
        %v1068 = vadd.f32 %v518, %v1067
        %v1069 = vpop.f32.mrf.mxu0
        %v1070 = vpop.f32.mrf.mxu0
        %v1071 = vadd.f32 %v518, %v1070
        %v1072 = vpop.f32.mrf.mxu0
        %1073 = vmatprep.mubr.bf16.mxu0 0
        %1074 = vmatmul.mubr.bf16.gmra.mxu0 %v705
        %v1075 = vpop.f32.mrf.mxu0
        %v1076 = vadd.f32 %v518, %v1075
        %v1077 = vpop.f32.mrf.mxu0
        %v1078 = vpop.f32.mrf.mxu0
        %v1079 = vpop.f32.mrf.mxu0
        %1080 = vdwg.mxu0
        %v1081 = vpack.c.bf16 %v746, %v742
        %v1082 = vpack.c.bf16 %v748, %v744
        %v1083 = vpack.c.bf16 %v877, %v873
        %v1084 = vpack.c.bf16 %v879, %v875
        %v1085 = vpack.c.bf16 %v1007, %v1004
        %v1086 = vpack.c.bf16 %v756, %v752
        %v1087 = vpack.c.bf16 %v758, %v754
        %v1088 = vpack.c.bf16 %v887, %v883
        %v1089 = vpack.c.bf16 %v889, %v885
        %v1090 = vpack.c.bf16 %v1015, %v1012
        %v1091 = vpack.c.bf16 %v766, %v762
        %v1092 = vpack.c.bf16 %v768, %v764
        %v1093 = vpack.c.bf16 %v897, %v893
        %v1094 = vpack.c.bf16 %v899, %v895
        %v1095 = vpack.c.bf16 %v1023, %v1020
        %v1096 = vpack.c.bf16 %v776, %v772
        %v1097 = vpack.c.bf16 %v778, %v774
        %v1098 = vpack.c.bf16 %v907, %v903
        %v1099 = vpack.c.bf16 %v909, %v905
        %v1100 = vpack.c.bf16 %v1031, %v1028
        %v1101 = vpack.c.bf16 %v786, %v782
        %v1102 = vpack.c.bf16 %v788, %v784
        %v1103 = vpack.c.bf16 %v917, %v913
        %v1104 = vpack.c.bf16 %v919, %v915
        %v1105 = vpack.c.bf16 %v1039, %v1036
        %v1106 = vpack.c.bf16 %v796, %v792
        %v1107 = vpack.c.bf16 %v798, %v794
        %v1108 = vpack.c.bf16 %v927, %v923
        %v1109 = vpack.c.bf16 %v929, %v925
        %v1110 = vpack.c.bf16 %v1047, %v1044
        %v1111 = vpack.c.bf16 %v806, %v802
        %v1112 = vpack.c.bf16 %v808, %v804
        %v1113 = vpack.c.bf16 %v937, %v933
        %v1114 = vpack.c.bf16 %v939, %v935
        %v1115 = vpack.c.bf16 %v1055, %v1052
        %v1116 = vpack.c.bf16 %v816, %v812
        %v1117 = vpack.c.bf16 %v818, %v814
        %v1118 = vpack.c.bf16 %v947, %v943
        %v1119 = vpack.c.bf16 %v949, %v945
        %v1120 = vpack.c.bf16 %v1063, %v1060
        %v1121 = vpack.c.bf16 %v826, %v822
        %v1122 = vpack.c.bf16 %v828, %v824
        %v1123 = vpack.c.bf16 %v957, %v953
        %v1124 = vpack.c.bf16 %v959, %v955
        %v1125 = vpack.c.bf16 %v1071, %v1068
        %v1126 = vpack.c.bf16 %v832, %v832
        %v1127 = vpack.c.bf16 %v834, %v834
        %v1128 = vpack.c.bf16 %v963, %v963
        %v1129 = vpack.c.bf16 %v965, %v965
        %v1130 = vpack.c.bf16 %v1076, %v1076
        %v1181 = vunpack.c.l.b16 %v1081
        %v1182 = vunpack.c.l.b16 %v1082
        %v1183 = vunpack.c.l.b16 %v1083
        %v1184 = vunpack.c.l.b16 %v1084
        %v1185 = vunpack.c.l.b16 %v1085
        %v1186 = vunpack.c.h.b16 %v1081
        %v1187 = vunpack.c.h.b16 %v1082
        %v1188 = vunpack.c.h.b16 %v1083
        %v1189 = vunpack.c.h.b16 %v1084
        %v1190 = vunpack.c.h.b16 %v1085
        %v1191 = vunpack.c.l.b16 %v1086
        %v1192 = vunpack.c.l.b16 %v1087
        %v1193 = vunpack.c.l.b16 %v1088
        %v1194 = vunpack.c.l.b16 %v1089
        %v1195 = vunpack.c.l.b16 %v1090
        %v1196 = vunpack.c.h.b16 %v1086
        %v1197 = vunpack.c.h.b16 %v1087
        %v1198 = vunpack.c.h.b16 %v1088
        %v1199 = vunpack.c.h.b16 %v1089
        %v1200 = vunpack.c.h.b16 %v1090
        %v1201 = vunpack.c.l.b16 %v1091
        %v1202 = vunpack.c.l.b16 %v1092
        %v1203 = vunpack.c.l.b16 %v1093
        %v1204 = vunpack.c.l.b16 %v1094
        %v1205 = vunpack.c.l.b16 %v1095
        %v1206 = vunpack.c.h.b16 %v1091
        %v1207 = vunpack.c.h.b16 %v1092
        %v1208 = vunpack.c.h.b16 %v1093
        %v1209 = vunpack.c.h.b16 %v1094
        %v1210 = vunpack.c.h.b16 %v1095
        %v1211 = vunpack.c.l.b16 %v1096
        %v1212 = vunpack.c.l.b16 %v1097
        %v1213 = vunpack.c.l.b16 %v1098
        %v1214 = vunpack.c.l.b16 %v1099
        %v1215 = vunpack.c.l.b16 %v1100
        %v1216 = vunpack.c.h.b16 %v1096
        %v1217 = vunpack.c.h.b16 %v1097
        %v1218 = vunpack.c.h.b16 %v1098
        %v1219 = vunpack.c.h.b16 %v1099
        %v1220 = vunpack.c.h.b16 %v1100
        %v1221 = vunpack.c.l.b16 %v1101
        %v1222 = vunpack.c.l.b16 %v1102
        %v1223 = vunpack.c.l.b16 %v1103
        %v1224 = vunpack.c.l.b16 %v1104
        %v1225 = vunpack.c.l.b16 %v1105
        %v1226 = vunpack.c.h.b16 %v1101
        %v1227 = vunpack.c.h.b16 %v1102
        %v1228 = vunpack.c.h.b16 %v1103
        %v1229 = vunpack.c.h.b16 %v1104
        %v1230 = vunpack.c.h.b16 %v1105
        %v1231 = vunpack.c.l.b16 %v1106
        %v1232 = vunpack.c.l.b16 %v1107
        %v1233 = vunpack.c.l.b16 %v1108
        %v1234 = vunpack.c.l.b16 %v1109
        %v1235 = vunpack.c.l.b16 %v1110
        %v1236 = vunpack.c.h.b16 %v1106
        %v1237 = vunpack.c.h.b16 %v1107
        %v1238 = vunpack.c.h.b16 %v1108
        %v1239 = vunpack.c.h.b16 %v1109
        %v1240 = vunpack.c.h.b16 %v1110
        %v1241 = vunpack.c.l.b16 %v1111
        %v1242 = vunpack.c.l.b16 %v1112
        %v1243 = vunpack.c.l.b16 %v1113
        %v1244 = vunpack.c.l.b16 %v1114
        %v1245 = vunpack.c.l.b16 %v1115
        %v1246 = vunpack.c.h.b16 %v1111
        %v1247 = vunpack.c.h.b16 %v1112
        %v1248 = vunpack.c.h.b16 %v1113
        %v1249 = vunpack.c.h.b16 %v1114
        %v1250 = vunpack.c.h.b16 %v1115
        %v1251 = vunpack.c.l.b16 %v1116
        %v1252 = vunpack.c.l.b16 %v1117
        %v1253 = vunpack.c.l.b16 %v1118
        %v1254 = vunpack.c.l.b16 %v1119
        %v1255 = vunpack.c.l.b16 %v1120
        %v1256 = vunpack.c.h.b16 %v1116
        %v1257 = vunpack.c.h.b16 %v1117
        %v1258 = vunpack.c.h.b16 %v1118
        %v1259 = vunpack.c.h.b16 %v1119
        %v1260 = vunpack.c.h.b16 %v1120
        %v1261 = vunpack.c.l.b16 %v1121
        %v1262 = vunpack.c.l.b16 %v1122
        %v1263 = vunpack.c.l.b16 %v1123
        %v1264 = vunpack.c.l.b16 %v1124
        %v1265 = vunpack.c.l.b16 %v1125
        %v1266 = vunpack.c.h.b16 %v1121
        %v1267 = vunpack.c.h.b16 %v1122
        %v1268 = vunpack.c.h.b16 %v1123
        %v1269 = vunpack.c.h.b16 %v1124
        %v1270 = vunpack.c.h.b16 %v1125
        %v1271 = vunpack.c.l.b16 %v1126
        %v1272 = vunpack.c.l.b16 %v1127
        %v1273 = vunpack.c.l.b16 %v1128
        %v1274 = vunpack.c.l.b16 %v1129
        %v1275 = vunpack.c.l.b16 %v1130
        %v1276 = vpack.c.b16 %v1182, %v1181
        %v1277 = vpack.c.b16 %v1184, %v1183
        %v1278 = vpack.c.b16 %v1185, %v1185
        %v1279 = vpack.c.b16 %v1187, %v1186
        %v1280 = vpack.c.b16 %v1189, %v1188
        %v1281 = vpack.c.b16 %v1190, %v1190
        %v1282 = vpack.c.b16 %v1192, %v1191
        %v1283 = vpack.c.b16 %v1194, %v1193
        %v1284 = vpack.c.b16 %v1195, %v1195
        %v1285 = vpack.c.b16 %v1197, %v1196
        %v1286 = vpack.c.b16 %v1199, %v1198
        %v1287 = vpack.c.b16 %v1200, %v1200
        %v1288 = vpack.c.b16 %v1202, %v1201
        %v1289 = vpack.c.b16 %v1204, %v1203
        %v1290 = vpack.c.b16 %v1205, %v1205
        %v1291 = vpack.c.b16 %v1207, %v1206
        %v1292 = vpack.c.b16 %v1209, %v1208
        %v1293 = vpack.c.b16 %v1210, %v1210
        %v1294 = vpack.c.b16 %v1212, %v1211
        %v1295 = vpack.c.b16 %v1214, %v1213
        %v1296 = vpack.c.b16 %v1215, %v1215
        %v1297 = vpack.c.b16 %v1217, %v1216
        %v1298 = vpack.c.b16 %v1219, %v1218
        %v1299 = vpack.c.b16 %v1220, %v1220
        %v1300 = vpack.c.b16 %v1222, %v1221
        %v1301 = vpack.c.b16 %v1224, %v1223
        %v1302 = vpack.c.b16 %v1225, %v1225
        %v1303 = vpack.c.b16 %v1227, %v1226
        %v1304 = vpack.c.b16 %v1229, %v1228
        %v1305 = vpack.c.b16 %v1230, %v1230
        %v1306 = vpack.c.b16 %v1232, %v1231
        %v1307 = vpack.c.b16 %v1234, %v1233
        %v1308 = vpack.c.b16 %v1235, %v1235
        %v1309 = vpack.c.b16 %v1237, %v1236
        %v1310 = vpack.c.b16 %v1239, %v1238
        %v1311 = vpack.c.b16 %v1240, %v1240
        %v1312 = vpack.c.b16 %v1242, %v1241
        %v1313 = vpack.c.b16 %v1244, %v1243
        %v1314 = vpack.c.b16 %v1245, %v1245
        %v1315 = vpack.c.b16 %v1247, %v1246
        %v1316 = vpack.c.b16 %v1249, %v1248
        %v1317 = vpack.c.b16 %v1250, %v1250
        %v1318 = vpack.c.b16 %v1252, %v1251
        %v1319 = vpack.c.b16 %v1254, %v1253
        %v1320 = vpack.c.b16 %v1255, %v1255
        %v1321 = vpack.c.b16 %v1257, %v1256
        %v1322 = vpack.c.b16 %v1259, %v1258
        %v1323 = vpack.c.b16 %v1260, %v1260
        %v1324 = vpack.c.b16 %v1262, %v1261
        %v1325 = vpack.c.b16 %v1264, %v1263
        %v1326 = vpack.c.b16 %v1265, %v1265
        %v1327 = vpack.c.b16 %v1267, %v1266
        %v1328 = vpack.c.b16 %v1269, %v1268
        %v1329 = vpack.c.b16 %v1270, %v1270
        %v1330 = vpack.c.b16 %v1272, %v1271
        %v1331 = vpack.c.b16 %v1274, %v1273
        %v1332 = vpack.c.b16 %v1275, %v1275
        %1390 = vst [vmem:[%s362] sm:$0xff] %v1276
        %1391 = vst [vmem:[%s362 + $0x8] sm:$0xff] %v1277
        %1392 = vst [vmem:[%s362 + $0x10] sm:$0xf] %v1278
        %1393 = vst [vmem:[%s362 + $0x14] sm:$0xff] %v1279
        %1394 = vst [vmem:[%s362 + $0x1c] sm:$0xff] %v1280
        %1395 = vst [vmem:[%s362 + $0x24] sm:$0xf] %v1281
        %1396 = vst [vmem:[%s362 + $0x28] sm:$0xff] %v1282
        %1397 = vst [vmem:[%s362 + $0x30] sm:$0xff] %v1283
        %1398 = vst [vmem:[%s362 + $0x38] sm:$0xf] %v1284
        %1399 = vst [vmem:[%s362 + $0x3c] sm:$0xff] %v1285
        %1400 = vst [vmem:[%s362 + $0x44] sm:$0xff] %v1286
        %1401 = vst [vmem:[%s362 + $0x4c] sm:$0xf] %v1287
        %1402 = vst [vmem:[%s362 + $0x50] sm:$0xff] %v1288
        %1403 = vst [vmem:[%s362 + $0x58] sm:$0xff] %v1289
        %1404 = vst [vmem:[%s362 + $0x60] sm:$0xf] %v1290
        %1405 = vst [vmem:[%s362 + $0x64] sm:$0xff] %v1291
        %1406 = vst [vmem:[%s362 + $0x6c] sm:$0xff] %v1292
        %1407 = vst [vmem:[%s362 + $0x74] sm:$0xf] %v1293
        %1408 = vst [vmem:[%s362 + $0x78] sm:$0xff] %v1294
        %1409 = vst [vmem:[%s362 + $0x80] sm:$0xff] %v1295
        %1410 = vst [vmem:[%s362 + $0x88] sm:$0xf] %v1296
        %1411 = vst [vmem:[%s362 + $0x8c] sm:$0xff] %v1297
        %1412 = vst [vmem:[%s362 + $0x94] sm:$0xff] %v1298
        %1413 = vst [vmem:[%s362 + $0x9c] sm:$0xf] %v1299
        %1414 = vst [vmem:[%s362 + $0xa0] sm:$0xff] %v1300
        %1415 = vst [vmem:[%s362 + $0xa8] sm:$0xff] %v1301
        %1416 = vst [vmem:[%s362 + $0xb0] sm:$0xf] %v1302
        %1417 = vst [vmem:[%s362 + $0xb4] sm:$0xff] %v1303
        %1418 = vst [vmem:[%s362 + $0xbc] sm:$0xff] %v1304
        %1419 = vst [vmem:[%s362 + $0xc4] sm:$0xf] %v1305
        %1420 = vst [vmem:[%s362 + $0xc8] sm:$0xff] %v1306
        %1421 = vst [vmem:[%s362 + $0xd0] sm:$0xff] %v1307
        %1422 = vst [vmem:[%s362 + $0xd8] sm:$0xf] %v1308
        %1423 = vst [vmem:[%s362 + $0xdc] sm:$0xff] %v1309
        %1424 = vst [vmem:[%s362 + $0xe4] sm:$0xff] %v1310
        %1425 = vst [vmem:[%s362 + $0xec] sm:$0xf] %v1311
        %1426 = vst [vmem:[%s362 + $0xf0] sm:$0xff] %v1312
        %1427 = vst [vmem:[%s362 + $0xf8] sm:$0xff] %v1313
        %1428 = vst [vmem:[%s362 + $0x100] sm:$0xf] %v1314
        %1429 = vst [vmem:[%s362 + $0x104] sm:$0xff] %v1315
        %1430 = vst [vmem:[%s362 + $0x10c] sm:$0xff] %v1316
        %1431 = vst [vmem:[%s362 + $0x114] sm:$0xf] %v1317
        %1432 = vst [vmem:[%s362 + $0x118] sm:$0xff] %v1318
        %1433 = vst [vmem:[%s362 + $0x120] sm:$0xff] %v1319
        %1434 = vst [vmem:[%s362 + $0x128] sm:$0xf] %v1320
        %1435 = vst [vmem:[%s362 + $0x12c] sm:$0xff] %v1321
        %1436 = vst [vmem:[%s362 + $0x134] sm:$0xff] %v1322
        %1437 = vst [vmem:[%s362 + $0x13c] sm:$0xf] %v1323
        %1438 = vst [vmem:[%s362 + $0x140] sm:$0xff] %v1324
        %1439 = vst [vmem:[%s362 + $0x148] sm:$0xff] %v1325
        %1440 = vst [vmem:[%s362 + $0x150] sm:$0xf] %v1326
        %1441 = vst [vmem:[%s362 + $0x154] sm:$0xff] %v1327
        %1442 = vst [vmem:[%s362 + $0x15c] sm:$0xff] %v1328
        %1443 = vst [vmem:[%s362 + $0x164] sm:$0xf] %v1329
        %1444 = vst [vmem:[%s362 + $0x168] sm:$0xff] %v1330
        %1445 = vst [vmem:[%s362 + $0x170] sm:$0xff] %v1331
        %1446 = vst [vmem:[%s362 + $0x178] sm:$0xf] %v1332
        %v1447 = vld [vmem:[#allocation2] sm:$0xff]
        %v1448 = vld [vmem:[#allocation2 + $0x8] sm:$0xff]
        %v1449 = vld [vmem:[#allocation2 + $0x10] sm:$0xff]
        %v1450 = vld [vmem:[#allocation2 + $0x18] sm:$0xff]
        %v1451 = vld [vmem:[#allocation2 + $0x20] sm:$0xff]
        %v1452 = vld [vmem:[#allocation2 + $0x28] sm:$0xff]
        %v1453 = vld [vmem:[#allocation2 + $0x30] sm:$0xff]
        %v1454 = vld [vmem:[#allocation2 + $0x38] sm:$0xff]
        %v1455 = vld [vmem:[#allocation2 + $0x40] sm:$0xff]
        %v1456 = vld [vmem:[#allocation2 + $0x48] sm:$0xff]
        %v1457 = vld [vmem:[#allocation2 + $0x50] sm:$0xff]
        %v1458 = vld [vmem:[#allocation2 + $0x58] sm:$0xff]
        %v1459 = vld [vmem:[#allocation2 + $0x60] sm:$0xff]
        %v1460 = vld [vmem:[#allocation2 + $0x68] sm:$0xff]
        %v1461 = vld [vmem:[#allocation2 + $0x70] sm:$0xff]
        %v1462 = vld [vmem:[#allocation2 + $0x78] sm:$0xff]
        %v1463 = vld [vmem:[#allocation2 + $0x80] sm:$0xff]
        %v1464 = vld [vmem:[#allocation2 + $0x88] sm:$0xff]
        %v1465 = vld [vmem:[#allocation2 + $0x90] sm:$0xff]
        %v1466 = vmax.f32 %v742, %v744
        %v1467 = vmax.f32 %v1466, %v873
        %v1468 = vmax.f32 %v1467, %v875
        %v1469 = vmax.f32 %v1468, %v1004
        %1470 = vmax.xlane.f32.xlu0 %v1469
        %v1471 = vpop.xlane.xlu0 %1470
        %v1472 = vmax.f32 %v746, %v748
        %v1473 = vmax.f32 %v1472, %v877
        %v1474 = vmax.f32 %v1473, %v879
        %v1475 = vmax.f32 %v1474, %v1007
        %1476 = vmax.xlane.f32.xlu0 %v1475
        %v1477 = vpop.xlane.xlu0 %1476
        %v1478 = vmax.f32 %v752, %v754
        %v1479 = vmax.f32 %v1478, %v883
        %v1480 = vmax.f32 %v1479, %v885
        %v1481 = vmax.f32 %v1480, %v1012
        %1482 = vmax.xlane.f32.xlu0 %v1481
        %v1483 = vpop.xlane.xlu0 %1482
        %v1484 = vmax.f32 %v756, %v758
        %v1485 = vmax.f32 %v1484, %v887
        %v1486 = vmax.f32 %v1485, %v889
        %v1487 = vmax.f32 %v1486, %v1015
        %1488 = vmax.xlane.f32.xlu0 %v1487
        %v1489 = vpop.xlane.xlu0 %1488
        %v1490 = vmax.f32 %v762, %v764
        %v1491 = vmax.f32 %v1490, %v893
        %v1492 = vmax.f32 %v1491, %v895
        %v1493 = vmax.f32 %v1492, %v1020
        %1494 = vmax.xlane.f32.xlu0 %v1493
        %v1495 = vpop.xlane.xlu0 %1494
        %v1496 = vmax.f32 %v766, %v768
        %v1497 = vmax.f32 %v1496, %v897
        %v1498 = vmax.f32 %v1497, %v899
        %v1499 = vmax.f32 %v1498, %v1023
        %1500 = vmax.xlane.f32.xlu0 %v1499
        %v1501 = vpop.xlane.xlu0 %1500
        %v1502 = vmax.f32 %v772, %v774
        %v1503 = vmax.f32 %v1502, %v903
        %v1504 = vmax.f32 %v1503, %v905
        %v1505 = vmax.f32 %v1504, %v1028
        %1506 = vmax.xlane.f32.xlu0 %v1505
        %v1507 = vpop.xlane.xlu0 %1506
        %v1508 = vmax.f32 %v776, %v778
        %v1509 = vmax.f32 %v1508, %v907
        %v1510 = vmax.f32 %v1509, %v909
        %v1511 = vmax.f32 %v1510, %v1031
        %1512 = vmax.xlane.f32.xlu0 %v1511
        %v1513 = vpop.xlane.xlu0 %1512
        %v1514 = vmax.f32 %v782, %v784
        %v1515 = vmax.f32 %v1514, %v913
        %v1516 = vmax.f32 %v1515, %v915
        %v1517 = vmax.f32 %v1516, %v1036
        %1518 = vmax.xlane.f32.xlu0 %v1517
        %v1519 = vpop.xlane.xlu0 %1518
        %v1520 = vmax.f32 %v786, %v788
        %v1521 = vmax.f32 %v1520, %v917
        %v1522 = vmax.f32 %v1521, %v919
        %v1523 = vmax.f32 %v1522, %v1039
        %1524 = vmax.xlane.f32.xlu0 %v1523
        %v1525 = vpop.xlane.xlu0 %1524
        %v1526 = vmax.f32 %v792, %v794
        %v1527 = vmax.f32 %v1526, %v923
        %v1528 = vmax.f32 %v1527, %v925
        %v1529 = vmax.f32 %v1528, %v1044
        %1530 = vmax.xlane.f32.xlu0 %v1529
        %v1531 = vpop.xlane.xlu0 %1530
        %v1532 = vmax.f32 %v796, %v798
        %v1533 = vmax.f32 %v1532, %v927
        %v1534 = vmax.f32 %v1533, %v929
        %v1535 = vmax.f32 %v1534, %v1047
        %1536 = vmax.xlane.f32.xlu0 %v1535
        %v1537 = vpop.xlane.xlu0 %1536
        %v1538 = vmax.f32 %v802, %v804
        %v1539 = vmax.f32 %v1538, %v933
        %v1540 = vmax.f32 %v1539, %v935
        %v1541 = vmax.f32 %v1540, %v1052
        %1542 = vmax.xlane.f32.xlu0 %v1541
        %v1543 = vpop.xlane.xlu0 %1542
        %v1544 = vmax.f32 %v806, %v808
        %v1545 = vmax.f32 %v1544, %v937
        %v1546 = vmax.f32 %v1545, %v939
        %v1547 = vmax.f32 %v1546, %v1055
        %1548 = vmax.xlane.f32.xlu0 %v1547
        %v1549 = vpop.xlane.xlu0 %1548
        %v1550 = vmax.f32 %v812, %v814
        %v1551 = vmax.f32 %v1550, %v943
        %v1552 = vmax.f32 %v1551, %v945
        %v1553 = vmax.f32 %v1552, %v1060
        %1554 = vmax.xlane.f32.xlu0 %v1553
        %v1555 = vpop.xlane.xlu0 %1554
        %v1556 = vmax.f32 %v816, %v818
        %v1557 = vmax.f32 %v1556, %v947
        %v1558 = vmax.f32 %v1557, %v949
        %v1559 = vmax.f32 %v1558, %v1063
        %1560 = vmax.xlane.f32.xlu0 %v1559
        %v1561 = vpop.xlane.xlu0 %1560
        %v1562 = vmax.f32 %v822, %v824
        %v1563 = vmax.f32 %v1562, %v953
        %v1564 = vmax.f32 %v1563, %v955
        %v1565 = vmax.f32 %v1564, %v1068
        %1566 = vmax.xlane.f32.xlu0 %v1565
        %v1567 = vpop.xlane.xlu0 %1566
        %v1568 = vmax.f32 %v826, %v828
        %v1569 = vmax.f32 %v1568, %v957
        %v1570 = vmax.f32 %v1569, %v959
        %v1571 = vmax.f32 %v1570, %v1071
        %1572 = vmax.xlane.f32.xlu0 %v1571
        %v1573 = vpop.xlane.xlu0 %1572
        %v1574 = vmax.f32 %v832, %v834
        %v1575 = vmax.f32 %v1574, %v963
        %v1576 = vmax.f32 %v1575, %v965
        %v1577 = vmax.f32 %v1576, %v1076
        %1578 = vmax.xlane.f32.xlu0 %v1577
        %v1579 = vpop.xlane.xlu0 %1578
        %v1580 = vmax.f32 %v1447, %v1471
        %v1581 = vmax.f32 %v1448, %v1477
        %v1582 = vmax.f32 %v1449, %v1483
        %v1583 = vmax.f32 %v1450, %v1489
        %v1584 = vmax.f32 %v1451, %v1495
        %v1585 = vmax.f32 %v1452, %v1501
        %v1586 = vmax.f32 %v1453, %v1507
        %v1587 = vmax.f32 %v1454, %v1513
        %v1588 = vmax.f32 %v1455, %v1519
        %v1589 = vmax.f32 %v1456, %v1525
        %v1590 = vmax.f32 %v1457, %v1531
        %v1591 = vmax.f32 %v1458, %v1537
        %v1592 = vmax.f32 %v1459, %v1543
        %v1593 = vmax.f32 %v1460, %v1549
        %v1594 = vmax.f32 %v1461, %v1555
        %v1595 = vmax.f32 %v1462, %v1561
        %v1596 = vmax.f32 %v1463, %v1567
        %v1597 = vmax.f32 %v1464, %v1573
        %v1598 = vmax.f32 %v1465, %v1579
        %v1599 = vsub.f32 %v1447, %v1580
        %v1600 = vsub.f32 %v1448, %v1581
        %v1601 = vsub.f32 %v1449, %v1582
        %v1602 = vsub.f32 %v1450, %v1583
        %v1603 = vsub.f32 %v1451, %v1584
        %v1604 = vsub.f32 %v1452, %v1585
        %v1605 = vsub.f32 %v1453, %v1586
        %v1606 = vsub.f32 %v1454, %v1587
        %v1607 = vsub.f32 %v1455, %v1588
        %v1608 = vsub.f32 %v1456, %v1589
        %v1609 = vsub.f32 %v1457, %v1590
        %v1610 = vsub.f32 %v1458, %v1591
        %v1611 = vsub.f32 %v1459, %v1592
        %v1612 = vsub.f32 %v1460, %v1593
        %v1613 = vsub.f32 %v1461, %v1594
        %v1614 = vsub.f32 %v1462, %v1595
        %v1615 = vsub.f32 %v1463, %v1596
        %v1616 = vsub.f32 %v1464, %v1597
        %v1617 = vsub.f32 %v1465, %v1598
        %v1618 = vmul.f32 %v1599, 1.442695
        %v1619 = vpow.pop %v1618
        %v1620 = vmul.f32 %v1600, 1.442695
        %v1621 = vpow.pop %v1620
        %v1622 = vmul.f32 %v1601, 1.442695
        %v1623 = vpow.pop %v1622
        %v1624 = vmul.f32 %v1602, 1.442695
        %v1625 = vpow.pop %v1624
        %v1626 = vmul.f32 %v1603, 1.442695
        %v1627 = vpow.pop %v1626
        %v1628 = vmul.f32 %v1604, 1.442695
        %v1629 = vpow.pop %v1628
        %v1630 = vmul.f32 %v1605, 1.442695
        %v1631 = vpow.pop %v1630
        %v1632 = vmul.f32 %v1606, 1.442695
        %v1633 = vpow.pop %v1632
        %v1634 = vmul.f32 %v1607, 1.442695
        %v1635 = vpow.pop %v1634
        %v1636 = vmul.f32 %v1608, 1.442695
        %v1637 = vpow.pop %v1636
        %v1638 = vmul.f32 %v1609, 1.442695
        %v1639 = vpow.pop %v1638
        %v1640 = vmul.f32 %v1610, 1.442695
        %v1641 = vpow.pop %v1640
        %v1642 = vmul.f32 %v1611, 1.442695
        %v1643 = vpow.pop %v1642
        %v1644 = vmul.f32 %v1612, 1.442695
        %v1645 = vpow.pop %v1644
        %v1646 = vmul.f32 %v1613, 1.442695
        %v1647 = vpow.pop %v1646
        %v1648 = vmul.f32 %v1614, 1.442695
        %v1649 = vpow.pop %v1648
        %v1650 = vmul.f32 %v1615, 1.442695
        %v1651 = vpow.pop %v1650
        %v1652 = vmul.f32 %v1616, 1.442695
        %v1653 = vpow.pop %v1652
        %v1654 = vmul.f32 %v1617, 1.442695
        %v1655 = vpow.pop %v1654
        %1657 = vset.pattern.permute.xlu0 0
        %1658 = vperm.xlu0 %1657, %v1580
        %v1659 = vpop.permute.xlu0 %1658
        %1662 = vset.pattern.permute.xlu0 0
        %1663 = vperm.xlu0 %1662, %v1581
        %v1664 = vpop.permute.xlu0 %1663
        %1667 = vset.pattern.permute.xlu0 0
        %1668 = vperm.xlu0 %1667, %v1582
        %v1669 = vpop.permute.xlu0 %1668
        %1672 = vset.pattern.permute.xlu0 0
        %1673 = vperm.xlu0 %1672, %v1583
        %v1674 = vpop.permute.xlu0 %1673
        %1677 = vset.pattern.permute.xlu0 0
        %1678 = vperm.xlu0 %1677, %v1584
        %v1679 = vpop.permute.xlu0 %1678
        %1682 = vset.pattern.permute.xlu0 0
        %1683 = vperm.xlu0 %1682, %v1585
        %v1684 = vpop.permute.xlu0 %1683
        %1687 = vset.pattern.permute.xlu0 0
        %1688 = vperm.xlu0 %1687, %v1586
        %v1689 = vpop.permute.xlu0 %1688
        %1692 = vset.pattern.permute.xlu0 0
        %1693 = vperm.xlu0 %1692, %v1587
        %v1694 = vpop.permute.xlu0 %1693
        %1697 = vset.pattern.permute.xlu0 0
        %1698 = vperm.xlu0 %1697, %v1588
        %v1699 = vpop.permute.xlu0 %1698
        %1702 = vset.pattern.permute.xlu0 0
        %1703 = vperm.xlu0 %1702, %v1589
        %v1704 = vpop.permute.xlu0 %1703
        %1707 = vset.pattern.permute.xlu0 0
        %1708 = vperm.xlu0 %1707, %v1590
        %v1709 = vpop.permute.xlu0 %1708
        %1712 = vset.pattern.permute.xlu0 0
        %1713 = vperm.xlu0 %1712, %v1591
        %v1714 = vpop.permute.xlu0 %1713
        %1717 = vset.pattern.permute.xlu0 0
        %1718 = vperm.xlu0 %1717, %v1592
        %v1719 = vpop.permute.xlu0 %1718
        %1722 = vset.pattern.permute.xlu0 0
        %1723 = vperm.xlu0 %1722, %v1593
        %v1724 = vpop.permute.xlu0 %1723
        %1727 = vset.pattern.permute.xlu0 0
        %1728 = vperm.xlu0 %1727, %v1594
        %v1729 = vpop.permute.xlu0 %1728
        %1732 = vset.pattern.permute.xlu0 0
        %1733 = vperm.xlu0 %1732, %v1595
        %v1734 = vpop.permute.xlu0 %1733
        %1737 = vset.pattern.permute.xlu0 0
        %1738 = vperm.xlu0 %1737, %v1596
        %v1739 = vpop.permute.xlu0 %1738
        %1742 = vset.pattern.permute.xlu0 0
        %1743 = vperm.xlu0 %1742, %v1597
        %v1744 = vpop.permute.xlu0 %1743
        %1747 = vset.pattern.permute.xlu0 0
        %1748 = vperm.xlu0 %1747, %v1598
        %v1749 = vpop.permute.xlu0 %1748
        %v1751 = vsub.f32 %v742, %v1659
        %v1752 = vsub.f32 %v744, %v1659
        %v1753 = vsub.f32 %v873, %v1659
        %v1754 = vsub.f32 %v875, %v1659
        %v1755 = vsub.f32 %v1004, %v1659
        %v1756 = vsub.f32 %v746, %v1664
        %v1757 = vsub.f32 %v748, %v1664
        %v1758 = vsub.f32 %v877, %v1664
        %v1759 = vsub.f32 %v879, %v1664
        %v1760 = vsub.f32 %v1007, %v1664
        %v1761 = vsub.f32 %v752, %v1669
        %v1762 = vsub.f32 %v754, %v1669
        %v1763 = vsub.f32 %v883, %v1669
        %v1764 = vsub.f32 %v885, %v1669
        %v1765 = vsub.f32 %v1012, %v1669
        %v1766 = vsub.f32 %v756, %v1674
        %v1767 = vsub.f32 %v758, %v1674
        %v1768 = vsub.f32 %v887, %v1674
        %v1769 = vsub.f32 %v889, %v1674
        %v1770 = vsub.f32 %v1015, %v1674
        %v1771 = vsub.f32 %v762, %v1679
        %v1772 = vsub.f32 %v764, %v1679
        %v1773 = vsub.f32 %v893, %v1679
        %v1774 = vsub.f32 %v895, %v1679
        %v1775 = vsub.f32 %v1020, %v1679
        %v1776 = vsub.f32 %v766, %v1684
        %v1777 = vsub.f32 %v768, %v1684
        %v1778 = vsub.f32 %v897, %v1684
        %v1779 = vsub.f32 %v899, %v1684
        %v1780 = vsub.f32 %v1023, %v1684
        %v1781 = vsub.f32 %v772, %v1689
        %v1782 = vsub.f32 %v774, %v1689
        %v1783 = vsub.f32 %v903, %v1689
        %v1784 = vsub.f32 %v905, %v1689
        %v1785 = vsub.f32 %v1028, %v1689
        %v1786 = vsub.f32 %v776, %v1694
        %v1787 = vsub.f32 %v778, %v1694
        %v1788 = vsub.f32 %v907, %v1694
        %v1789 = vsub.f32 %v909, %v1694
        %v1790 = vsub.f32 %v1031, %v1694
        %v1791 = vsub.f32 %v782, %v1699
        %v1792 = vsub.f32 %v784, %v1699
        %v1793 = vsub.f32 %v913, %v1699
        %v1794 = vsub.f32 %v915, %v1699
        %v1795 = vsub.f32 %v1036, %v1699
        %v1796 = vsub.f32 %v786, %v1704
        %v1797 = vsub.f32 %v788, %v1704
        %v1798 = vsub.f32 %v917, %v1704
        %v1799 = vsub.f32 %v919, %v1704
        %v1800 = vsub.f32 %v1039, %v1704
        %v1801 = vsub.f32 %v792, %v1709
        %v1802 = vsub.f32 %v794, %v1709
        %v1803 = vsub.f32 %v923, %v1709
        %v1804 = vsub.f32 %v925, %v1709
        %v1805 = vsub.f32 %v1044, %v1709
        %v1806 = vsub.f32 %v796, %v1714
        %v1807 = vsub.f32 %v798, %v1714
        %v1808 = vsub.f32 %v927, %v1714
        %v1809 = vsub.f32 %v929, %v1714
        %v1810 = vsub.f32 %v1047, %v1714
        %v1811 = vsub.f32 %v802, %v1719
        %v1812 = vsub.f32 %v804, %v1719
        %v1813 = vsub.f32 %v933, %v1719
        %v1814 = vsub.f32 %v935, %v1719
        %v1815 = vsub.f32 %v1052, %v1719
        %v1816 = vsub.f32 %v806, %v1724
        %v1817 = vsub.f32 %v808, %v1724
        %v1818 = vsub.f32 %v937, %v1724
        %v1819 = vsub.f32 %v939, %v1724
        %v1820 = vsub.f32 %v1055, %v1724
        %v1821 = vsub.f32 %v812, %v1729
        %v1822 = vsub.f32 %v814, %v1729
        %v1823 = vsub.f32 %v943, %v1729
        %v1824 = vsub.f32 %v945, %v1729
        %v1825 = vsub.f32 %v1060, %v1729
        %v1826 = vsub.f32 %v816, %v1734
        %v1827 = vsub.f32 %v818, %v1734
        %v1828 = vsub.f32 %v947, %v1734
        %v1829 = vsub.f32 %v949, %v1734
        %v1830 = vsub.f32 %v1063, %v1734
        %v1831 = vsub.f32 %v822, %v1739
        %v1832 = vsub.f32 %v824, %v1739
        %v1833 = vsub.f32 %v953, %v1739
        %v1834 = vsub.f32 %v955, %v1739
        %v1835 = vsub.f32 %v1068, %v1739
        %v1836 = vsub.f32 %v826, %v1744
        %v1837 = vsub.f32 %v828, %v1744
        %v1838 = vsub.f32 %v957, %v1744
        %v1839 = vsub.f32 %v959, %v1744
        %v1840 = vsub.f32 %v1071, %v1744
        %v1841 = vsub.f32 %v832, %v1749
        %v1842 = vsub.f32 %v834, %v1749
        %v1843 = vsub.f32 %v963, %v1749
        %v1844 = vsub.f32 %v965, %v1749
        %v1845 = vsub.f32 %v1076, %v1749
        %v1846 = vmul.f32 %v1751, 1.442695
        %v1847 = vpow.pop %v1846
        %v1848 = vmul.f32 %v1752, 1.442695
        %v1849 = vpow.pop %v1848
        %v1850 = vmul.f32 %v1753, 1.442695
        %v1851 = vpow.pop %v1850
        %v1852 = vmul.f32 %v1754, 1.442695
        %v1853 = vpow.pop %v1852
        %v1854 = vmul.f32 %v1755, 1.442695
        %v1855 = vpow.pop %v1854
        %v1856 = vmul.f32 %v1756, 1.442695
        %v1857 = vpow.pop %v1856
        %v1858 = vmul.f32 %v1757, 1.442695
        %v1859 = vpow.pop %v1858
        %v1860 = vmul.f32 %v1758, 1.442695
        %v1861 = vpow.pop %v1860
        %v1862 = vmul.f32 %v1759, 1.442695
        %v1863 = vpow.pop %v1862
        %v1864 = vmul.f32 %v1760, 1.442695
        %v1865 = vpow.pop %v1864
        %v1866 = vmul.f32 %v1761, 1.442695
        %v1867 = vpow.pop %v1866
        %v1868 = vmul.f32 %v1762, 1.442695
        %v1869 = vpow.pop %v1868
        %v1870 = vmul.f32 %v1763, 1.442695
        %v1871 = vpow.pop %v1870
        %v1872 = vmul.f32 %v1764, 1.442695
        %v1873 = vpow.pop %v1872
        %v1874 = vmul.f32 %v1765, 1.442695
        %v1875 = vpow.pop %v1874
        %v1876 = vmul.f32 %v1766, 1.442695
        %v1877 = vpow.pop %v1876
        %v1878 = vmul.f32 %v1767, 1.442695
        %v1879 = vpow.pop %v1878
        %v1880 = vmul.f32 %v1768, 1.442695
        %v1881 = vpow.pop %v1880
        %v1882 = vmul.f32 %v1769, 1.442695
        %v1883 = vpow.pop %v1882
        %v1884 = vmul.f32 %v1770, 1.442695
        %v1885 = vpow.pop %v1884
        %v1886 = vmul.f32 %v1771, 1.442695
        %v1887 = vpow.pop %v1886
        %v1888 = vmul.f32 %v1772, 1.442695
        %v1889 = vpow.pop %v1888
        %v1890 = vmul.f32 %v1773, 1.442695
        %v1891 = vpow.pop %v1890
        %v1892 = vmul.f32 %v1774, 1.442695
        %v1893 = vpow.pop %v1892
        %v1894 = vmul.f32 %v1775, 1.442695
        %v1895 = vpow.pop %v1894
        %v1896 = vmul.f32 %v1776, 1.442695
        %v1897 = vpow.pop %v1896
        %v1898 = vmul.f32 %v1777, 1.442695
        %v1899 = vpow.pop %v1898
        %v1900 = vmul.f32 %v1778, 1.442695
        %v1901 = vpow.pop %v1900
        %v1902 = vmul.f32 %v1779, 1.442695
        %v1903 = vpow.pop %v1902
        %v1904 = vmul.f32 %v1780, 1.442695
        %v1905 = vpow.pop %v1904
        %v1906 = vmul.f32 %v1781, 1.442695
        %v1907 = vpow.pop %v1906
        %v1908 = vmul.f32 %v1782, 1.442695
        %v1909 = vpow.pop %v1908
        %v1910 = vmul.f32 %v1783, 1.442695
        %v1911 = vpow.pop %v1910
        %v1912 = vmul.f32 %v1784, 1.442695
        %v1913 = vpow.pop %v1912
        %v1914 = vmul.f32 %v1785, 1.442695
        %v1915 = vpow.pop %v1914
        %v1916 = vmul.f32 %v1786, 1.442695
        %v1917 = vpow.pop %v1916
        %v1918 = vmul.f32 %v1787, 1.442695
        %v1919 = vpow.pop %v1918
        %v1920 = vmul.f32 %v1788, 1.442695
        %v1921 = vpow.pop %v1920
        %v1922 = vmul.f32 %v1789, 1.442695
        %v1923 = vpow.pop %v1922
        %v1924 = vmul.f32 %v1790, 1.442695
        %v1925 = vpow.pop %v1924
        %v1926 = vmul.f32 %v1791, 1.442695
        %v1927 = vpow.pop %v1926
        %v1928 = vmul.f32 %v1792, 1.442695
        %v1929 = vpow.pop %v1928
        %v1930 = vmul.f32 %v1793, 1.442695
        %v1931 = vpow.pop %v1930
        %v1932 = vmul.f32 %v1794, 1.442695
        %v1933 = vpow.pop %v1932
        %v1934 = vmul.f32 %v1795, 1.442695
        %v1935 = vpow.pop %v1934
        %v1936 = vmul.f32 %v1796, 1.442695
        %v1937 = vpow.pop %v1936
        %v1938 = vmul.f32 %v1797, 1.442695
        %v1939 = vpow.pop %v1938
        %v1940 = vmul.f32 %v1798, 1.442695
        %v1941 = vpow.pop %v1940
        %v1942 = vmul.f32 %v1799, 1.442695
        %v1943 = vpow.pop %v1942
        %v1944 = vmul.f32 %v1800, 1.442695
        %v1945 = vpow.pop %v1944
        %v1946 = vmul.f32 %v1801, 1.442695
        %v1947 = vpow.pop %v1946
        %v1948 = vmul.f32 %v1802, 1.442695
        %v1949 = vpow.pop %v1948
        %v1950 = vmul.f32 %v1803, 1.442695
        %v1951 = vpow.pop %v1950
        %v1952 = vmul.f32 %v1804, 1.442695
        %v1953 = vpow.pop %v1952
        %v1954 = vmul.f32 %v1805, 1.442695
        %v1955 = vpow.pop %v1954
        %v1956 = vmul.f32 %v1806, 1.442695
        %v1957 = vpow.pop %v1956
        %v1958 = vmul.f32 %v1807, 1.442695
        %v1959 = vpow.pop %v1958
        %v1960 = vmul.f32 %v1808, 1.442695
        %v1961 = vpow.pop %v1960
        %v1962 = vmul.f32 %v1809, 1.442695
        %v1963 = vpow.pop %v1962
        %v1964 = vmul.f32 %v1810, 1.442695
        %v1965 = vpow.pop %v1964
        %v1966 = vmul.f32 %v1811, 1.442695
        %v1967 = vpow.pop %v1966
        %v1968 = vmul.f32 %v1812, 1.442695
        %v1969 = vpow.pop %v1968
        %v1970 = vmul.f32 %v1813, 1.442695
        %v1971 = vpow.pop %v1970
        %v1972 = vmul.f32 %v1814, 1.442695
        %v1973 = vpow.pop %v1972
        %v1974 = vmul.f32 %v1815, 1.442695
        %v1975 = vpow.pop %v1974
        %v1976 = vmul.f32 %v1816, 1.442695
        %v1977 = vpow.pop %v1976
        %v1978 = vmul.f32 %v1817, 1.442695
        %v1979 = vpow.pop %v1978
        %v1980 = vmul.f32 %v1818, 1.442695
        %v1981 = vpow.pop %v1980
        %v1982 = vmul.f32 %v1819, 1.442695
        %v1983 = vpow.pop %v1982
        %v1984 = vmul.f32 %v1820, 1.442695
        %v1985 = vpow.pop %v1984
        %v1986 = vmul.f32 %v1821, 1.442695
        %v1987 = vpow.pop %v1986
        %v1988 = vmul.f32 %v1822, 1.442695
        %v1989 = vpow.pop %v1988
        %v1990 = vmul.f32 %v1823, 1.442695
        %v1991 = vpow.pop %v1990
        %v1992 = vmul.f32 %v1824, 1.442695
        %v1993 = vpow.pop %v1992
        %v1994 = vmul.f32 %v1825, 1.442695
        %v1995 = vpow.pop %v1994
        %v1996 = vmul.f32 %v1826, 1.442695
        %v1997 = vpow.pop %v1996
        %v1998 = vmul.f32 %v1827, 1.442695
        %v1999 = vpow.pop %v1998
        %v2000 = vmul.f32 %v1828, 1.442695
        %v2001 = vpow.pop %v2000
        %v2002 = vmul.f32 %v1829, 1.442695
        %v2003 = vpow.pop %v2002
        %v2004 = vmul.f32 %v1830, 1.442695
        %v2005 = vpow.pop %v2004
        %v2006 = vmul.f32 %v1831, 1.442695
        %v2007 = vpow.pop %v2006
        %v2008 = vmul.f32 %v1832, 1.442695
        %v2009 = vpow.pop %v2008
        %v2010 = vmul.f32 %v1833, 1.442695
        %v2011 = vpow.pop %v2010
        %v2012 = vmul.f32 %v1834, 1.442695
        %v2013 = vpow.pop %v2012
        %v2014 = vmul.f32 %v1835, 1.442695
        %v2015 = vpow.pop %v2014
        %v2016 = vmul.f32 %v1836, 1.442695
        %v2017 = vpow.pop %v2016
        %v2018 = vmul.f32 %v1837, 1.442695
        %v2019 = vpow.pop %v2018
        %v2020 = vmul.f32 %v1838, 1.442695
        %v2021 = vpow.pop %v2020
        %v2022 = vmul.f32 %v1839, 1.442695
        %v2023 = vpow.pop %v2022
        %v2024 = vmul.f32 %v1840, 1.442695
        %v2025 = vpow.pop %v2024
        %v2026 = vmul.f32 %v1841, 1.442695
        %v2027 = vpow.pop %v2026
        %v2028 = vmul.f32 %v1842, 1.442695
        %v2029 = vpow.pop %v2028
        %v2030 = vmul.f32 %v1843, 1.442695
        %v2031 = vpow.pop %v2030
        %v2032 = vmul.f32 %v1844, 1.442695
        %v2033 = vpow.pop %v2032
        %v2034 = vmul.f32 %v1845, 1.442695
        %v2035 = vpow.pop %v2034
        %v2036 = vlaneseq
        %v2037 = vand.u32 %v2036, 127
        %v2038 = vadd.s32 %v2037, 128
        %v2039 = vadd.s32 %v2037, 256
        %v2040 = vadd.s32 %v2037, 384
        %v2041 = vadd.s32 %v2037, 512
        %s2042 = smul.u32 %s28, 640
        %v2043 = vstv %s2042
        %v2044 = vadd.s32 %v2037, %v2043
        %v2045 = vadd.s32 %v2038, %v2043
        %v2046 = vadd.s32 %v2039, %v2043
        %v2047 = vadd.s32 %v2040, %v2043
        %v2048 = vadd.s32 %v2041, %v2043
        %v2049 = vld [vmem:[%s386] sm:$0xff]
        %v2050 = vld [vmem:[%s386 + $0x8] sm:$0xff]
        %v2051 = vld [vmem:[%s386 + $0x10] sm:$0xff]
        %v2052 = vld [vmem:[%s386 + $0x18] sm:$0xff]
        %v2053 = vld [vmem:[%s386 + $0x20] sm:$0xff]
        %v2054 = vld [vmem:[%s386 + $0x28] sm:$0xff]
        %v2055 = vld [vmem:[%s386 + $0x30] sm:$0xff]
        %v2056 = vld [vmem:[%s386 + $0x38] sm:$0xff]
        %v2057 = vld [vmem:[%s386 + $0x40] sm:$0xff]
        %v2058 = vld [vmem:[%s386 + $0x48] sm:$0xff]
        %v2059 = vld [vmem:[%s386 + $0x50] sm:$0xff]
        %v2060 = vld [vmem:[%s386 + $0x58] sm:$0xff]
        %v2061 = vld [vmem:[%s386 + $0x60] sm:$0xff]
        %v2062 = vld [vmem:[%s386 + $0x68] sm:$0xff]
        %v2063 = vld [vmem:[%s386 + $0x70] sm:$0xff]
        %v2064 = vld [vmem:[%s386 + $0x78] sm:$0xff]
        %v2065 = vld [vmem:[%s386 + $0x80] sm:$0xff]
        %v2066 = vld [vmem:[%s386 + $0x88] sm:$0xff]
        %v2067 = vld [vmem:[%s386 + $0x90] sm:$0xff]
        %2068 = vset.pattern.permute.xlu0 0
        %2069 = vperm.xlu0 %2068, %v2049
        %v2070 = vpop.permute.xlu0 %2069
        %2071 = vset.pattern.permute.xlu0 0
        %2072 = vperm.xlu0 %2071, %v2050
        %v2073 = vpop.permute.xlu0 %2072
        %2074 = vset.pattern.permute.xlu0 0
        %2075 = vperm.xlu0 %2074, %v2051
        %v2076 = vpop.permute.xlu0 %2075
        %2077 = vset.pattern.permute.xlu0 0
        %2078 = vperm.xlu0 %2077, %v2052
        %v2079 = vpop.permute.xlu0 %2078
        %2080 = vset.pattern.permute.xlu0 0
        %2081 = vperm.xlu0 %2080, %v2053
        %v2082 = vpop.permute.xlu0 %2081
        %2083 = vset.pattern.permute.xlu0 0
        %2084 = vperm.xlu0 %2083, %v2054
        %v2085 = vpop.permute.xlu0 %2084
        %2086 = vset.pattern.permute.xlu0 0
        %2087 = vperm.xlu0 %2086, %v2055
        %v2088 = vpop.permute.xlu0 %2087
        %2089 = vset.pattern.permute.xlu0 0
        %2090 = vperm.xlu0 %2089, %v2056
        %v2091 = vpop.permute.xlu0 %2090
        %2092 = vset.pattern.permute.xlu0 0
        %2093 = vperm.xlu0 %2092, %v2057
        %v2094 = vpop.permute.xlu0 %2093
        %2095 = vset.pattern.permute.xlu0 0
        %2096 = vperm.xlu0 %2095, %v2058
        %v2097 = vpop.permute.xlu0 %2096
        %2098 = vset.pattern.permute.xlu0 0
        %2099 = vperm.xlu0 %2098, %v2059
        %v2100 = vpop.permute.xlu0 %2099
        %2101 = vset.pattern.permute.xlu0 0
        %2102 = vperm.xlu0 %2101, %v2060
        %v2103 = vpop.permute.xlu0 %2102
        %2104 = vset.pattern.permute.xlu0 0
        %2105 = vperm.xlu0 %2104, %v2061
        %v2106 = vpop.permute.xlu0 %2105
        %2107 = vset.pattern.permute.xlu0 0
        %2108 = vperm.xlu0 %2107, %v2062
        %v2109 = vpop.permute.xlu0 %2108
        %2110 = vset.pattern.permute.xlu0 0
        %2111 = vperm.xlu0 %2110, %v2063
        %v2112 = vpop.permute.xlu0 %2111
        %2113 = vset.pattern.permute.xlu0 0
        %2114 = vperm.xlu0 %2113, %v2064
        %v2115 = vpop.permute.xlu0 %2114
        %2116 = vset.pattern.permute.xlu0 0
        %2117 = vperm.xlu0 %2116, %v2065
        %v2118 = vpop.permute.xlu0 %2117
        %2119 = vset.pattern.permute.xlu0 0
        %2120 = vperm.xlu0 %2119, %v2066
        %v2121 = vpop.permute.xlu0 %2120
        %2122 = vset.pattern.permute.xlu0 0
        %2123 = vperm.xlu0 %2122, %v2067
        %v2124 = vpop.permute.xlu0 %2123
        %vm2125 = vcmp.eq.s32.totalorder %v2044, %v2070
        %vm2126 = vcmp.eq.s32.totalorder %v2045, %v2070
        %vm2127 = vcmp.eq.s32.totalorder %v2046, %v2070
        %vm2128 = vcmp.eq.s32.totalorder %v2047, %v2070
        %vm2129 = vcmp.eq.s32.totalorder %v2048, %v2070
        %vm2130 = vcmp.eq.s32.totalorder %v2044, %v2073
        %vm2131 = vcmp.eq.s32.totalorder %v2045, %v2073
        %vm2132 = vcmp.eq.s32.totalorder %v2046, %v2073
        %vm2133 = vcmp.eq.s32.totalorder %v2047, %v2073
        %vm2134 = vcmp.eq.s32.totalorder %v2048, %v2073
        %vm2135 = vcmp.eq.s32.totalorder %v2044, %v2076
        %vm2136 = vcmp.eq.s32.totalorder %v2045, %v2076
        %vm2137 = vcmp.eq.s32.totalorder %v2046, %v2076
        %vm2138 = vcmp.eq.s32.totalorder %v2047, %v2076
        %vm2139 = vcmp.eq.s32.totalorder %v2048, %v2076
        %vm2140 = vcmp.eq.s32.totalorder %v2044, %v2079
        %vm2141 = vcmp.eq.s32.totalorder %v2045, %v2079
        %vm2142 = vcmp.eq.s32.totalorder %v2046, %v2079
        %vm2143 = vcmp.eq.s32.totalorder %v2047, %v2079
        %vm2144 = vcmp.eq.s32.totalorder %v2048, %v2079
        %vm2145 = vcmp.eq.s32.totalorder %v2044, %v2082
        %vm2146 = vcmp.eq.s32.totalorder %v2045, %v2082
        %vm2147 = vcmp.eq.s32.totalorder %v2046, %v2082
        %vm2148 = vcmp.eq.s32.totalorder %v2047, %v2082
        %vm2149 = vcmp.eq.s32.totalorder %v2048, %v2082
        %vm2150 = vcmp.eq.s32.totalorder %v2044, %v2085
        %vm2151 = vcmp.eq.s32.totalorder %v2045, %v2085
        %vm2152 = vcmp.eq.s32.totalorder %v2046, %v2085
        %vm2153 = vcmp.eq.s32.totalorder %v2047, %v2085
        %vm2154 = vcmp.eq.s32.totalorder %v2048, %v2085
        %vm2155 = vcmp.eq.s32.totalorder %v2044, %v2088
        %vm2156 = vcmp.eq.s32.totalorder %v2045, %v2088
        %vm2157 = vcmp.eq.s32.totalorder %v2046, %v2088
        %vm2158 = vcmp.eq.s32.totalorder %v2047, %v2088
        %vm2159 = vcmp.eq.s32.totalorder %v2048, %v2088
        %vm2160 = vcmp.eq.s32.totalorder %v2044, %v2091
        %vm2161 = vcmp.eq.s32.totalorder %v2045, %v2091
        %vm2162 = vcmp.eq.s32.totalorder %v2046, %v2091
        %vm2163 = vcmp.eq.s32.totalorder %v2047, %v2091
        %vm2164 = vcmp.eq.s32.totalorder %v2048, %v2091
        %vm2165 = vcmp.eq.s32.totalorder %v2044, %v2094
        %vm2166 = vcmp.eq.s32.totalorder %v2045, %v2094
        %vm2167 = vcmp.eq.s32.totalorder %v2046, %v2094
        %vm2168 = vcmp.eq.s32.totalorder %v2047, %v2094
        %vm2169 = vcmp.eq.s32.totalorder %v2048, %v2094
        %vm2170 = vcmp.eq.s32.totalorder %v2044, %v2097
        %vm2171 = vcmp.eq.s32.totalorder %v2045, %v2097
        %vm2172 = vcmp.eq.s32.totalorder %v2046, %v2097
        %vm2173 = vcmp.eq.s32.totalorder %v2047, %v2097
        %vm2174 = vcmp.eq.s32.totalorder %v2048, %v2097
        %vm2175 = vcmp.eq.s32.totalorder %v2044, %v2100
        %vm2176 = vcmp.eq.s32.totalorder %v2045, %v2100
        %vm2177 = vcmp.eq.s32.totalorder %v2046, %v2100
        %vm2178 = vcmp.eq.s32.totalorder %v2047, %v2100
        %vm2179 = vcmp.eq.s32.totalorder %v2048, %v2100
        %vm2180 = vcmp.eq.s32.totalorder %v2044, %v2103
        %vm2181 = vcmp.eq.s32.totalorder %v2045, %v2103
        %vm2182 = vcmp.eq.s32.totalorder %v2046, %v2103
        %vm2183 = vcmp.eq.s32.totalorder %v2047, %v2103
        %vm2184 = vcmp.eq.s32.totalorder %v2048, %v2103
        %vm2185 = vcmp.eq.s32.totalorder %v2044, %v2106
        %vm2186 = vcmp.eq.s32.totalorder %v2045, %v2106
        %vm2187 = vcmp.eq.s32.totalorder %v2046, %v2106
        %vm2188 = vcmp.eq.s32.totalorder %v2047, %v2106
        %vm2189 = vcmp.eq.s32.totalorder %v2048, %v2106
        %vm2190 = vcmp.eq.s32.totalorder %v2044, %v2109
        %vm2191 = vcmp.eq.s32.totalorder %v2045, %v2109
        %vm2192 = vcmp.eq.s32.totalorder %v2046, %v2109
        %vm2193 = vcmp.eq.s32.totalorder %v2047, %v2109
        %vm2194 = vcmp.eq.s32.totalorder %v2048, %v2109
        %vm2195 = vcmp.eq.s32.totalorder %v2044, %v2112
        %vm2196 = vcmp.eq.s32.totalorder %v2045, %v2112
        %vm2197 = vcmp.eq.s32.totalorder %v2046, %v2112
        %vm2198 = vcmp.eq.s32.totalorder %v2047, %v2112
        %vm2199 = vcmp.eq.s32.totalorder %v2048, %v2112
        %vm2200 = vcmp.eq.s32.totalorder %v2044, %v2115
        %vm2201 = vcmp.eq.s32.totalorder %v2045, %v2115
        %vm2202 = vcmp.eq.s32.totalorder %v2046, %v2115
        %vm2203 = vcmp.eq.s32.totalorder %v2047, %v2115
        %vm2204 = vcmp.eq.s32.totalorder %v2048, %v2115
        %vm2205 = vcmp.eq.s32.totalorder %v2044, %v2118
        %vm2206 = vcmp.eq.s32.totalorder %v2045, %v2118
        %vm2207 = vcmp.eq.s32.totalorder %v2046, %v2118
        %vm2208 = vcmp.eq.s32.totalorder %v2047, %v2118
        %vm2209 = vcmp.eq.s32.totalorder %v2048, %v2118
        %vm2210 = vcmp.eq.s32.totalorder %v2044, %v2121
        %vm2211 = vcmp.eq.s32.totalorder %v2045, %v2121
        %vm2212 = vcmp.eq.s32.totalorder %v2046, %v2121
        %vm2213 = vcmp.eq.s32.totalorder %v2047, %v2121
        %vm2214 = vcmp.eq.s32.totalorder %v2048, %v2121
        %vm2215 = vcmp.eq.s32.totalorder %v2044, %v2124
        %vm2216 = vcmp.eq.s32.totalorder %v2045, %v2124
        %vm2217 = vcmp.eq.s32.totalorder %v2046, %v2124
        %vm2218 = vcmp.eq.s32.totalorder %v2047, %v2124
        %vm2219 = vcmp.eq.s32.totalorder %v2048, %v2124
        %v2220 = vsel %vm2125, %v742, 0.0
        %v2221 = vsel %vm2126, %v744, 0.0
        %v2222 = vsel %vm2127, %v873, 0.0
        %v2223 = vsel %vm2128, %v875, 0.0
        %v2224 = vsel %vm2129, %v1004, 0.0
        %v2225 = vsel %vm2130, %v746, 0.0
        %v2226 = vsel %vm2131, %v748, 0.0
        %v2227 = vsel %vm2132, %v877, 0.0
        %v2228 = vsel %vm2133, %v879, 0.0
        %v2229 = vsel %vm2134, %v1007, 0.0
        %v2230 = vsel %vm2135, %v752, 0.0
        %v2231 = vsel %vm2136, %v754, 0.0
        %v2232 = vsel %vm2137, %v883, 0.0
        %v2233 = vsel %vm2138, %v885, 0.0
        %v2234 = vsel %vm2139, %v1012, 0.0
        %v2235 = vsel %vm2140, %v756, 0.0
        %v2236 = vsel %vm2141, %v758, 0.0
        %v2237 = vsel %vm2142, %v887, 0.0
        %v2238 = vsel %vm2143, %v889, 0.0
        %v2239 = vsel %vm2144, %v1015, 0.0
        %v2240 = vsel %vm2145, %v762, 0.0
        %v2241 = vsel %vm2146, %v764, 0.0
        %v2242 = vsel %vm2147, %v893, 0.0
        %v2243 = vsel %vm2148, %v895, 0.0
        %v2244 = vsel %vm2149, %v1020, 0.0
        %v2245 = vsel %vm2150, %v766, 0.0
        %v2246 = vsel %vm2151, %v768, 0.0
        %v2247 = vsel %vm2152, %v897, 0.0
        %v2248 = vsel %vm2153, %v899, 0.0
        %v2249 = vsel %vm2154, %v1023, 0.0
        %v2250 = vsel %vm2155, %v772, 0.0
        %v2251 = vsel %vm2156, %v774, 0.0
        %v2252 = vsel %vm2157, %v903, 0.0
        %v2253 = vsel %vm2158, %v905, 0.0
        %v2254 = vsel %vm2159, %v1028, 0.0
        %v2255 = vsel %vm2160, %v776, 0.0
        %v2256 = vsel %vm2161, %v778, 0.0
        %v2257 = vsel %vm2162, %v907, 0.0
        %v2258 = vsel %vm2163, %v909, 0.0
        %v2259 = vsel %vm2164, %v1031, 0.0
        %v2260 = vsel %vm2165, %v782, 0.0
        %v2261 = vsel %vm2166, %v784, 0.0
        %v2262 = vsel %vm2167, %v913, 0.0
        %v2263 = vsel %vm2168, %v915, 0.0
        %v2264 = vsel %vm2169, %v1036, 0.0
        %v2265 = vsel %vm2170, %v786, 0.0
        %v2266 = vsel %vm2171, %v788, 0.0
        %v2267 = vsel %vm2172, %v917, 0.0
        %v2268 = vsel %vm2173, %v919, 0.0
        %v2269 = vsel %vm2174, %v1039, 0.0
        %v2270 = vsel %vm2175, %v792, 0.0
        %v2271 = vsel %vm2176, %v794, 0.0
        %v2272 = vsel %vm2177, %v923, 0.0
        %v2273 = vsel %vm2178, %v925, 0.0
        %v2274 = vsel %vm2179, %v1044, 0.0
        %v2275 = vsel %vm2180, %v796, 0.0
        %v2276 = vsel %vm2181, %v798, 0.0
        %v2277 = vsel %vm2182, %v927, 0.0
        %v2278 = vsel %vm2183, %v929, 0.0
        %v2279 = vsel %vm2184, %v1047, 0.0
        %v2280 = vsel %vm2185, %v802, 0.0
        %v2281 = vsel %vm2186, %v804, 0.0
        %v2282 = vsel %vm2187, %v933, 0.0
        %v2283 = vsel %vm2188, %v935, 0.0
        %v2284 = vsel %vm2189, %v1052, 0.0
        %v2285 = vsel %vm2190, %v806, 0.0
        %v2286 = vsel %vm2191, %v808, 0.0
        %v2287 = vsel %vm2192, %v937, 0.0
        %v2288 = vsel %vm2193, %v939, 0.0
        %v2289 = vsel %vm2194, %v1055, 0.0
        %v2290 = vsel %vm2195, %v812, 0.0
        %v2291 = vsel %vm2196, %v814, 0.0
        %v2292 = vsel %vm2197, %v943, 0.0
        %v2293 = vsel %vm2198, %v945, 0.0
        %v2294 = vsel %vm2199, %v1060, 0.0
        %v2295 = vsel %vm2200, %v816, 0.0
        %v2296 = vsel %vm2201, %v818, 0.0
        %v2297 = vsel %vm2202, %v947, 0.0
        %v2298 = vsel %vm2203, %v949, 0.0
        %v2299 = vsel %vm2204, %v1063, 0.0
        %v2300 = vsel %vm2205, %v822, 0.0
        %v2301 = vsel %vm2206, %v824, 0.0
        %v2302 = vsel %vm2207, %v953, 0.0
        %v2303 = vsel %vm2208, %v955, 0.0
        %v2304 = vsel %vm2209, %v1068, 0.0
        %v2305 = vsel %vm2210, %v826, 0.0
        %v2306 = vsel %vm2211, %v828, 0.0
        %v2307 = vsel %vm2212, %v957, 0.0
        %v2308 = vsel %vm2213, %v959, 0.0
        %v2309 = vsel %vm2214, %v1071, 0.0
        %v2310 = vsel %vm2215, %v832, 0.0
        %v2311 = vsel %vm2216, %v834, 0.0
        %v2312 = vsel %vm2217, %v963, 0.0
        %v2313 = vsel %vm2218, %v965, 0.0
        %v2314 = vsel %vm2219, %v1076, 0.0
        %2315 = vmatprep.subr.mxu0 0.0
        %2316 = vmatpush1.msra.mxu0 1.0
        %2317 = vmatprep.subr.mxu0 0.0
        %2318 = vmatpush1.msra.mxu0 1.0
        %2319 = vmatprep.subr.mxu0 0.0
        %2320 = vmatpush1.msra.mxu0 1.0
        %2321 = vmatprep.subr.mxu0 0.0
        %2322 = vmatpush1.msra.mxu0 1.0
        %2323 = vmatprep.subr.mxu0 0.0
        %2324 = vmatpush1.msra.mxu0 1.0
        %2325 = vmatprep.subr.mxu0 0.0
        %2326 = vmatpush1.msra.mxu0 1.0
        %2327 = vmatprep.subr.mxu0 0.0
        %2328 = vmatpush1.msra.mxu0 1.0
        %2329 = vmatprep.subr.mxu0 0.0
        %2330 = vmatpush1.msra.mxu0 1.0
        %2331 = vmatprep.subr.mxu0 0.0
        %2332 = vmatpush1.msra.mxu0 1.0
        %2333 = vmatprep.subr.mxu0 0.0
        %2334 = vmatpush1.msra.mxu0 1.0
        %2335 = vmatprep.subr.mxu0 0.0
        %2336 = vmatpush1.msra.mxu0 1.0
        %2337 = vmatprep.subr.mxu0 0.0
        %2338 = vmatpush1.msra.mxu0 1.0
        %2339 = vmatprep.subr.mxu0 0.0
        %2340 = vmatpush1.msra.mxu0 1.0
        %2341 = vmatprep.subr.mxu0 0.0
        %2342 = vmatpush1.msra.mxu0 1.0
        %2343 = vmatprep.subr.mxu0 0.0
        %2344 = vmatpush1.msra.mxu0 1.0
        %2345 = vmatprep.subr.mxu0 0.0
        %2346 = vmatpush1.msra.mxu0 1.0
        %2347 = vmatprep.subr.mxu0 0.0
        %2348 = vmatpush2.msra.mxu0 1.0
        %2349 = vmatprep.subr.mxu0 0.0
        %2350 = vmatpush2.msra.mxu0 1.0
        %2351 = vmatprep.subr.mxu0 0.0
        %2352 = vmatpush2.msra.mxu0 1.0
        %2353 = vmatprep.subr.mxu0 0.0
        %2354 = vmatpush2.msra.mxu0 1.0
        %2355 = vmatprep.subr.mxu0 0.0
        %2356 = vmatpush2.msra.mxu0 1.0
        %2357 = vmatprep.subr.mxu0 0.0
        %2358 = vmatpush2.msra.mxu0 1.0
        %2359 = vmatprep.subr.mxu0 0.0
        %2360 = vmatpush2.msra.mxu0 1.0
        %2361 = vmatprep.subr.mxu0 0.0
        %2362 = vmatpush2.msra.mxu0 1.0
        %2363 = vmatprep.subr.mxu0 0.0
        %2364 = vmatpush2.msra.mxu0 1.0
        %2365 = vmatprep.subr.mxu0 0.0
        %2366 = vmatpush2.msra.mxu0 1.0
        %2367 = vmatprep.subr.mxu0 0.0
        %2368 = vmatpush2.msra.mxu0 1.0
        %2369 = vmatprep.subr.mxu0 0.0
        %2370 = vmatpush2.msra.mxu0 1.0
        %2371 = vmatprep.subr.mxu0 0.0
        %2372 = vmatpush2.msra.mxu0 1.0
        %2373 = vmatprep.subr.mxu0 0.0
        %2374 = vmatpush2.msra.mxu0 1.0
        %2375 = vmatprep.subr.mxu0 0.0
        %2376 = vmatpush2.msra.mxu0 1.0
        %2377 = vmatprep.subr.mxu0 0.0
        %2378 = vmatpush2.msra.mxu0 1.0
        %2379 = vmatprep.mubr.f32.mxu0 %v1849
        %2380 = vmatmul.mubr.f32.gmra.mxu0 %v1847
        %v2381 = vpop.f32.mrf.mxu0
        %v2382 = vadd.f32 0.0, %v2381
        %v2383 = vpop.f32.mrf.mxu0
        %2384 = vmatprep.mubr.f32.mxu0 %v1859
        %2385 = vmatmul.mubr.f32.gmra.mxu0 %v1857
        %v2386 = vpop.f32.mrf.mxu0
        %v2387 = vadd.f32 0.0, %v2386
        %v2388 = vpop.f32.mrf.mxu0
        %2389 = vmatprep.mubr.f32.mxu0 %v1869
        %2390 = vmatmul.mubr.f32.gmra.mxu0 %v1867
        %v2391 = vpop.f32.mrf.mxu0
        %v2392 = vadd.f32 0.0, %v2391
        %v2393 = vpop.f32.mrf.mxu0
        %2394 = vmatprep.mubr.f32.mxu0 %v1879
        %2395 = vmatmul.mubr.f32.gmra.mxu0 %v1877
        %v2396 = vpop.f32.mrf.mxu0
        %v2397 = vadd.f32 0.0, %v2396
        %v2398 = vpop.f32.mrf.mxu0
        %2399 = vmatprep.mubr.f32.mxu0 %v1889
        %2400 = vmatmul.mubr.f32.gmra.mxu0 %v1887
        %v2401 = vpop.f32.mrf.mxu0
        %v2402 = vadd.f32 0.0, %v2401
        %v2403 = vpop.f32.mrf.mxu0
        %2404 = vmatprep.mubr.f32.mxu0 %v1899
        %2405 = vmatmul.mubr.f32.gmra.mxu0 %v1897
        %v2406 = vpop.f32.mrf.mxu0
        %v2407 = vadd.f32 0.0, %v2406
        %v2408 = vpop.f32.mrf.mxu0
        %2409 = vmatprep.mubr.f32.mxu0 %v1909
        %2410 = vmatmul.mubr.f32.gmra.mxu0 %v1907
        %v2411 = vpop.f32.mrf.mxu0
        %v2412 = vadd.f32 0.0, %v2411
        %v2413 = vpop.f32.mrf.mxu0
        %2414 = vmatprep.mubr.f32.mxu0 %v1919
        %2415 = vmatmul.mubr.f32.gmra.mxu0 %v1917
        %v2416 = vpop.f32.mrf.mxu0
        %v2417 = vadd.f32 0.0, %v2416
        %v2418 = vpop.f32.mrf.mxu0
        %2419 = vmatprep.mubr.f32.mxu0 %v1929
        %2420 = vmatmul.mubr.f32.gmra.mxu0 %v1927
        %v2421 = vpop.f32.mrf.mxu0
        %v2422 = vadd.f32 0.0, %v2421
        %v2423 = vpop.f32.mrf.mxu0
        %2424 = vmatprep.mubr.f32.mxu0 %v1939
        %2425 = vmatmul.mubr.f32.gmra.mxu0 %v1937
        %v2426 = vpop.f32.mrf.mxu0
        %v2427 = vadd.f32 0.0, %v2426
        %v2428 = vpop.f32.mrf.mxu0
        %2429 = vmatprep.mubr.f32.mxu0 %v1949
        %2430 = vmatmul.mubr.f32.gmra.mxu0 %v1947
        %v2431 = vpop.f32.mrf.mxu0
        %v2432 = vadd.f32 0.0, %v2431
        %v2433 = vpop.f32.mrf.mxu0
        %2434 = vmatprep.mubr.f32.mxu0 %v1959
        %2435 = vmatmul.mubr.f32.gmra.mxu0 %v1957
        %v2436 = vpop.f32.mrf.mxu0
        %v2437 = vadd.f32 0.0, %v2436
        %v2438 = vpop.f32.mrf.mxu0
        %2439 = vmatprep.mubr.f32.mxu0 %v1969
        %2440 = vmatmul.mubr.f32.gmra.mxu0 %v1967
        %v2441 = vpop.f32.mrf.mxu0
        %v2442 = vadd.f32 0.0, %v2441
        %v2443 = vpop.f32.mrf.mxu0
        %2444 = vmatprep.mubr.f32.mxu0 %v1979
        %2445 = vmatmul.mubr.f32.gmra.mxu0 %v1977
        %v2446 = vpop.f32.mrf.mxu0
        %v2447 = vadd.f32 0.0, %v2446
        %v2448 = vpop.f32.mrf.mxu0
        %2449 = vmatprep.mubr.f32.mxu0 %v1989
        %2450 = vmatmul.mubr.f32.gmra.mxu0 %v1987
        %v2451 = vpop.f32.mrf.mxu0
        %v2452 = vadd.f32 0.0, %v2451
        %v2453 = vpop.f32.mrf.mxu0
        %2454 = vmatprep.mubr.f32.mxu0 %v1999
        %2455 = vmatmul.mubr.f32.gmra.mxu0 %v1997
        %v2456 = vpop.f32.mrf.mxu0
        %v2457 = vadd.f32 0.0, %v2456
        %v2458 = vpop.f32.mrf.mxu0
        %2459 = vmatprep.mubr.f32.mxu0 %v2009
        %2460 = vmatmul.mubr.f32.gmra.mxu0 %v2007
        %v2461 = vpop.f32.mrf.mxu0
        %v2462 = vadd.f32 0.0, %v2461
        %v2463 = vpop.f32.mrf.mxu0
        %2464 = vmatprep.mubr.f32.mxu0 %v2019
        %2465 = vmatmul.mubr.f32.gmra.mxu0 %v2017
        %v2466 = vpop.f32.mrf.mxu0
        %v2467 = vadd.f32 0.0, %v2466
        %v2468 = vpop.f32.mrf.mxu0
        %2469 = vmatprep.mubr.f32.mxu0 %v2029
        %2470 = vmatmul.mubr.f32.gmra.mxu0 %v2027
        %v2471 = vpop.f32.mrf.mxu0
        %v2472 = vadd.f32 0.0, %v2471
        %v2473 = vpop.f32.mrf.mxu0
        %2474 = vdwg.mxu0
        %2475 = vmatprep.subr.mxu0 0.0
        %2476 = vmatpush1.msra.mxu0 1.0
        %2477 = vmatprep.subr.mxu0 0.0
        %2478 = vmatpush1.msra.mxu0 1.0
        %2479 = vmatprep.subr.mxu0 0.0
        %2480 = vmatpush1.msra.mxu0 1.0
        %2481 = vmatprep.subr.mxu0 0.0
        %2482 = vmatpush1.msra.mxu0 1.0
        %2483 = vmatprep.subr.mxu0 0.0
        %2484 = vmatpush1.msra.mxu0 1.0
        %2485 = vmatprep.subr.mxu0 0.0
        %2486 = vmatpush1.msra.mxu0 1.0
        %2487 = vmatprep.subr.mxu0 0.0
        %2488 = vmatpush1.msra.mxu0 1.0
        %2489 = vmatprep.subr.mxu0 0.0
        %2490 = vmatpush1.msra.mxu0 1.0
        %2491 = vmatprep.subr.mxu0 0.0
        %2492 = vmatpush1.msra.mxu0 1.0
        %2493 = vmatprep.subr.mxu0 0.0
        %2494 = vmatpush1.msra.mxu0 1.0
        %2495 = vmatprep.subr.mxu0 0.0
        %2496 = vmatpush1.msra.mxu0 1.0
        %2497 = vmatprep.subr.mxu0 0.0
        %2498 = vmatpush1.msra.mxu0 1.0
        %2499 = vmatprep.subr.mxu0 0.0
        %2500 = vmatpush1.msra.mxu0 1.0
        %2501 = vmatprep.subr.mxu0 0.0
        %2502 = vmatpush1.msra.mxu0 1.0
        %2503 = vmatprep.subr.mxu0 0.0
        %2504 = vmatpush1.msra.mxu0 1.0
        %2505 = vmatprep.subr.mxu0 0.0
        %2506 = vmatpush1.msra.mxu0 1.0
        %2507 = vmatprep.subr.mxu0 0.0
        %2508 = vmatpush2.msra.mxu0 1.0
        %2509 = vmatprep.subr.mxu0 0.0
        %2510 = vmatpush2.msra.mxu0 1.0
        %2511 = vmatprep.subr.mxu0 0.0
        %2512 = vmatpush2.msra.mxu0 1.0
        %2513 = vmatprep.subr.mxu0 0.0
        %2514 = vmatpush2.msra.mxu0 1.0
        %2515 = vmatprep.subr.mxu0 0.0
        %2516 = vmatpush2.msra.mxu0 1.0
        %2517 = vmatprep.subr.mxu0 0.0
        %2518 = vmatpush2.msra.mxu0 1.0
        %2519 = vmatprep.subr.mxu0 0.0
        %2520 = vmatpush2.msra.mxu0 1.0
        %2521 = vmatprep.subr.mxu0 0.0
        %2522 = vmatpush2.msra.mxu0 1.0
        %2523 = vmatprep.subr.mxu0 0.0
        %2524 = vmatpush2.msra.mxu0 1.0
        %2525 = vmatprep.subr.mxu0 0.0
        %2526 = vmatpush2.msra.mxu0 1.0
        %2527 = vmatprep.subr.mxu0 0.0
        %2528 = vmatpush2.msra.mxu0 1.0
        %2529 = vmatprep.subr.mxu0 0.0
        %2530 = vmatpush2.msra.mxu0 1.0
        %2531 = vmatprep.subr.mxu0 0.0
        %2532 = vmatpush2.msra.mxu0 1.0
        %2533 = vmatprep.subr.mxu0 0.0
        %2534 = vmatpush2.msra.mxu0 1.0
        %2535 = vmatprep.subr.mxu0 0.0
        %2536 = vmatpush2.msra.mxu0 1.0
        %2537 = vmatprep.subr.mxu0 0.0
        %2538 = vmatpush2.msra.mxu0 1.0
        %2539 = vmatprep.mubr.f32.mxu0 %v1853
        %2540 = vmatmul.mubr.f32.gmra.mxu0 %v1851
        %v2541 = vpop.f32.mrf.mxu0
        %v2542 = vadd.f32 %v2382, %v2541
        %v2543 = vpop.f32.mrf.mxu0
        %2544 = vmatprep.mubr.f32.mxu0 %v1863
        %2545 = vmatmul.mubr.f32.gmra.mxu0 %v1861
        %v2546 = vpop.f32.mrf.mxu0
        %v2547 = vadd.f32 %v2387, %v2546
        %v2548 = vpop.f32.mrf.mxu0
        %2549 = vmatprep.mubr.f32.mxu0 %v1873
        %2550 = vmatmul.mubr.f32.gmra.mxu0 %v1871
        %v2551 = vpop.f32.mrf.mxu0
        %v2552 = vadd.f32 %v2392, %v2551
        %v2553 = vpop.f32.mrf.mxu0
        %2554 = vmatprep.mubr.f32.mxu0 %v1883
        %2555 = vmatmul.mubr.f32.gmra.mxu0 %v1881
        %v2556 = vpop.f32.mrf.mxu0
        %v2557 = vadd.f32 %v2397, %v2556
        %v2558 = vpop.f32.mrf.mxu0
        %2559 = vmatprep.mubr.f32.mxu0 %v1893
        %2560 = vmatmul.mubr.f32.gmra.mxu0 %v1891
        %v2561 = vpop.f32.mrf.mxu0
        %v2562 = vadd.f32 %v2402, %v2561
        %v2563 = vpop.f32.mrf.mxu0
        %2564 = vmatprep.mubr.f32.mxu0 %v1903
        %2565 = vmatmul.mubr.f32.gmra.mxu0 %v1901
        %v2566 = vpop.f32.mrf.mxu0
        %v2567 = vadd.f32 %v2407, %v2566
        %v2568 = vpop.f32.mrf.mxu0
        %2569 = vmatprep.mubr.f32.mxu0 %v1913
        %2570 = vmatmul.mubr.f32.gmra.mxu0 %v1911
        %v2571 = vpop.f32.mrf.mxu0
        %v2572 = vadd.f32 %v2412, %v2571
        %v2573 = vpop.f32.mrf.mxu0
        %2574 = vmatprep.mubr.f32.mxu0 %v1923
        %2575 = vmatmul.mubr.f32.gmra.mxu0 %v1921
        %v2576 = vpop.f32.mrf.mxu0
        %v2577 = vadd.f32 %v2417, %v2576
        %v2578 = vpop.f32.mrf.mxu0
        %2579 = vmatprep.mubr.f32.mxu0 %v1933
        %2580 = vmatmul.mubr.f32.gmra.mxu0 %v1931
        %v2581 = vpop.f32.mrf.mxu0
        %v2582 = vadd.f32 %v2422, %v2581
        %v2583 = vpop.f32.mrf.mxu0
        %2584 = vmatprep.mubr.f32.mxu0 %v1943
        %2585 = vmatmul.mubr.f32.gmra.mxu0 %v1941
        %v2586 = vpop.f32.mrf.mxu0
        %v2587 = vadd.f32 %v2427, %v2586
        %v2588 = vpop.f32.mrf.mxu0
        %2589 = vmatprep.mubr.f32.mxu0 %v1953
        %2590 = vmatmul.mubr.f32.gmra.mxu0 %v1951
        %v2591 = vpop.f32.mrf.mxu0
        %v2592 = vadd.f32 %v2432, %v2591
        %v2593 = vpop.f32.mrf.mxu0
        %2594 = vmatprep.mubr.f32.mxu0 %v1963
        %2595 = vmatmul.mubr.f32.gmra.mxu0 %v1961
        %v2596 = vpop.f32.mrf.mxu0
        %v2597 = vadd.f32 %v2437, %v2596
        %v2598 = vpop.f32.mrf.mxu0
        %2599 = vmatprep.mubr.f32.mxu0 %v1973
        %2600 = vmatmul.mubr.f32.gmra.mxu0 %v1971
        %v2601 = vpop.f32.mrf.mxu0
        %v2602 = vadd.f32 %v2442, %v2601
        %v2603 = vpop.f32.mrf.mxu0
        %2604 = vmatprep.mubr.f32.mxu0 %v1983
        %2605 = vmatmul.mubr.f32.gmra.mxu0 %v1981
        %v2606 = vpop.f32.mrf.mxu0
        %v2607 = vadd.f32 %v2447, %v2606
        %v2608 = vpop.f32.mrf.mxu0
        %2609 = vmatprep.mubr.f32.mxu0 %v1993
        %2610 = vmatmul.mubr.f32.gmra.mxu0 %v1991
        %v2611 = vpop.f32.mrf.mxu0
        %v2612 = vadd.f32 %v2452, %v2611
        %v2613 = vpop.f32.mrf.mxu0
        %2614 = vmatprep.mubr.f32.mxu0 %v2003
        %2615 = vmatmul.mubr.f32.gmra.mxu0 %v2001
        %v2616 = vpop.f32.mrf.mxu0
        %v2617 = vadd.f32 %v2457, %v2616
        %v2618 = vpop.f32.mrf.mxu0
        %2619 = vmatprep.mubr.f32.mxu0 %v2013
        %2620 = vmatmul.mubr.f32.gmra.mxu0 %v2011
        %v2621 = vpop.f32.mrf.mxu0
        %v2622 = vadd.f32 %v2462, %v2621
        %v2623 = vpop.f32.mrf.mxu0
        %2624 = vmatprep.mubr.f32.mxu0 %v2023
        %2625 = vmatmul.mubr.f32.gmra.mxu0 %v2021
        %v2626 = vpop.f32.mrf.mxu0
        %v2627 = vadd.f32 %v2467, %v2626
        %v2628 = vpop.f32.mrf.mxu0
        %2629 = vmatprep.mubr.f32.mxu0 %v2033
        %2630 = vmatmul.mubr.f32.gmra.mxu0 %v2031
        %v2631 = vpop.f32.mrf.mxu0
        %v2632 = vadd.f32 %v2472, %v2631
        %v2633 = vpop.f32.mrf.mxu0
        %2634 = vdwg.mxu0
        %2635 = vmatprep.subr.mxu0 0.0
        %2636 = vmatpush1.msra.mxu0 1.0
        %2637 = vmatprep.subr.mxu0 0.0
        %2638 = vmatpush1.msra.mxu0 1.0
        %2639 = vmatprep.subr.mxu0 0.0
        %2640 = vmatpush1.msra.mxu0 1.0
        %2641 = vmatprep.subr.mxu0 0.0
        %2642 = vmatpush1.msra.mxu0 1.0
        %2643 = vmatprep.subr.mxu0 0.0
        %2644 = vmatpush1.msra.mxu0 1.0
        %2645 = vmatprep.subr.mxu0 0.0
        %2646 = vmatpush1.msra.mxu0 1.0
        %2647 = vmatprep.subr.mxu0 0.0
        %2648 = vmatpush1.msra.mxu0 1.0
        %2649 = vmatprep.subr.mxu0 0.0
        %2650 = vmatpush1.msra.mxu0 1.0
        %2651 = vmatprep.subr.mxu0 0.0
        %2652 = vmatpush1.msra.mxu0 1.0
        %2653 = vmatprep.subr.mxu0 0.0
        %2654 = vmatpush1.msra.mxu0 1.0
        %2655 = vmatprep.subr.mxu0 0.0
        %2656 = vmatpush1.msra.mxu0 1.0
        %2657 = vmatprep.subr.mxu0 0.0
        %2658 = vmatpush1.msra.mxu0 1.0
        %2659 = vmatprep.subr.mxu0 0.0
        %2660 = vmatpush1.msra.mxu0 1.0
        %2661 = vmatprep.subr.mxu0 0.0
        %2662 = vmatpush1.msra.mxu0 1.0
        %2663 = vmatprep.subr.mxu0 0.0
        %2664 = vmatpush1.msra.mxu0 1.0
        %2665 = vmatprep.subr.mxu0 0.0
        %2666 = vmatpush1.msra.mxu0 1.0
        %2667 = vmatprep.subr.mxu0 0.0
        %2668 = vmatpush2.msra.mxu0 0.0
        %2669 = vmatprep.subr.mxu0 0.0
        %2670 = vmatpush2.msra.mxu0 0.0
        %2671 = vmatprep.subr.mxu0 0.0
        %2672 = vmatpush2.msra.mxu0 0.0
        %2673 = vmatprep.subr.mxu0 0.0
        %2674 = vmatpush2.msra.mxu0 0.0
        %2675 = vmatprep.subr.mxu0 0.0
        %2676 = vmatpush2.msra.mxu0 0.0
        %2677 = vmatprep.subr.mxu0 0.0
        %2678 = vmatpush2.msra.mxu0 0.0
        %2679 = vmatprep.subr.mxu0 0.0
        %2680 = vmatpush2.msra.mxu0 0.0
        %2681 = vmatprep.subr.mxu0 0.0
        %2682 = vmatpush2.msra.mxu0 0.0
        %2683 = vmatprep.subr.mxu0 0.0
        %2684 = vmatpush2.msra.mxu0 0.0
        %2685 = vmatprep.subr.mxu0 0.0
        %2686 = vmatpush2.msra.mxu0 0.0
        %2687 = vmatprep.subr.mxu0 0.0
        %2688 = vmatpush2.msra.mxu0 0.0
        %2689 = vmatprep.subr.mxu0 0.0
        %2690 = vmatpush2.msra.mxu0 0.0
        %2691 = vmatprep.subr.mxu0 0.0
        %2692 = vmatpush2.msra.mxu0 0.0
        %2693 = vmatprep.subr.mxu0 0.0
        %2694 = vmatpush2.msra.mxu0 0.0
        %2695 = vmatprep.subr.mxu0 0.0
        %2696 = vmatpush2.msra.mxu0 0.0
        %2697 = vmatprep.subr.mxu0 0.0
        %2698 = vmatpush2.msra.mxu0 0.0
        %2699 = vmatprep.mubr.f32.mxu0 0.0
        %2700 = vmatmul.mubr.f32.gmra.mxu0 %v1855
        %v2701 = vpop.f32.mrf.mxu0
        %v2702 = vadd.f32 %v2542, %v2701
        %v2703 = vpop.f32.mrf.mxu0
        %2704 = vmatprep.mubr.f32.mxu0 0.0
        %2705 = vmatmul.mubr.f32.gmra.mxu0 %v1865
        %v2706 = vpop.f32.mrf.mxu0
        %v2707 = vadd.f32 %v2547, %v2706
        %v2708 = vpop.f32.mrf.mxu0
        %2709 = vmatprep.mubr.f32.mxu0 0.0
        %2710 = vmatmul.mubr.f32.gmra.mxu0 %v1875
        %v2711 = vpop.f32.mrf.mxu0
        %v2712 = vadd.f32 %v2552, %v2711
        %v2713 = vpop.f32.mrf.mxu0
        %2714 = vmatprep.mubr.f32.mxu0 0.0
        %2715 = vmatmul.mubr.f32.gmra.mxu0 %v1885
        %v2716 = vpop.f32.mrf.mxu0
        %v2717 = vadd.f32 %v2557, %v2716
        %v2718 = vpop.f32.mrf.mxu0
        %2719 = vmatprep.mubr.f32.mxu0 0.0
        %2720 = vmatmul.mubr.f32.gmra.mxu0 %v1895
        %v2721 = vpop.f32.mrf.mxu0
        %v2722 = vadd.f32 %v2562, %v2721
        %v2723 = vpop.f32.mrf.mxu0
        %2724 = vmatprep.mubr.f32.mxu0 0.0
        %2725 = vmatmul.mubr.f32.gmra.mxu0 %v1905
        %v2726 = vpop.f32.mrf.mxu0
        %v2727 = vadd.f32 %v2567, %v2726
        %v2728 = vpop.f32.mrf.mxu0
        %2729 = vmatprep.mubr.f32.mxu0 0.0
        %2730 = vmatmul.mubr.f32.gmra.mxu0 %v1915
        %v2731 = vpop.f32.mrf.mxu0
        %v2732 = vadd.f32 %v2572, %v2731
        %v2733 = vpop.f32.mrf.mxu0
        %2734 = vmatprep.mubr.f32.mxu0 0.0
        %2735 = vmatmul.mubr.f32.gmra.mxu0 %v1925
        %v2736 = vpop.f32.mrf.mxu0
        %v2737 = vadd.f32 %v2577, %v2736
        %v2738 = vpop.f32.mrf.mxu0
        %2739 = vmatprep.mubr.f32.mxu0 0.0
        %2740 = vmatmul.mubr.f32.gmra.mxu0 %v1935
        %v2741 = vpop.f32.mrf.mxu0
        %v2742 = vadd.f32 %v2582, %v2741
        %v2743 = vpop.f32.mrf.mxu0
        %2744 = vmatprep.mubr.f32.mxu0 0.0
        %2745 = vmatmul.mubr.f32.gmra.mxu0 %v1945
        %v2746 = vpop.f32.mrf.mxu0
        %v2747 = vadd.f32 %v2587, %v2746
        %v2748 = vpop.f32.mrf.mxu0
        %2749 = vmatprep.mubr.f32.mxu0 0.0
        %2750 = vmatmul.mubr.f32.gmra.mxu0 %v1955
        %v2751 = vpop.f32.mrf.mxu0
        %v2752 = vadd.f32 %v2592, %v2751
        %v2753 = vpop.f32.mrf.mxu0
        %2754 = vmatprep.mubr.f32.mxu0 0.0
        %2755 = vmatmul.mubr.f32.gmra.mxu0 %v1965
        %v2756 = vpop.f32.mrf.mxu0
        %v2757 = vadd.f32 %v2597, %v2756
        %v2758 = vpop.f32.mrf.mxu0
        %2759 = vmatprep.mubr.f32.mxu0 0.0
        %2760 = vmatmul.mubr.f32.gmra.mxu0 %v1975
        %v2761 = vpop.f32.mrf.mxu0
        %v2762 = vadd.f32 %v2602, %v2761
        %v2763 = vpop.f32.mrf.mxu0
        %2764 = vmatprep.mubr.f32.mxu0 0.0
        %2765 = vmatmul.mubr.f32.gmra.mxu0 %v1985
        %v2766 = vpop.f32.mrf.mxu0
        %v2767 = vadd.f32 %v2607, %v2766
        %v2768 = vpop.f32.mrf.mxu0
        %2769 = vmatprep.mubr.f32.mxu0 0.0
        %2770 = vmatmul.mubr.f32.gmra.mxu0 %v1995
        %v2771 = vpop.f32.mrf.mxu0
        %v2772 = vadd.f32 %v2612, %v2771
        %v2773 = vpop.f32.mrf.mxu0
        %2774 = vmatprep.mubr.f32.mxu0 0.0
        %2775 = vmatmul.mubr.f32.gmra.mxu0 %v2005
        %v2776 = vpop.f32.mrf.mxu0
        %v2777 = vadd.f32 %v2617, %v2776
        %v2778 = vpop.f32.mrf.mxu0
        %2779 = vmatprep.mubr.f32.mxu0 0.0
        %2780 = vmatmul.mubr.f32.gmra.mxu0 %v2015
        %v2781 = vpop.f32.mrf.mxu0
        %v2782 = vadd.f32 %v2622, %v2781
        %v2783 = vpop.f32.mrf.mxu0
        %2784 = vmatprep.mubr.f32.mxu0 0.0
        %2785 = vmatmul.mubr.f32.gmra.mxu0 %v2025
        %v2786 = vpop.f32.mrf.mxu0
        %v2787 = vadd.f32 %v2627, %v2786
        %v2788 = vpop.f32.mrf.mxu0
        %2789 = vmatprep.mubr.f32.mxu0 0.0
        %2790 = vmatmul.mubr.f32.gmra.mxu0 %v2035
        %v2791 = vpop.f32.mrf.mxu0
        %v2792 = vadd.f32 %v2632, %v2791
        %v2793 = vpop.f32.mrf.mxu0
        %2794 = vdwg.mxu0
        %2795 = vmatprep.subr.mxu0 0.0
        %2796 = vmatpush1.msra.mxu0 1.0
        %2797 = vmatprep.subr.mxu0 0.0
        %2798 = vmatpush1.msra.mxu0 1.0
        %2799 = vmatprep.subr.mxu0 0.0
        %2800 = vmatpush1.msra.mxu0 1.0
        %2801 = vmatprep.subr.mxu0 0.0
        %2802 = vmatpush1.msra.mxu0 1.0
        %2803 = vmatprep.subr.mxu0 0.0
        %2804 = vmatpush1.msra.mxu0 1.0
        %2805 = vmatprep.subr.mxu0 0.0
        %2806 = vmatpush1.msra.mxu0 1.0
        %2807 = vmatprep.subr.mxu0 0.0
        %2808 = vmatpush1.msra.mxu0 1.0
        %2809 = vmatprep.subr.mxu0 0.0
        %2810 = vmatpush1.msra.mxu0 1.0
        %2811 = vmatprep.subr.mxu0 0.0
        %2812 = vmatpush1.msra.mxu0 1.0
        %2813 = vmatprep.subr.mxu0 0.0
        %2814 = vmatpush1.msra.mxu0 1.0
        %2815 = vmatprep.subr.mxu0 0.0
        %2816 = vmatpush1.msra.mxu0 1.0
        %2817 = vmatprep.subr.mxu0 0.0
        %2818 = vmatpush1.msra.mxu0 1.0
        %2819 = vmatprep.subr.mxu0 0.0
        %2820 = vmatpush1.msra.mxu0 1.0
        %2821 = vmatprep.subr.mxu0 0.0
        %2822 = vmatpush1.msra.mxu0 1.0
        %2823 = vmatprep.subr.mxu0 0.0
        %2824 = vmatpush1.msra.mxu0 1.0
        %2825 = vmatprep.subr.mxu0 0.0
        %2826 = vmatpush1.msra.mxu0 1.0
        %2827 = vmatprep.subr.mxu0 0.0
        %2828 = vmatpush2.msra.mxu0 1.0
        %2829 = vmatprep.subr.mxu0 0.0
        %2830 = vmatpush2.msra.mxu0 1.0
        %2831 = vmatprep.subr.mxu0 0.0
        %2832 = vmatpush2.msra.mxu0 1.0
        %2833 = vmatprep.subr.mxu0 0.0
        %2834 = vmatpush2.msra.mxu0 1.0
        %2835 = vmatprep.subr.mxu0 0.0
        %2836 = vmatpush2.msra.mxu0 1.0
        %2837 = vmatprep.subr.mxu0 0.0
        %2838 = vmatpush2.msra.mxu0 1.0
        %2839 = vmatprep.subr.mxu0 0.0
        %2840 = vmatpush2.msra.mxu0 1.0
        %2841 = vmatprep.subr.mxu0 0.0
        %2842 = vmatpush2.msra.mxu0 1.0
        %2843 = vmatprep.subr.mxu0 0.0
        %2844 = vmatpush2.msra.mxu0 1.0
        %2845 = vmatprep.subr.mxu0 0.0
        %2846 = vmatpush2.msra.mxu0 1.0
        %2847 = vmatprep.subr.mxu0 0.0
        %2848 = vmatpush2.msra.mxu0 1.0
        %2849 = vmatprep.subr.mxu0 0.0
        %2850 = vmatpush2.msra.mxu0 1.0
        %2851 = vmatprep.subr.mxu0 0.0
        %2852 = vmatpush2.msra.mxu0 1.0
        %2853 = vmatprep.subr.mxu0 0.0
        %2854 = vmatpush2.msra.mxu0 1.0
        %2855 = vmatprep.subr.mxu0 0.0
        %2856 = vmatpush2.msra.mxu0 1.0
        %2857 = vmatprep.subr.mxu0 0.0
        %2858 = vmatpush2.msra.mxu0 1.0
        %2859 = vmatprep.mubr.f32.mxu0 %v2221
        %2860 = vmatmul.mubr.f32.gmra.mxu0 %v2220
        %v2861 = vpop.f32.mrf.mxu0
        %v2862 = vadd.f32 0.0, %v2861
        %v2863 = vpop.f32.mrf.mxu0
        %2864 = vmatprep.mubr.f32.mxu0 %v2226
        %2865 = vmatmul.mubr.f32.gmra.mxu0 %v2225
        %v2866 = vpop.f32.mrf.mxu0
        %v2867 = vadd.f32 0.0, %v2866
        %v2868 = vpop.f32.mrf.mxu0
        %2869 = vmatprep.mubr.f32.mxu0 %v2231
        %2870 = vmatmul.mubr.f32.gmra.mxu0 %v2230
        %v2871 = vpop.f32.mrf.mxu0
        %v2872 = vadd.f32 0.0, %v2871
        %v2873 = vpop.f32.mrf.mxu0
        %2874 = vmatprep.mubr.f32.mxu0 %v2236
        %2875 = vmatmul.mubr.f32.gmra.mxu0 %v2235
        %v2876 = vpop.f32.mrf.mxu0
        %v2877 = vadd.f32 0.0, %v2876
        %v2878 = vpop.f32.mrf.mxu0
        %2879 = vmatprep.mubr.f32.mxu0 %v2241
        %2880 = vmatmul.mubr.f32.gmra.mxu0 %v2240
        %v2881 = vpop.f32.mrf.mxu0
        %v2882 = vadd.f32 0.0, %v2881
        %v2883 = vpop.f32.mrf.mxu0
        %2884 = vmatprep.mubr.f32.mxu0 %v2246
        %2885 = vmatmul.mubr.f32.gmra.mxu0 %v2245
        %v2886 = vpop.f32.mrf.mxu0
        %v2887 = vadd.f32 0.0, %v2886
        %v2888 = vpop.f32.mrf.mxu0
        %2889 = vmatprep.mubr.f32.mxu0 %v2251
        %2890 = vmatmul.mubr.f32.gmra.mxu0 %v2250
        %v2891 = vpop.f32.mrf.mxu0
        %v2892 = vadd.f32 0.0, %v2891
        %v2893 = vpop.f32.mrf.mxu0
        %2894 = vmatprep.mubr.f32.mxu0 %v2256
        %2895 = vmatmul.mubr.f32.gmra.mxu0 %v2255
        %v2896 = vpop.f32.mrf.mxu0
        %v2897 = vadd.f32 0.0, %v2896
        %v2898 = vpop.f32.mrf.mxu0
        %2899 = vmatprep.mubr.f32.mxu0 %v2261
        %2900 = vmatmul.mubr.f32.gmra.mxu0 %v2260
        %v2901 = vpop.f32.mrf.mxu0
        %v2902 = vadd.f32 0.0, %v2901
        %v2903 = vpop.f32.mrf.mxu0
        %2904 = vmatprep.mubr.f32.mxu0 %v2266
        %2905 = vmatmul.mubr.f32.gmra.mxu0 %v2265
        %v2906 = vpop.f32.mrf.mxu0
        %v2907 = vadd.f32 0.0, %v2906
        %v2908 = vpop.f32.mrf.mxu0
        %2909 = vmatprep.mubr.f32.mxu0 %v2271
        %2910 = vmatmul.mubr.f32.gmra.mxu0 %v2270
        %v2911 = vpop.f32.mrf.mxu0
        %v2912 = vadd.f32 0.0, %v2911
        %v2913 = vpop.f32.mrf.mxu0
        %2914 = vmatprep.mubr.f32.mxu0 %v2276
        %2915 = vmatmul.mubr.f32.gmra.mxu0 %v2275
        %v2916 = vpop.f32.mrf.mxu0
        %v2917 = vadd.f32 0.0, %v2916
        %v2918 = vpop.f32.mrf.mxu0
        %2919 = vmatprep.mubr.f32.mxu0 %v2281
        %2920 = vmatmul.mubr.f32.gmra.mxu0 %v2280
        %v2921 = vpop.f32.mrf.mxu0
        %v2922 = vadd.f32 0.0, %v2921
        %v2923 = vpop.f32.mrf.mxu0
        %2924 = vmatprep.mubr.f32.mxu0 %v2286
        %2925 = vmatmul.mubr.f32.gmra.mxu0 %v2285
        %v2926 = vpop.f32.mrf.mxu0
        %v2927 = vadd.f32 0.0, %v2926
        %v2928 = vpop.f32.mrf.mxu0
        %2929 = vmatprep.mubr.f32.mxu0 %v2291
        %2930 = vmatmul.mubr.f32.gmra.mxu0 %v2290
        %v2931 = vpop.f32.mrf.mxu0
        %v2932 = vadd.f32 0.0, %v2931
        %v2933 = vpop.f32.mrf.mxu0
        %2934 = vmatprep.mubr.f32.mxu0 %v2296
        %2935 = vmatmul.mubr.f32.gmra.mxu0 %v2295
        %v2936 = vpop.f32.mrf.mxu0
        %v2937 = vadd.f32 0.0, %v2936
        %v2938 = vpop.f32.mrf.mxu0
        %2939 = vmatprep.mubr.f32.mxu0 %v2301
        %2940 = vmatmul.mubr.f32.gmra.mxu0 %v2300
        %v2941 = vpop.f32.mrf.mxu0
        %v2942 = vadd.f32 0.0, %v2941
        %v2943 = vpop.f32.mrf.mxu0
        %2944 = vmatprep.mubr.f32.mxu0 %v2306
        %2945 = vmatmul.mubr.f32.gmra.mxu0 %v2305
        %v2946 = vpop.f32.mrf.mxu0
        %v2947 = vadd.f32 0.0, %v2946
        %v2948 = vpop.f32.mrf.mxu0
        %2949 = vmatprep.mubr.f32.mxu0 %v2311
        %2950 = vmatmul.mubr.f32.gmra.mxu0 %v2310
        %v2951 = vpop.f32.mrf.mxu0
        %v2952 = vadd.f32 0.0, %v2951
        %v2953 = vpop.f32.mrf.mxu0
        %2954 = vdwg.mxu0
        %2955 = vmatprep.subr.mxu0 0.0
        %2956 = vmatpush1.msra.mxu0 1.0
        %2957 = vmatprep.subr.mxu0 0.0
        %2958 = vmatpush1.msra.mxu0 1.0
        %2959 = vmatprep.subr.mxu0 0.0
        %2960 = vmatpush1.msra.mxu0 1.0
        %2961 = vmatprep.subr.mxu0 0.0
        %2962 = vmatpush1.msra.mxu0 1.0
        %2963 = vmatprep.subr.mxu0 0.0
        %2964 = vmatpush1.msra.mxu0 1.0
        %2965 = vmatprep.subr.mxu0 0.0
        %2966 = vmatpush1.msra.mxu0 1.0
        %2967 = vmatprep.subr.mxu0 0.0
        %2968 = vmatpush1.msra.mxu0 1.0
        %2969 = vmatprep.subr.mxu0 0.0
        %2970 = vmatpush1.msra.mxu0 1.0
        %2971 = vmatprep.subr.mxu0 0.0
        %2972 = vmatpush1.msra.mxu0 1.0
        %2973 = vmatprep.subr.mxu0 0.0
        %2974 = vmatpush1.msra.mxu0 1.0
        %2975 = vmatprep.subr.mxu0 0.0
        %2976 = vmatpush1.msra.mxu0 1.0
        %2977 = vmatprep.subr.mxu0 0.0
        %2978 = vmatpush1.msra.mxu0 1.0
        %2979 = vmatprep.subr.mxu0 0.0
        %2980 = vmatpush1.msra.mxu0 1.0
        %2981 = vmatprep.subr.mxu0 0.0
        %2982 = vmatpush1.msra.mxu0 1.0
        %2983 = vmatprep.subr.mxu0 0.0
        %2984 = vmatpush1.msra.mxu0 1.0
        %2985 = vmatprep.subr.mxu0 0.0
        %2986 = vmatpush1.msra.mxu0 1.0
        %2987 = vmatprep.subr.mxu0 0.0
        %2988 = vmatpush2.msra.mxu0 1.0
        %2989 = vmatprep.subr.mxu0 0.0
        %2990 = vmatpush2.msra.mxu0 1.0
        %2991 = vmatprep.subr.mxu0 0.0
        %2992 = vmatpush2.msra.mxu0 1.0
        %2993 = vmatprep.subr.mxu0 0.0
        %2994 = vmatpush2.msra.mxu0 1.0
        %2995 = vmatprep.subr.mxu0 0.0
        %2996 = vmatpush2.msra.mxu0 1.0
        %2997 = vmatprep.subr.mxu0 0.0
        %2998 = vmatpush2.msra.mxu0 1.0
        %2999 = vmatprep.subr.mxu0 0.0
        %3000 = vmatpush2.msra.mxu0 1.0
        %3001 = vmatprep.subr.mxu0 0.0
        %3002 = vmatpush2.msra.mxu0 1.0
        %3003 = vmatprep.subr.mxu0 0.0
        %3004 = vmatpush2.msra.mxu0 1.0
        %3005 = vmatprep.subr.mxu0 0.0
        %3006 = vmatpush2.msra.mxu0 1.0
        %3007 = vmatprep.subr.mxu0 0.0
        %3008 = vmatpush2.msra.mxu0 1.0
        %3009 = vmatprep.subr.mxu0 0.0
        %3010 = vmatpush2.msra.mxu0 1.0
        %3011 = vmatprep.subr.mxu0 0.0
        %3012 = vmatpush2.msra.mxu0 1.0
        %3013 = vmatprep.subr.mxu0 0.0
        %3014 = vmatpush2.msra.mxu0 1.0
        %3015 = vmatprep.subr.mxu0 0.0
        %3016 = vmatpush2.msra.mxu0 1.0
        %3017 = vmatprep.subr.mxu0 0.0
        %3018 = vmatpush2.msra.mxu0 1.0
        %3019 = vmatprep.mubr.f32.mxu0 %v2223
        %3020 = vmatmul.mubr.f32.gmra.mxu0 %v2222
        %v3021 = vpop.f32.mrf.mxu0
        %v3022 = vadd.f32 %v2862, %v3021
        %v3023 = vpop.f32.mrf.mxu0
        %3024 = vmatprep.mubr.f32.mxu0 %v2228
        %3025 = vmatmul.mubr.f32.gmra.mxu0 %v2227
        %v3026 = vpop.f32.mrf.mxu0
        %v3027 = vadd.f32 %v2867, %v3026
        %v3028 = vpop.f32.mrf.mxu0
        %3029 = vmatprep.mubr.f32.mxu0 %v2233
        %3030 = vmatmul.mubr.f32.gmra.mxu0 %v2232
        %v3031 = vpop.f32.mrf.mxu0
        %v3032 = vadd.f32 %v2872, %v3031
        %v3033 = vpop.f32.mrf.mxu0
        %3034 = vmatprep.mubr.f32.mxu0 %v2238
        %3035 = vmatmul.mubr.f32.gmra.mxu0 %v2237
        %v3036 = vpop.f32.mrf.mxu0
        %v3037 = vadd.f32 %v2877, %v3036
        %v3038 = vpop.f32.mrf.mxu0
        %3039 = vmatprep.mubr.f32.mxu0 %v2243
        %3040 = vmatmul.mubr.f32.gmra.mxu0 %v2242
        %v3041 = vpop.f32.mrf.mxu0
        %v3042 = vadd.f32 %v2882, %v3041
        %v3043 = vpop.f32.mrf.mxu0
        %3044 = vmatprep.mubr.f32.mxu0 %v2248
        %3045 = vmatmul.mubr.f32.gmra.mxu0 %v2247
        %v3046 = vpop.f32.mrf.mxu0
        %v3047 = vadd.f32 %v2887, %v3046
        %v3048 = vpop.f32.mrf.mxu0
        %3049 = vmatprep.mubr.f32.mxu0 %v2253
        %3050 = vmatmul.mubr.f32.gmra.mxu0 %v2252
        %v3051 = vpop.f32.mrf.mxu0
        %v3052 = vadd.f32 %v2892, %v3051
        %v3053 = vpop.f32.mrf.mxu0
        %3054 = vmatprep.mubr.f32.mxu0 %v2258
        %3055 = vmatmul.mubr.f32.gmra.mxu0 %v2257
        %v3056 = vpop.f32.mrf.mxu0
        %v3057 = vadd.f32 %v2897, %v3056
        %v3058 = vpop.f32.mrf.mxu0
        %3059 = vmatprep.mubr.f32.mxu0 %v2263
        %3060 = vmatmul.mubr.f32.gmra.mxu0 %v2262
        %v3061 = vpop.f32.mrf.mxu0
        %v3062 = vadd.f32 %v2902, %v3061
        %v3063 = vpop.f32.mrf.mxu0
        %3064 = vmatprep.mubr.f32.mxu0 %v2268
        %3065 = vmatmul.mubr.f32.gmra.mxu0 %v2267
        %v3066 = vpop.f32.mrf.mxu0
        %v3067 = vadd.f32 %v2907, %v3066
        %v3068 = vpop.f32.mrf.mxu0
        %3069 = vmatprep.mubr.f32.mxu0 %v2273
        %3070 = vmatmul.mubr.f32.gmra.mxu0 %v2272
        %v3071 = vpop.f32.mrf.mxu0
        %v3072 = vadd.f32 %v2912, %v3071
        %v3073 = vpop.f32.mrf.mxu0
        %3074 = vmatprep.mubr.f32.mxu0 %v2278
        %3075 = vmatmul.mubr.f32.gmra.mxu0 %v2277
        %v3076 = vpop.f32.mrf.mxu0
        %v3077 = vadd.f32 %v2917, %v3076
        %v3078 = vpop.f32.mrf.mxu0
        %3079 = vmatprep.mubr.f32.mxu0 %v2283
        %3080 = vmatmul.mubr.f32.gmra.mxu0 %v2282
        %v3081 = vpop.f32.mrf.mxu0
        %v3082 = vadd.f32 %v2922, %v3081
        %v3083 = vpop.f32.mrf.mxu0
        %3084 = vmatprep.mubr.f32.mxu0 %v2288
        %3085 = vmatmul.mubr.f32.gmra.mxu0 %v2287
        %v3086 = vpop.f32.mrf.mxu0
        %v3087 = vadd.f32 %v2927, %v3086
        %v3088 = vpop.f32.mrf.mxu0
        %3089 = vmatprep.mubr.f32.mxu0 %v2293
        %3090 = vmatmul.mubr.f32.gmra.mxu0 %v2292
        %v3091 = vpop.f32.mrf.mxu0
        %v3092 = vadd.f32 %v2932, %v3091
        %v3093 = vpop.f32.mrf.mxu0
        %3094 = vmatprep.mubr.f32.mxu0 %v2298
        %3095 = vmatmul.mubr.f32.gmra.mxu0 %v2297
        %v3096 = vpop.f32.mrf.mxu0
        %v3097 = vadd.f32 %v2937, %v3096
        %v3098 = vpop.f32.mrf.mxu0
        %3099 = vmatprep.mubr.f32.mxu0 %v2303
        %3100 = vmatmul.mubr.f32.gmra.mxu0 %v2302
        %v3101 = vpop.f32.mrf.mxu0
        %v3102 = vadd.f32 %v2942, %v3101
        %v3103 = vpop.f32.mrf.mxu0
        %3104 = vmatprep.mubr.f32.mxu0 %v2308
        %3105 = vmatmul.mubr.f32.gmra.mxu0 %v2307
        %v3106 = vpop.f32.mrf.mxu0
        %v3107 = vadd.f32 %v2947, %v3106
        %v3108 = vpop.f32.mrf.mxu0
        %3109 = vmatprep.mubr.f32.mxu0 %v2313
        %3110 = vmatmul.mubr.f32.gmra.mxu0 %v2312
        %v3111 = vpop.f32.mrf.mxu0
        %v3112 = vadd.f32 %v2952, %v3111
        %v3113 = vpop.f32.mrf.mxu0
        %3114 = vdwg.mxu0
        %3115 = vmatprep.subr.mxu0 0.0
        %3116 = vmatpush1.msra.mxu0 1.0
        %3117 = vmatprep.subr.mxu0 0.0
        %3118 = vmatpush1.msra.mxu0 1.0
        %3119 = vmatprep.subr.mxu0 0.0
        %3120 = vmatpush1.msra.mxu0 1.0
        %3121 = vmatprep.subr.mxu0 0.0
        %3122 = vmatpush1.msra.mxu0 1.0
        %3123 = vmatprep.subr.mxu0 0.0
        %3124 = vmatpush1.msra.mxu0 1.0
        %3125 = vmatprep.subr.mxu0 0.0
        %3126 = vmatpush1.msra.mxu0 1.0
        %3127 = vmatprep.subr.mxu0 0.0
        %3128 = vmatpush1.msra.mxu0 1.0
        %3129 = vmatprep.subr.mxu0 0.0
        %3130 = vmatpush1.msra.mxu0 1.0
        %3131 = vmatprep.subr.mxu0 0.0
        %3132 = vmatpush1.msra.mxu0 1.0
        %3133 = vmatprep.subr.mxu0 0.0
        %3134 = vmatpush1.msra.mxu0 1.0
        %3135 = vmatprep.subr.mxu0 0.0
        %3136 = vmatpush1.msra.mxu0 1.0
        %3137 = vmatprep.subr.mxu0 0.0
        %3138 = vmatpush1.msra.mxu0 1.0
        %3139 = vmatprep.subr.mxu0 0.0
        %3140 = vmatpush1.msra.mxu0 1.0
        %3141 = vmatprep.subr.mxu0 0.0
        %3142 = vmatpush1.msra.mxu0 1.0
        %3143 = vmatprep.subr.mxu0 0.0
        %3144 = vmatpush1.msra.mxu0 1.0
        %3145 = vmatprep.subr.mxu0 0.0
        %3146 = vmatpush1.msra.mxu0 1.0
        %3147 = vmatprep.subr.mxu0 0.0
        %3148 = vmatpush2.msra.mxu0 0.0
        %3149 = vmatprep.subr.mxu0 0.0
        %3150 = vmatpush2.msra.mxu0 0.0
        %3151 = vmatprep.subr.mxu0 0.0
        %3152 = vmatpush2.msra.mxu0 0.0
        %3153 = vmatprep.subr.mxu0 0.0
        %3154 = vmatpush2.msra.mxu0 0.0
        %3155 = vmatprep.subr.mxu0 0.0
        %3156 = vmatpush2.msra.mxu0 0.0
        %3157 = vmatprep.subr.mxu0 0.0
        %3158 = vmatpush2.msra.mxu0 0.0
        %3159 = vmatprep.subr.mxu0 0.0
        %3160 = vmatpush2.msra.mxu0 0.0
        %3161 = vmatprep.subr.mxu0 0.0
        %3162 = vmatpush2.msra.mxu0 0.0
        %3163 = vmatprep.subr.mxu0 0.0
        %3164 = vmatpush2.msra.mxu0 0.0
        %3165 = vmatprep.subr.mxu0 0.0
        %3166 = vmatpush2.msra.mxu0 0.0
        %3167 = vmatprep.subr.mxu0 0.0
        %3168 = vmatpush2.msra.mxu0 0.0
        %3169 = vmatprep.subr.mxu0 0.0
        %3170 = vmatpush2.msra.mxu0 0.0
        %3171 = vmatprep.subr.mxu0 0.0
        %3172 = vmatpush2.msra.mxu0 0.0
        %3173 = vmatprep.subr.mxu0 0.0
        %3174 = vmatpush2.msra.mxu0 0.0
        %3175 = vmatprep.subr.mxu0 0.0
        %3176 = vmatpush2.msra.mxu0 0.0
        %3177 = vmatprep.subr.mxu0 0.0
        %3178 = vmatpush2.msra.mxu0 0.0
        %3179 = vmatprep.mubr.f32.mxu0 0.0
        %3180 = vmatmul.mubr.f32.gmra.mxu0 %v2224
        %v3181 = vpop.f32.mrf.mxu0
        %v3182 = vadd.f32 %v3022, %v3181
        %v3183 = vpop.f32.mrf.mxu0
        %3184 = vmatprep.mubr.f32.mxu0 0.0
        %3185 = vmatmul.mubr.f32.gmra.mxu0 %v2229
        %v3186 = vpop.f32.mrf.mxu0
        %v3187 = vadd.f32 %v3027, %v3186
        %v3188 = vpop.f32.mrf.mxu0
        %3189 = vmatprep.mubr.f32.mxu0 0.0
        %3190 = vmatmul.mubr.f32.gmra.mxu0 %v2234
        %v3191 = vpop.f32.mrf.mxu0
        %v3192 = vadd.f32 %v3032, %v3191
        %v3193 = vpop.f32.mrf.mxu0
        %3194 = vmatprep.mubr.f32.mxu0 0.0
        %3195 = vmatmul.mubr.f32.gmra.mxu0 %v2239
        %v3196 = vpop.f32.mrf.mxu0
        %v3197 = vadd.f32 %v3037, %v3196
        %v3198 = vpop.f32.mrf.mxu0
        %3199 = vmatprep.mubr.f32.mxu0 0.0
        %3200 = vmatmul.mubr.f32.gmra.mxu0 %v2244
        %v3201 = vpop.f32.mrf.mxu0
        %v3202 = vadd.f32 %v3042, %v3201
        %v3203 = vpop.f32.mrf.mxu0
        %3204 = vmatprep.mubr.f32.mxu0 0.0
        %3205 = vmatmul.mubr.f32.gmra.mxu0 %v2249
        %v3206 = vpop.f32.mrf.mxu0
        %v3207 = vadd.f32 %v3047, %v3206
        %v3208 = vpop.f32.mrf.mxu0
        %3209 = vmatprep.mubr.f32.mxu0 0.0
        %3210 = vmatmul.mubr.f32.gmra.mxu0 %v2254
        %v3211 = vpop.f32.mrf.mxu0
        %v3212 = vadd.f32 %v3052, %v3211
        %v3213 = vpop.f32.mrf.mxu0
        %3214 = vmatprep.mubr.f32.mxu0 0.0
        %3215 = vmatmul.mubr.f32.gmra.mxu0 %v2259
        %v3216 = vpop.f32.mrf.mxu0
        %v3217 = vadd.f32 %v3057, %v3216
        %v3218 = vpop.f32.mrf.mxu0
        %3219 = vmatprep.mubr.f32.mxu0 0.0
        %3220 = vmatmul.mubr.f32.gmra.mxu0 %v2264
        %v3221 = vpop.f32.mrf.mxu0
        %v3222 = vadd.f32 %v3062, %v3221
        %v3223 = vpop.f32.mrf.mxu0
        %3224 = vmatprep.mubr.f32.mxu0 0.0
        %3225 = vmatmul.mubr.f32.gmra.mxu0 %v2269
        %v3226 = vpop.f32.mrf.mxu0
        %v3227 = vadd.f32 %v3067, %v3226
        %v3228 = vpop.f32.mrf.mxu0
        %3229 = vmatprep.mubr.f32.mxu0 0.0
        %3230 = vmatmul.mubr.f32.gmra.mxu0 %v2274
        %v3231 = vpop.f32.mrf.mxu0
        %v3232 = vadd.f32 %v3072, %v3231
        %v3233 = vpop.f32.mrf.mxu0
        %3234 = vmatprep.mubr.f32.mxu0 0.0
        %3235 = vmatmul.mubr.f32.gmra.mxu0 %v2279
        %v3236 = vpop.f32.mrf.mxu0
        %v3237 = vadd.f32 %v3077, %v3236
        %v3238 = vpop.f32.mrf.mxu0
        %3239 = vmatprep.mubr.f32.mxu0 0.0
        %3240 = vmatmul.mubr.f32.gmra.mxu0 %v2284
        %v3241 = vpop.f32.mrf.mxu0
        %v3242 = vadd.f32 %v3082, %v3241
        %v3243 = vpop.f32.mrf.mxu0
        %3244 = vmatprep.mubr.f32.mxu0 0.0
        %3245 = vmatmul.mubr.f32.gmra.mxu0 %v2289
        %v3246 = vpop.f32.mrf.mxu0
        %v3247 = vadd.f32 %v3087, %v3246
        %v3248 = vpop.f32.mrf.mxu0
        %3249 = vmatprep.mubr.f32.mxu0 0.0
        %3250 = vmatmul.mubr.f32.gmra.mxu0 %v2294
        %v3251 = vpop.f32.mrf.mxu0
        %v3252 = vadd.f32 %v3092, %v3251
        %v3253 = vpop.f32.mrf.mxu0
        %3254 = vmatprep.mubr.f32.mxu0 0.0
        %3255 = vmatmul.mubr.f32.gmra.mxu0 %v2299
        %v3256 = vpop.f32.mrf.mxu0
        %v3257 = vadd.f32 %v3097, %v3256
        %v3258 = vpop.f32.mrf.mxu0
        %3259 = vmatprep.mubr.f32.mxu0 0.0
        %3260 = vmatmul.mubr.f32.gmra.mxu0 %v2304
        %v3261 = vpop.f32.mrf.mxu0
        %v3262 = vadd.f32 %v3102, %v3261
        %v3263 = vpop.f32.mrf.mxu0
        %3264 = vmatprep.mubr.f32.mxu0 0.0
        %3265 = vmatmul.mubr.f32.gmra.mxu0 %v2309
        %v3266 = vpop.f32.mrf.mxu0
        %v3267 = vadd.f32 %v3107, %v3266
        %v3268 = vpop.f32.mrf.mxu0
        %3269 = vmatprep.mubr.f32.mxu0 0.0
        %3270 = vmatmul.mubr.f32.gmra.mxu0 %v2314
        %v3271 = vpop.f32.mrf.mxu0
        %v3272 = vadd.f32 %v3112, %v3271
        %v3273 = vpop.f32.mrf.mxu0
        %3274 = vdwg.mxu0
        %v3275 = vld [vmem:[#allocation3] sm:$0xff]
        %v3276 = vld [vmem:[#allocation3 + $0x8] sm:$0xff]
        %v3277 = vld [vmem:[#allocation3 + $0x10] sm:$0xff]
        %v3278 = vld [vmem:[#allocation3 + $0x18] sm:$0xff]
        %v3279 = vld [vmem:[#allocation3 + $0x20] sm:$0xff]
        %v3280 = vld [vmem:[#allocation3 + $0x28] sm:$0xff]
        %v3281 = vld [vmem:[#allocation3 + $0x30] sm:$0xff]
        %v3282 = vld [vmem:[#allocation3 + $0x38] sm:$0xff]
        %v3283 = vld [vmem:[#allocation3 + $0x40] sm:$0xff]
        %v3284 = vld [vmem:[#allocation3 + $0x48] sm:$0xff]
        %v3285 = vld [vmem:[#allocation3 + $0x50] sm:$0xff]
        %v3286 = vld [vmem:[#allocation3 + $0x58] sm:$0xff]
        %v3287 = vld [vmem:[#allocation3 + $0x60] sm:$0xff]
        %v3288 = vld [vmem:[#allocation3 + $0x68] sm:$0xff]
        %v3289 = vld [vmem:[#allocation3 + $0x70] sm:$0xff]
        %v3290 = vld [vmem:[#allocation3 + $0x78] sm:$0xff]
        %v3291 = vld [vmem:[#allocation3 + $0x80] sm:$0xff]
        %v3292 = vld [vmem:[#allocation3 + $0x88] sm:$0xff]
        %v3293 = vld [vmem:[#allocation3 + $0x90] sm:$0xff]
        %v3294 = vmul.f32 %v1619, %v3275
        %v3295 = vmul.f32 %v1621, %v3276
        %v3296 = vmul.f32 %v1623, %v3277
        %v3297 = vmul.f32 %v1625, %v3278
        %v3298 = vmul.f32 %v1627, %v3279
        %v3299 = vmul.f32 %v1629, %v3280
        %v3300 = vmul.f32 %v1631, %v3281
        %v3301 = vmul.f32 %v1633, %v3282
        %v3302 = vmul.f32 %v1635, %v3283
        %v3303 = vmul.f32 %v1637, %v3284
        %v3304 = vmul.f32 %v1639, %v3285
        %v3305 = vmul.f32 %v1641, %v3286
        %v3306 = vmul.f32 %v1643, %v3287
        %v3307 = vmul.f32 %v1645, %v3288
        %v3308 = vmul.f32 %v1647, %v3289
        %v3309 = vmul.f32 %v1649, %v3290
        %v3310 = vmul.f32 %v1651, %v3291
        %v3311 = vmul.f32 %v1653, %v3292
        %v3312 = vmul.f32 %v1655, %v3293
        %v3313 = vadd.f32 %v3294, %v2702
        %v3314 = vadd.f32 %v3295, %v2707
        %v3315 = vadd.f32 %v3296, %v2712
        %v3316 = vadd.f32 %v3297, %v2717
        %v3317 = vadd.f32 %v3298, %v2722
        %v3318 = vadd.f32 %v3299, %v2727
        %v3319 = vadd.f32 %v3300, %v2732
        %v3320 = vadd.f32 %v3301, %v2737
        %v3321 = vadd.f32 %v3302, %v2742
        %v3322 = vadd.f32 %v3303, %v2747
        %v3323 = vadd.f32 %v3304, %v2752
        %v3324 = vadd.f32 %v3305, %v2757
        %v3325 = vadd.f32 %v3306, %v2762
        %v3326 = vadd.f32 %v3307, %v2767
        %v3327 = vadd.f32 %v3308, %v2772
        %v3328 = vadd.f32 %v3309, %v2777
        %v3329 = vadd.f32 %v3310, %v2782
        %v3330 = vadd.f32 %v3311, %v2787
        %v3331 = vadd.f32 %v3312, %v2792
        %vm3332 = vcmask 7168
        %3333 = vst.msk [vmem:[#allocation3] sm:$0xff] %vm3332, %v3313
        %3334 = vst.msk [vmem:[#allocation3 + $0x8] sm:$0xff] %vm3332, %v3314
        %3335 = vst.msk [vmem:[#allocation3 + $0x10] sm:$0xff] %vm3332, %v3315
        %3336 = vst.msk [vmem:[#allocation3 + $0x18] sm:$0xff] %vm3332, %v3316
        %3337 = vst.msk [vmem:[#allocation3 + $0x20] sm:$0xff] %vm3332, %v3317
        %3338 = vst.msk [vmem:[#allocation3 + $0x28] sm:$0xff] %vm3332, %v3318
        %3339 = vst.msk [vmem:[#allocation3 + $0x30] sm:$0xff] %vm3332, %v3319
        %3340 = vst.msk [vmem:[#allocation3 + $0x38] sm:$0xff] %vm3332, %v3320
        %3341 = vst.msk [vmem:[#allocation3 + $0x40] sm:$0xff] %vm3332, %v3321
        %3342 = vst.msk [vmem:[#allocation3 + $0x48] sm:$0xff] %vm3332, %v3322
        %3343 = vst.msk [vmem:[#allocation3 + $0x50] sm:$0xff] %vm3332, %v3323
        %3344 = vst.msk [vmem:[#allocation3 + $0x58] sm:$0xff] %vm3332, %v3324
        %3345 = vst.msk [vmem:[#allocation3 + $0x60] sm:$0xff] %vm3332, %v3325
        %3346 = vst.msk [vmem:[#allocation3 + $0x68] sm:$0xff] %vm3332, %v3326
        %3347 = vst.msk [vmem:[#allocation3 + $0x70] sm:$0xff] %vm3332, %v3327
        %3348 = vst.msk [vmem:[#allocation3 + $0x78] sm:$0xff] %vm3332, %v3328
        %3349 = vst.msk [vmem:[#allocation3 + $0x80] sm:$0xff] %vm3332, %v3329
        %3350 = vst.msk [vmem:[#allocation3 + $0x88] sm:$0xff] %vm3332, %v3330
        %3351 = vst.msk [vmem:[#allocation3 + $0x90] sm:$0xff] %vm3332, %v3331
        %v3352 = vld [vmem:[#allocation4] sm:$0xff]
        %v3353 = vld [vmem:[#allocation4 + $0x8] sm:$0xff]
        %v3354 = vld [vmem:[#allocation4 + $0x10] sm:$0xff]
        %v3355 = vld [vmem:[#allocation4 + $0x18] sm:$0xff]
        %v3356 = vld [vmem:[#allocation4 + $0x20] sm:$0xff]
        %v3357 = vld [vmem:[#allocation4 + $0x28] sm:$0xff]
        %v3358 = vld [vmem:[#allocation4 + $0x30] sm:$0xff]
        %v3359 = vld [vmem:[#allocation4 + $0x38] sm:$0xff]
        %v3360 = vld [vmem:[#allocation4 + $0x40] sm:$0xff]
        %v3361 = vld [vmem:[#allocation4 + $0x48] sm:$0xff]
        %v3362 = vld [vmem:[#allocation4 + $0x50] sm:$0xff]
        %v3363 = vld [vmem:[#allocation4 + $0x58] sm:$0xff]
        %v3364 = vld [vmem:[#allocation4 + $0x60] sm:$0xff]
        %v3365 = vld [vmem:[#allocation4 + $0x68] sm:$0xff]
        %v3366 = vld [vmem:[#allocation4 + $0x70] sm:$0xff]
        %v3367 = vld [vmem:[#allocation4 + $0x78] sm:$0xff]
        %v3368 = vld [vmem:[#allocation4 + $0x80] sm:$0xff]
        %v3369 = vld [vmem:[#allocation4 + $0x88] sm:$0xff]
        %v3370 = vld [vmem:[#allocation4 + $0x90] sm:$0xff]
        %v3371 = vadd.f32 %v3352, %v3182
        %v3372 = vadd.f32 %v3353, %v3187
        %v3373 = vadd.f32 %v3354, %v3192
        %v3374 = vadd.f32 %v3355, %v3197
        %v3375 = vadd.f32 %v3356, %v3202
        %v3376 = vadd.f32 %v3357, %v3207
        %v3377 = vadd.f32 %v3358, %v3212
        %v3378 = vadd.f32 %v3359, %v3217
        %v3379 = vadd.f32 %v3360, %v3222
        %v3380 = vadd.f32 %v3361, %v3227
        %v3381 = vadd.f32 %v3362, %v3232
        %v3382 = vadd.f32 %v3363, %v3237
        %v3383 = vadd.f32 %v3364, %v3242
        %v3384 = vadd.f32 %v3365, %v3247
        %v3385 = vadd.f32 %v3366, %v3252
        %v3386 = vadd.f32 %v3367, %v3257
        %v3387 = vadd.f32 %v3368, %v3262
        %v3388 = vadd.f32 %v3369, %v3267
        %v3389 = vadd.f32 %v3370, %v3272
        %3390 = vst.msk [vmem:[#allocation4] sm:$0xff] %vm3332, %v3371
        %3391 = vst.msk [vmem:[#allocation4 + $0x8] sm:$0xff] %vm3332, %v3372
        %3392 = vst.msk [vmem:[#allocation4 + $0x10] sm:$0xff] %vm3332, %v3373
        %3393 = vst.msk [vmem:[#allocation4 + $0x18] sm:$0xff] %vm3332, %v3374
        %3394 = vst.msk [vmem:[#allocation4 + $0x20] sm:$0xff] %vm3332, %v3375
        %3395 = vst.msk [vmem:[#allocation4 + $0x28] sm:$0xff] %vm3332, %v3376
        %3396 = vst.msk [vmem:[#allocation4 + $0x30] sm:$0xff] %vm3332, %v3377
        %3397 = vst.msk [vmem:[#allocation4 + $0x38] sm:$0xff] %vm3332, %v3378
        %3398 = vst.msk [vmem:[#allocation4 + $0x40] sm:$0xff] %vm3332, %v3379
        %3399 = vst.msk [vmem:[#allocation4 + $0x48] sm:$0xff] %vm3332, %v3380
        %3400 = vst.msk [vmem:[#allocation4 + $0x50] sm:$0xff] %vm3332, %v3381
        %3401 = vst.msk [vmem:[#allocation4 + $0x58] sm:$0xff] %vm3332, %v3382
        %3402 = vst.msk [vmem:[#allocation4 + $0x60] sm:$0xff] %vm3332, %v3383
        %3403 = vst.msk [vmem:[#allocation4 + $0x68] sm:$0xff] %vm3332, %v3384
        %3404 = vst.msk [vmem:[#allocation4 + $0x70] sm:$0xff] %vm3332, %v3385
        %3405 = vst.msk [vmem:[#allocation4 + $0x78] sm:$0xff] %vm3332, %v3386
        %3406 = vst.msk [vmem:[#allocation4 + $0x80] sm:$0xff] %vm3332, %v3387
        %3407 = vst.msk [vmem:[#allocation4 + $0x88] sm:$0xff] %vm3332, %v3388
        %3408 = vst.msk [vmem:[#allocation4 + $0x90] sm:$0xff] %vm3332, %v3389
        %3409 = vst.msk [vmem:[#allocation2] sm:$0xff] %vm3332, %v1580
        %3410 = vst.msk [vmem:[#allocation2 + $0x8] sm:$0xff] %vm3332, %v1581
        %3411 = vst.msk [vmem:[#allocation2 + $0x10] sm:$0xff] %vm3332, %v1582
        %3412 = vst.msk [vmem:[#allocation2 + $0x18] sm:$0xff] %vm3332, %v1583
        %3413 = vst.msk [vmem:[#allocation2 + $0x20] sm:$0xff] %vm3332, %v1584
        %3414 = vst.msk [vmem:[#allocation2 + $0x28] sm:$0xff] %vm3332, %v1585
        %3415 = vst.msk [vmem:[#allocation2 + $0x30] sm:$0xff] %vm3332, %v1586
        %3416 = vst.msk [vmem:[#allocation2 + $0x38] sm:$0xff] %vm3332, %v1587
        %3417 = vst.msk [vmem:[#allocation2 + $0x40] sm:$0xff] %vm3332, %v1588
        %3418 = vst.msk [vmem:[#allocation2 + $0x48] sm:$0xff] %vm3332, %v1589
        %3419 = vst.msk [vmem:[#allocation2 + $0x50] sm:$0xff] %vm3332, %v1590
        %3420 = vst.msk [vmem:[#allocation2 + $0x58] sm:$0xff] %vm3332, %v1591
        %3421 = vst.msk [vmem:[#allocation2 + $0x60] sm:$0xff] %vm3332, %v1592
        %3422 = vst.msk [vmem:[#allocation2 + $0x68] sm:$0xff] %vm3332, %v1593
        %3423 = vst.msk [vmem:[#allocation2 + $0x70] sm:$0xff] %vm3332, %v1594
        %3424 = vst.msk [vmem:[#allocation2 + $0x78] sm:$0xff] %vm3332, %v1595
        %3425 = vst.msk [vmem:[#allocation2 + $0x80] sm:$0xff] %vm3332, %v1596
        %3426 = vst.msk [vmem:[#allocation2 + $0x88] sm:$0xff] %vm3332, %v1597
        %3427 = vst.msk [vmem:[#allocation2 + $0x90] sm:$0xff] %vm3332, %v1598
        %p3428 = scmp.eq.s32.totalorder %s28, 1
        // Predicated region
        $region67: #{tpu_custom_call.1} parent=57 // pred_check
          %p3429 = pneg %p3428
        $region68: #{tpu_custom_call.1} parent=57 // pred_check_branch
          %3431 = sbr.rel (%p3429) target = $region70
        $region69: #{tpu_custom_call.1} parent=57 // pred_region
          %v3432 = vld [vmem:[#allocation2] sm:$0xff]
          %v3433 = vld [vmem:[#allocation2 + $0x8] sm:$0xff]
          %v3434 = vld [vmem:[#allocation2 + $0x10] sm:$0xff]
          %v3435 = vld [vmem:[#allocation2 + $0x18] sm:$0xff]
          %v3436 = vld [vmem:[#allocation2 + $0x20] sm:$0xff]
          %v3437 = vld [vmem:[#allocation2 + $0x28] sm:$0xff]
          %v3438 = vld [vmem:[#allocation2 + $0x30] sm:$0xff]
          %v3439 = vld [vmem:[#allocation2 + $0x38] sm:$0xff]
          %v3440 = vld [vmem:[#allocation2 + $0x40] sm:$0xff]
          %v3441 = vld [vmem:[#allocation2 + $0x48] sm:$0xff]
          %v3442 = vld [vmem:[#allocation2 + $0x50] sm:$0xff]
          %v3443 = vld [vmem:[#allocation2 + $0x58] sm:$0xff]
          %v3444 = vld [vmem:[#allocation2 + $0x60] sm:$0xff]
          %v3445 = vld [vmem:[#allocation2 + $0x68] sm:$0xff]
          %v3446 = vld [vmem:[#allocation2 + $0x70] sm:$0xff]
          %v3447 = vld [vmem:[#allocation2 + $0x78] sm:$0xff]
          %v3448 = vld [vmem:[#allocation2 + $0x80] sm:$0xff]
          %v3449 = vld [vmem:[#allocation2 + $0x88] sm:$0xff]
          %v3450 = vld [vmem:[#allocation2 + $0x90] sm:$0xff]
          %v3451 = vld [vmem:[#allocation3] sm:$0xff]
          %v3452 = vld [vmem:[#allocation3 + $0x8] sm:$0xff]
          %v3453 = vld [vmem:[#allocation3 + $0x10] sm:$0xff]
          %v3454 = vld [vmem:[#allocation3 + $0x18] sm:$0xff]
          %v3455 = vld [vmem:[#allocation3 + $0x20] sm:$0xff]
          %v3456 = vld [vmem:[#allocation3 + $0x28] sm:$0xff]
          %v3457 = vld [vmem:[#allocation3 + $0x30] sm:$0xff]
          %v3458 = vld [vmem:[#allocation3 + $0x38] sm:$0xff]
          %v3459 = vld [vmem:[#allocation3 + $0x40] sm:$0xff]
          %v3460 = vld [vmem:[#allocation3 + $0x48] sm:$0xff]
          %v3461 = vld [vmem:[#allocation3 + $0x50] sm:$0xff]
          %v3462 = vld [vmem:[#allocation3 + $0x58] sm:$0xff]
          %v3463 = vld [vmem:[#allocation3 + $0x60] sm:$0xff]
          %v3464 = vld [vmem:[#allocation3 + $0x68] sm:$0xff]
          %v3465 = vld [vmem:[#allocation3 + $0x70] sm:$0xff]
          %v3466 = vld [vmem:[#allocation3 + $0x78] sm:$0xff]
          %v3467 = vld [vmem:[#allocation3 + $0x80] sm:$0xff]
          %v3468 = vld [vmem:[#allocation3 + $0x88] sm:$0xff]
          %v3469 = vld [vmem:[#allocation3 + $0x90] sm:$0xff]
          %v3470 = vlog2.pop %v3451
          %v3471 = vmul.f32 %v3470, 0.6931472
          %v3472 = vlog2.pop %v3452
          %v3473 = vmul.f32 %v3472, 0.6931472
          %v3474 = vlog2.pop %v3453
          %v3475 = vmul.f32 %v3474, 0.6931472
          %v3476 = vlog2.pop %v3454
          %v3477 = vmul.f32 %v3476, 0.6931472
          %v3478 = vlog2.pop %v3455
          %v3479 = vmul.f32 %v3478, 0.6931472
          %v3480 = vlog2.pop %v3456
          %v3481 = vmul.f32 %v3480, 0.6931472
          %v3482 = vlog2.pop %v3457
          %v3483 = vmul.f32 %v3482, 0.6931472
          %v3484 = vlog2.pop %v3458
          %v3485 = vmul.f32 %v3484, 0.6931472
          %v3486 = vlog2.pop %v3459
          %v3487 = vmul.f32 %v3486, 0.6931472
          %v3488 = vlog2.pop %v3460
          %v3489 = vmul.f32 %v3488, 0.6931472
          %v3490 = vlog2.pop %v3461
          %v3491 = vmul.f32 %v3490, 0.6931472
          %v3492 = vlog2.pop %v3462
          %v3493 = vmul.f32 %v3492, 0.6931472
          %v3494 = vlog2.pop %v3463
          %v3495 = vmul.f32 %v3494, 0.6931472
          %v3496 = vlog2.pop %v3464
          %v3497 = vmul.f32 %v3496, 0.6931472
          %v3498 = vlog2.pop %v3465
          %v3499 = vmul.f32 %v3498, 0.6931472
          %v3500 = vlog2.pop %v3466
          %v3501 = vmul.f32 %v3500, 0.6931472
          %v3502 = vlog2.pop %v3467
          %v3503 = vmul.f32 %v3502, 0.6931472
          %v3504 = vlog2.pop %v3468
          %v3505 = vmul.f32 %v3504, 0.6931472
          %v3506 = vlog2.pop %v3469
          %v3507 = vmul.f32 %v3506, 0.6931472
          %v3508 = vadd.f32 %v3432, %v3471
          %v3509 = vadd.f32 %v3433, %v3473
          %v3510 = vadd.f32 %v3434, %v3475
          %v3511 = vadd.f32 %v3435, %v3477
          %v3512 = vadd.f32 %v3436, %v3479
          %v3513 = vadd.f32 %v3437, %v3481
          %v3514 = vadd.f32 %v3438, %v3483
          %v3515 = vadd.f32 %v3439, %v3485
          %v3516 = vadd.f32 %v3440, %v3487
          %v3517 = vadd.f32 %v3441, %v3489
          %v3518 = vadd.f32 %v3442, %v3491
          %v3519 = vadd.f32 %v3443, %v3493
          %v3520 = vadd.f32 %v3444, %v3495
          %v3521 = vadd.f32 %v3445, %v3497
          %v3522 = vadd.f32 %v3446, %v3499
          %v3523 = vadd.f32 %v3447, %v3501
          %v3524 = vadd.f32 %v3448, %v3503
          %v3525 = vadd.f32 %v3449, %v3505
          %v3526 = vadd.f32 %v3450, %v3507
          %v3527 = vld [vmem:[#allocation4] sm:$0xff]
          %v3528 = vld [vmem:[#allocation4 + $0x8] sm:$0xff]
          %v3529 = vld [vmem:[#allocation4 + $0x10] sm:$0xff]
          %v3530 = vld [vmem:[#allocation4 + $0x18] sm:$0xff]
          %v3531 = vld [vmem:[#allocation4 + $0x20] sm:$0xff]
          %v3532 = vld [vmem:[#allocation4 + $0x28] sm:$0xff]
          %v3533 = vld [vmem:[#allocation4 + $0x30] sm:$0xff]
          %v3534 = vld [vmem:[#allocation4 + $0x38] sm:$0xff]
          %v3535 = vld [vmem:[#allocation4 + $0x40] sm:$0xff]
          %v3536 = vld [vmem:[#allocation4 + $0x48] sm:$0xff]
          %v3537 = vld [vmem:[#allocation4 + $0x50] sm:$0xff]
          %v3538 = vld [vmem:[#allocation4 + $0x58] sm:$0xff]
          %v3539 = vld [vmem:[#allocation4 + $0x60] sm:$0xff]
          %v3540 = vld [vmem:[#allocation4 + $0x68] sm:$0xff]
          %v3541 = vld [vmem:[#allocation4 + $0x70] sm:$0xff]
          %v3542 = vld [vmem:[#allocation4 + $0x78] sm:$0xff]
          %v3543 = vld [vmem:[#allocation4 + $0x80] sm:$0xff]
          %v3544 = vld [vmem:[#allocation4 + $0x88] sm:$0xff]
          %v3545 = vld [vmem:[#allocation4 + $0x90] sm:$0xff]
          %v3546 = vsub.f32 %v3508, %v3527
          %v3547 = vsub.f32 %v3509, %v3528
          %v3548 = vsub.f32 %v3510, %v3529
          %v3549 = vsub.f32 %v3511, %v3530
          %v3550 = vsub.f32 %v3512, %v3531
          %v3551 = vsub.f32 %v3513, %v3532
          %v3552 = vsub.f32 %v3514, %v3533
          %v3553 = vsub.f32 %v3515, %v3534
          %v3554 = vsub.f32 %v3516, %v3535
          %v3555 = vsub.f32 %v3517, %v3536
          %v3556 = vsub.f32 %v3518, %v3537
          %v3557 = vsub.f32 %v3519, %v3538
          %v3558 = vsub.f32 %v3520, %v3539
          %v3559 = vsub.f32 %v3521, %v3540
          %v3560 = vsub.f32 %v3522, %v3541
          %v3561 = vsub.f32 %v3523, %v3542
          %v3562 = vsub.f32 %v3524, %v3543
          %v3563 = vsub.f32 %v3525, %v3544
          %v3564 = vsub.f32 %v3526, %v3545
          %3566 = vset.pattern.permute.xlu0 0
          %3567 = vperm.xlu0 %3566, %v3546
          %v3568 = vpop.permute.xlu0 %3567
          %3571 = vset.pattern.permute.xlu0 0
          %3572 = vperm.xlu0 %3571, %v3547
          %v3573 = vpop.permute.xlu0 %3572
          %3576 = vset.pattern.permute.xlu0 0
          %3577 = vperm.xlu0 %3576, %v3548
          %v3578 = vpop.permute.xlu0 %3577
          %3581 = vset.pattern.permute.xlu0 0
          %3582 = vperm.xlu0 %3581, %v3549
          %v3583 = vpop.permute.xlu0 %3582
          %3586 = vset.pattern.permute.xlu0 0
          %3587 = vperm.xlu0 %3586, %v3550
          %v3588 = vpop.permute.xlu0 %3587
          %3591 = vset.pattern.permute.xlu0 0
          %3592 = vperm.xlu0 %3591, %v3551
          %v3593 = vpop.permute.xlu0 %3592
          %3596 = vset.pattern.permute.xlu0 0
          %3597 = vperm.xlu0 %3596, %v3552
          %v3598 = vpop.permute.xlu0 %3597
          %3601 = vset.pattern.permute.xlu0 0
          %3602 = vperm.xlu0 %3601, %v3553
          %v3603 = vpop.permute.xlu0 %3602
          %3606 = vset.pattern.permute.xlu0 0
          %3607 = vperm.xlu0 %3606, %v3554
          %v3608 = vpop.permute.xlu0 %3607
          %3611 = vset.pattern.permute.xlu0 0
          %3612 = vperm.xlu0 %3611, %v3555
          %v3613 = vpop.permute.xlu0 %3612
          %3616 = vset.pattern.permute.xlu0 0
          %3617 = vperm.xlu0 %3616, %v3556
          %v3618 = vpop.permute.xlu0 %3617
          %3621 = vset.pattern.permute.xlu0 0
          %3622 = vperm.xlu0 %3621, %v3557
          %v3623 = vpop.permute.xlu0 %3622
          %3626 = vset.pattern.permute.xlu0 0
          %3627 = vperm.xlu0 %3626, %v3558
          %v3628 = vpop.permute.xlu0 %3627
          %3631 = vset.pattern.permute.xlu0 0
          %3632 = vperm.xlu0 %3631, %v3559
          %v3633 = vpop.permute.xlu0 %3632
          %3636 = vset.pattern.permute.xlu0 0
          %3637 = vperm.xlu0 %3636, %v3560
          %v3638 = vpop.permute.xlu0 %3637
          %3641 = vset.pattern.permute.xlu0 0
          %3642 = vperm.xlu0 %3641, %v3561
          %v3643 = vpop.permute.xlu0 %3642
          %3646 = vset.pattern.permute.xlu0 0
          %3647 = vperm.xlu0 %3646, %v3562
          %v3648 = vpop.permute.xlu0 %3647
          %3651 = vset.pattern.permute.xlu0 0
          %3652 = vperm.xlu0 %3651, %v3563
          %v3653 = vpop.permute.xlu0 %3652
          %3656 = vset.pattern.permute.xlu0 0
          %3657 = vperm.xlu0 %3656, %v3564
          %v3658 = vpop.permute.xlu0 %3657
          %3660 = vst [vmem:[%s369] sm:$0xff] %v3568
          %3661 = vst [vmem:[%s369 + $0x8] sm:$0xff] %v3573
          %3662 = vst [vmem:[%s369 + $0x10] sm:$0xff] %v3578
          %3663 = vst [vmem:[%s369 + $0x18] sm:$0xff] %v3583
          %3664 = vst [vmem:[%s369 + $0x20] sm:$0xff] %v3588
          %3665 = vst [vmem:[%s369 + $0x28] sm:$0xff] %v3593
          %3666 = vst [vmem:[%s369 + $0x30] sm:$0xff] %v3598
          %3667 = vst [vmem:[%s369 + $0x38] sm:$0xff] %v3603
          %3668 = vst [vmem:[%s369 + $0x40] sm:$0xff] %v3608
          %3669 = vst [vmem:[%s369 + $0x48] sm:$0xff] %v3613
          %3670 = vst [vmem:[%s369 + $0x50] sm:$0xff] %v3618
          %3671 = vst [vmem:[%s369 + $0x58] sm:$0xff] %v3623
          %3672 = vst [vmem:[%s369 + $0x60] sm:$0xff] %v3628
          %3673 = vst [vmem:[%s369 + $0x68] sm:$0xff] %v3633
          %3674 = vst [vmem:[%s369 + $0x70] sm:$0xff] %v3638
          %3675 = vst [vmem:[%s369 + $0x78] sm:$0xff] %v3643
          %3676 = vst [vmem:[%s369 + $0x80] sm:$0xff] %v3648
          %3677 = vst [vmem:[%s369 + $0x88] sm:$0xff] %v3653
          %3678 = vst [vmem:[%s369 + $0x90] sm:$0xff] %v3658
        $region70: #{tpu_custom_call.1} parent=57 // pred_fallthru
          _
        %s3679 = sand.u32 %s149, 1
        %s3680 = scalar_lea.sflag [#allocation7], %s3679
        %s3681 = sand.u32 %s149, 1
        %s3682 = smul.addr %s3681, 380
        %s3683 = scalar_lea.vmem [#allocation6], %s3682
        %s3684 = sand.u32 %s175, 1
        %s3685 = scalar_lea.sflag [#allocation9], %s3684
        %s3686 = sand.u32 %s175, 1
        %s3687 = smul.addr %s3686, 152
        %s3688 = scalar_lea.vmem [#allocation8], %s3687
        // Predicated region
        $region71: #{tpu_custom_call.1} parent=57 // pred_check
          %p3689 = pneg %p159
        $region72: #{tpu_custom_call.1} parent=57 // pred_check_branch
          %3691 = sbr.rel (%p3689) target = $region74
        $region73: #{tpu_custom_call.1} parent=57 // pred_region
          %s3692 = smul.u32 19, %s27
          %s3693 = smul.u32 5, %s28
          %s3695 = ssub.s32 6080, 6080
          %3696 = vsyncadd %s3680, %s3695
          %s3697 = smul.addr %s3692, 10
          %s3698 = sadd.s32 %s3693, %s3697
          %s3699 = smul.addr %s3698, 64
          %s3700 = scalar_lea.hbm %s4, %s3699
          %s3701 = sshll.u32 %s3683, 4
          %s3702 = int_to_ptr.vmem [resolvable:$true] %s3701
          %3707 = dma.vmem_to_hbm [thread:$0]  %s3702, 6080, %s3700, %s3680, 320, 640, 20
        $region74: #{tpu_custom_call.1} parent=57 // pred_fallthru
          _
        // Predicated region
        $region75: #{tpu_custom_call.1} parent=57 // pred_check
          %p3708 = pneg %p185
        $region76: #{tpu_custom_call.1} parent=57 // pred_check_branch
          %3710 = sbr.rel (%p3708) target = $region78
        $region77: #{tpu_custom_call.1} parent=57 // pred_region
          %s3711 = smul.u32 19, %s27
          %s3713 = ssub.s32 2432, 2432
          %3714 = vsyncadd %s3685, %s3713
          %s3715 = smul.addr %s3711, 128
          %s3716 = scalar_lea.hbm %s5, %s3715
          %s3717 = sshll.u32 %s3688, 4
          %s3718 = int_to_ptr.vmem [resolvable:$true] %s3717
          %3723 = dma.vmem_to_hbm [thread:$0]  %s3718, 2432, %s3716, %s3685, 128, 128, 8
        $region78: #{tpu_custom_call.1} parent=57 // pred_fallthru
          _
      $region58: #{tpu_custom_call.1} parent=5 // pred_fallthru
        _
      %p3724 = scmp.le.s32.totalorder 2, %s18
      // Predicated region
      $region79: #{tpu_custom_call.1} parent=5 // pred_check
        %p3725 = pneg %p3724
      $region80: #{tpu_custom_call.1} parent=5 // pred_check_branch
        %3727 = sbr.rel (%p3725) target = $region82
      $region81: #{tpu_custom_call.1} parent=5 // pred_region
        %s3728 = ssub.s32 %s18, 2
        // Predicated region
        $region83: #{tpu_custom_call.1} parent=81 // pred_check
          %p3729 = pneg %p165
        $region84: #{tpu_custom_call.1} parent=81 // pred_check_branch
          %3731 = sbr.rel (%p3729) target = $region86
        $region85: #{tpu_custom_call.1} parent=81 // pred_region
          %s3732 = sand.u32 %s150, 1
          %s3733 = scalar_lea.sflag [#allocation7], %s3732
          %s3734 = sand.u32 %s150, 1
          %s3735 = smul.addr %s3734, 380
          %s3736 = scalar_lea.vmem [#allocation6], %s3735
          %3737 = dma.done %s3733, 6080
        $region86: #{tpu_custom_call.1} parent=81 // pred_fallthru
          _
        // Predicated region
        $region87: #{tpu_custom_call.1} parent=81 // pred_check
          %p3738 = pneg %p191
        $region88: #{tpu_custom_call.1} parent=81 // pred_check_branch
          %3740 = sbr.rel (%p3738) target = $region90
        $region89: #{tpu_custom_call.1} parent=81 // pred_region
          %s3741 = sand.u32 %s176, 1
          %s3742 = scalar_lea.sflag [#allocation9], %s3741
          %s3743 = sand.u32 %s176, 1
          %s3744 = smul.addr %s3743, 152
          %s3745 = scalar_lea.vmem [#allocation8], %s3744
          %3746 = dma.done %s3742, 2432
        $region90: #{tpu_custom_call.1} parent=81 // pred_fallthru
          _
      $region82: #{tpu_custom_call.1} parent=5 // pred_fallthru
        _
    $region6: #{tpu_custom_call.1} parent=1 // loop_footer
      %s22 = sadd.s32 1, %s18
    $region7: #{tpu_custom_call.1} parent=1 // loop_footer_branch
      %17 = sbr.rel target = $region3
    $region8: #{tpu_custom_call.1} parent=1 // loop_exit
      _
    %3747 = vsyncpa [#allocation7], 1
    %s3748 = scalar_lea.sflag [#allocation7], 1
    %3749 = vsyncpa %s3748, 1
    %3750 = vsyncpa [#allocation9], 1
    %s3751 = scalar_lea.sflag [#allocation9], 1
    %3752 = vsyncpa %s3751, 1

</llo_original>
